<compile_context>
chip_gen: v6e
topology: v6e:2x2x1
jax: 0.10.0
libtpu: 0.0.40
codegen_flags: <defaults>
</compile_context>

<pallas_src>
import numpy as np
import jax
import jax.numpy as jnp
from jax.experimental import pallas as pl
from jax.experimental.pallas import tpu as pltpu

# ---- model sizes (1-hidden-layer tanh encoder / decoder / diffusion nets) ----
BATCH = 8
D_EXT = 16     # extrinsic_dim
D_INT = 4      # intrinsic_dim
H_AE  = 32     # autoencoder hidden width
H_SIG = 32     # latent SDE diffusion-net hidden width

F32 = jnp.float32

# packed-output column layout: [cov(256) | N(256) | q(16) | bbt(16)]
_COV_W = D_EXT * D_EXT                       # 256
_N_W   = D_EXT * D_EXT                       # 256
_Q_W   = D_EXT                               # 16
_BBT_W = D_INT * D_INT                       # 16
_USED  = _COV_W + _N_W + _Q_W + _BBT_W       # 544 (full last dim of the output)


def _round_up(v, m):
    return ((v + m - 1) // m) * m


def _inv4(m):
    """Closed-form inverse of a 4x4 matrix whose entries are (tb, 1) arrays.

    Standard 2x2-minor (adjugate / determinant) expansion; pure per-sample elementwise
    math -- replaces torch.linalg.inv.  g = dphi^T dphi is SPD for a full-rank decoder
    Jacobian (pad rows are replicated real rows, so det != 0 there too).
    """
    a00, a01, a02, a03 = m[0]
    a10, a11, a12, a13 = m[1]
    a20, a21, a22, a23 = m[2]
    a30, a31, a32, a33 = m[3]

    s0 = a00 * a11 - a10 * a01
    s1 = a00 * a12 - a10 * a02
    s2 = a00 * a13 - a10 * a03
    s3 = a01 * a12 - a11 * a02
    s4 = a01 * a13 - a11 * a03
    s5 = a02 * a13 - a12 * a03

    c5 = a22 * a33 - a32 * a23
    c4 = a21 * a33 - a31 * a23
    c3 = a21 * a32 - a31 * a22
    c2 = a20 * a33 - a30 * a23
    c1 = a20 * a32 - a30 * a22
    c0 = a20 * a31 - a30 * a21

    det = s0 * c5 - s1 * c4 + s2 * c3 + s3 * c2 - s4 * c1 + s5 * c0
    r = 1.0 / det

    return [
        [( a11 * c5 - a12 * c4 + a13 * c3) * r,
         (-a01 * c5 + a02 * c4 - a03 * c3) * r,
         ( a31 * s5 - a32 * s4 + a33 * s3) * r,
         (-a21 * s5 + a22 * s4 - a23 * s3) * r],
        [(-a10 * c5 + a12 * c2 - a13 * c1) * r,
         ( a00 * c5 - a02 * c2 + a03 * c1) * r,
         (-a30 * s5 + a32 * s2 - a33 * s1) * r,
         ( a20 * s5 - a22 * s2 + a23 * s1) * r],
        [( a10 * c4 - a11 * c2 + a13 * c0) * r,
         (-a00 * c4 + a01 * c2 - a03 * c0) * r,
         ( a30 * s4 - a31 * s2 + a33 * s0) * r,
         (-a20 * s4 + a21 * s2 - a23 * s0) * r],
        [(-a10 * c3 + a11 * c1 - a12 * c0) * r,
         ( a00 * c3 - a01 * c1 + a02 * c0) * r,
         (-a30 * s3 + a31 * s1 - a32 * s0) * r,
         ( a20 * s3 - a21 * s1 + a22 * s0) * r],
    ]


def _aed_fused_kernel(x_ref,
                      we1_ref, be1_ref,
                      wfold_ref, bfold_ref,
                      ws2_ref, bs2_ref,
                      s2_ref, wpair_ref, wd1cat_ref, wjac_ref,
                      eyef_ref, out_ref):
    tb = x_ref.shape[0]
    x = x_ref[...]                                                      # (tb, D)

    def mm(a, b):   # shared-weight matmul; batch folded into MXU rows, f32 accumulate
        return jnp.dot(a, b, preferred_element_type=F32)

    # ---------------- encoder hidden: h = tanh(x@We1 + be1) -------------------
    h_enc = jnp.tanh(mm(x, we1_ref[...]) + be1_ref[...])                # (tb, 32)

    # -------- folded pre-activations: [decoder hidden | diffusion hidden] -----
    # z = h_enc@We2 + be2 is never materialized: z@Wd1+bd1 and z@Ws1+bs1 are the
    # two lane-halves of one (tb,32)@(32,64) matmul against the folded weights.
    pre_all = mm(h_enc, wfold_ref[...]) + bfold_ref[...]                # (tb, 64)
    pre = pre_all[:, :H_AE]                                             # decoder hidden
    spre = pre_all[:, H_AE:H_AE + H_SIG]                                # diffusion hidden

    t = jnp.tanh(pre)
    dt = 1.0 - t * t                                                    # tanh'
    d2t = -2.0 * t * dt                                                 # tanh''
    h_sig = jnp.tanh(spre)
    # NOTE: bd2 (decoder output bias) does not enter the Jacobian/Hessian outputs.

    # -------------- latent diffusion output, flattened rows of b --------------
    s_flat = mm(h_sig, ws2_ref[...]) + bs2_ref[...]                     # (tb, d*d)

    # ------------- bbt = b b^T via MXU segment-sum (lane-packed) --------------
    # pair-product slab: P2[:, p*16+q] = s_flat[:,p]*s_flat[:,q]
    p2 = jnp.repeat(s_flat, D_INT * D_INT, axis=1) * \
         jnp.concatenate([s_flat] * (D_INT * D_INT), axis=1)            # (tb, 256)
    bbt_flat = mm(p2, s2_ref[...])                                      # (tb, 16)

    # ----------------------- vq on the MXU (for q) ----------------------------
    # vq[n,i] = sum_{j,k} bbt[n,j,k] * wd1[j,i] * wd1[k,i]
    vq = mm(bbt_flat, wpair_ref[...])                                   # (tb, 32)

    # ------- decoder Jacobian columns + q from ONE block-diagonal matmul ------
    dt4 = jnp.concatenate([dt] * D_INT, axis=1)                         # (tb, 128)
    lhs = jnp.concatenate([dt4 * wd1cat_ref[...], d2t * vq], axis=1)    # (tb, 160)
    jac_q = mm(lhs, wjac_ref[...])                                      # (tb, 80)
    c_all = jac_q[:, :D_INT * D_EXT]                                    # (tb, 64): [c0|c1|c2|c3]
    q = jac_q[:, D_INT * D_EXT:D_INT * D_EXT + D_EXT]                   # (tb, 16)

    c_blk = [c_all[:, i * D_EXT:(i + 1) * D_EXT] for i in range(D_INT)]

    # ------------------- metric g[i,j] = <c_i, c_j> ----------------------------
    g = [[None] * D_INT for _ in range(D_INT)]
    for i in range(D_INT):
        for j in range(i, D_INT):
            v = jnp.sum(c_blk[i] * c_blk[j], axis=-1, keepdims=True)
            g[i][j] = v
            g[j][i] = v

    # in-kernel closed-form 4x4 inverse (replaces torch/jnp.linalg.inv)
    ginv = _inv4(g)

    # --------- cov = dphi bbt dphi^T ; P = dphi g^{-1} dphi^T (lane-dense) -----
    # cov_flat[:, r*16+s] = sum_i c_i[:, r] * m_i[:, s],  m_i = sum_j bbt[i,j] c_j
    cov_flat = None
    p_flat = None
    for i in range(D_INT):
        m_i = bbt_flat[:, i * D_INT:i * D_INT + 1] * c_blk[0]
        u_i = ginv[i][0] * c_blk[0]
        for j in range(1, D_INT):
            m_i = m_i + bbt_flat[:, i * D_INT + j:i * D_INT + j + 1] * c_blk[j]
            u_i = u_i + ginv[i][j] * c_blk[j]
        c_rep = jnp.repeat(c_blk[i], D_EXT, axis=1)                     # (tb, 256)
        term_c = c_rep * jnp.concatenate([m_i] * D_EXT, axis=1)
        term_p = c_rep * jnp.concatenate([u_i] * D_EXT, axis=1)
        cov_flat = term_c if cov_flat is None else cov_flat + term_c
        p_flat = term_p if p_flat is None else p_flat + term_p

    n_flat = eyef_ref[...] - p_flat                                     # (tb, 256)

    # ------------------ direct lane-slice stores (no packing copy) ------------
    out_ref[:, :_COV_W] = cov_flat
    out_ref[:, _COV_W:_COV_W + _N_W] = n_flat
    out_ref[:, _COV_W + _N_W:_COV_W + _N_W + _Q_W] = q
    out_ref[:, _COV_W + _N_W + _Q_W:_USED] = bbt_flat


def autoencoder_diffusion_forward(x, params, *, block_batch=None):
    """Forward pass of AutoEncoderDiffusion: returns (cov_model, N, q, bbt)."""
    (we1, be1, we2, be2, wd1, bd1, wd2, bd2, ws1, bs1, ws2, bs2) = params
    del bd2  # decoder output bias: no effect on Jacobian / Hessian outputs
    n = x.shape[0]

    # Batch tile: multiple of 8 sublanes, split across two TensorCores (v7x) when
    # possible, capped at 512 rows (flat intermediates keep this far below the 32 MiB
    # default scoped VMEM limit on every generation).
    if block_batch is not None:
        tb = _round_up(max(block_batch, 1), 8)
    else:
        tb = min(512, _round_up(pl.cdiv(max(n, 1), 2), 8))
    n_pad = _round_up(n, tb)
    if n_pad != n:
        # pad with replicated last row (valid data) so det(g) on pad rows is never 0
        x_pad = jnp.concatenate(
            [x, jnp.broadcast_to(x[-1:], (n_pad - n, x.shape[1]))], axis=0)
    else:
        x_pad = x

    # ---------------- host-side parameter folding / constants -----------------
    # encoder fold: pre_dec = h_enc@(We2@Wd1) + (be2@Wd1 + bd1); same for diffusion net
    w_fold = jnp.concatenate([we2 @ wd1, we2 @ ws1], axis=1)            # (32, 64)
    b_fold = jnp.concatenate([be2 @ wd1 + bd1, be2 @ ws1 + bs1], axis=1)  # (1, 64)

    # concat of wd1 rows: lanes [j*32:(j+1)*32] = wd1[j]
    wd1cat = wd1.reshape(1, D_INT * H_AE)                               # (1, 128)

    # block-diagonal rhs for [Jacobian columns | q]:
    #   rows [j*32:(j+1)*32], cols [j*16:(j+1)*16] = wd2   (j = 0..3)
    #   rows [128:160],        cols [64:80]        = wd2
    wjac = jnp.zeros((D_INT * H_AE + H_AE, D_INT * D_EXT + D_EXT), F32)
    for j in range(D_INT):
        wjac = wjac.at[j * H_AE:(j + 1) * H_AE, j * D_EXT:(j + 1) * D_EXT].set(wd2)
    wjac = wjac.at[D_INT * H_AE:, D_INT * D_EXT:].set(wd2)              # (160, 80)

    # vq pair weights: row (j*4+k) = wd1[j] * wd1[k]
    wpair = (wd1[:, None, :] * wd1[None, :, :]).reshape(D_INT * D_INT, H_AE)  # (16, 32)

    # 0/1 segment-sum matrix: bbt[i,j] = sum_l P2[:, (i*4+l)*16 + (j*4+l)]
    s2_np = np.zeros((D_INT * D_INT * D_INT * D_INT, D_INT * D_INT), np.float32)
    for i in range(D_INT):
        for j in range(D_INT):
            for l in range(D_INT):
                s2_np[(i * D_INT + l) * (D_INT * D_INT) + (j * D_INT + l),
                      i * D_INT + j] = 1.0
    s2 = jnp.asarray(s2_np)                                             # (256, 16)

    eye_flat = jnp.eye(D_EXT, dtype=F32).reshape(1, D_EXT * D_EXT)      # (1, 256)

    def full(shape):          # resident weight / constant: constant index_map
        return pl.BlockSpec(shape, lambda i: (0, 0))

    grid_spec = pltpu.PrefetchScalarGridSpec(
        num_scalar_prefetch=0,
        grid=(n_pad // tb,),
        in_specs=[
            pl.BlockSpec((tb, D_EXT), lambda i: (i, 0)),                # x (batch-tiled)
            full(we1.shape), full(be1.shape),
            full(w_fold.shape), full(b_fold.shape),
            full(ws2.shape), full(bs2.shape),
            full(s2.shape), full(wpair.shape), full(wd1cat.shape), full(wjac.shape),
            full(eye_flat.shape),
        ],
        out_specs=pl.BlockSpec((tb, _USED), lambda i: (i, 0)),
    )

    packed = pl.pallas_call(
        _aed_fused_kernel,
        out_shape=jax.ShapeDtypeStruct((n_pad, _USED), F32),
        grid_spec=grid_spec,
        compiler_params=pltpu.CompilerParams(
            dimension_semantics=("parallel",)),      # megacore: 2 TCs on v7x
    )(x_pad, we1, be1, w_fold, b_fold, ws2, bs2, s2, wpair, wd1cat, wjac, eye_flat)

    # free layout plumbing in the wrapper: split the packed slab
    packed = packed[:n]
    cov = packed[:, :_COV_W].reshape(n, D_EXT, D_EXT)
    n_mat = packed[:, _COV_W:_COV_W + _N_W].reshape(n, D_EXT, D_EXT)
    q = packed[:, _COV_W + _N_W:_COV_W + _N_W + _Q_W]
    bbt = packed[:, _COV_W + _N_W + _Q_W:_USED].reshape(n, D_INT, D_INT)
    return cov, n_mat, q, bbt


def init_params(key):
    ks = jax.random.split(key, 12)

    def lin(k, fan_in, fan_out):
        return jax.random.normal(k, (fan_in, fan_out), F32) / jnp.sqrt(jnp.float32(fan_in))

    we1 = lin(ks[0], D_EXT, H_AE);            be1 = 0.01 * jax.random.normal(ks[1], (1, H_AE), F32)
    we2 = lin(ks[2], H_AE, D_INT);            be2 = 0.01 * jax.random.normal(ks[3], (1, D_INT), F32)
    wd1 = lin(ks[4], D_INT, H_AE);            bd1 = 0.01 * jax.random.normal(ks[5], (1, H_AE), F32)
    wd2 = lin(ks[6], H_AE, D_EXT);            bd2 = 0.01 * jax.random.normal(ks[7], (1, D_EXT), F32)
    ws1 = lin(ks[8], D_INT, H_SIG);           bs1 = 0.01 * jax.random.normal(ks[9], (1, H_SIG), F32)
    ws2 = lin(ks[10], H_SIG, D_INT * D_INT);  bs2 = 0.01 * jax.random.normal(ks[11], (1, D_INT * D_INT), F32)
    return (we1, be1, we2, be2, wd1, bd1, wd2, bd2, ws1, bs1, ws2, bs2)


def reference_forward(x, params):
    """Pure-JAX reference mirroring the PyTorch forward (autodiff Jacobian/Hessian)."""
    (we1, be1, we2, be2, wd1, bd1, wd2, bd2, ws1, bs1, ws2, bs2) = params

    def encoder(xx): return jnp.tanh(xx @ we1 + be1[0]) @ we2 + be2[0]
    def decoder(zz): return jnp.tanh(zz @ wd1 + bd1[0]) @ wd2 + bd2[0]
    def diff_flat(zz): return jnp.tanh(zz @ ws1 + bs1[0]) @ ws2 + bs2[0]

    z = encoder(x)
    dphi = jax.vmap(jax.jacfwd(decoder))(z)                          # (n, D, d)
    hess = jax.vmap(jax.jacfwd(jax.jacfwd(decoder)))(z)              # (n, D, d, d)
    b = diff_flat(z).reshape(x.shape[0], D_INT, D_INT)
    bbt = jnp.einsum('nij,nkj->nik', b, b)
    q = jnp.einsum('njk,nrkj->nr', bbt, hess)
    cov = jnp.einsum('nri,nij,nsj->nrs', dphi, bbt, dphi)
    g = jnp.einsum('nri,nrj->nij', dphi, dphi)
    g_inv = jnp.linalg.inv(g)
    P = jnp.einsum('nri,nij,nsj->nrs', dphi, g_inv, dphi)
    N = jnp.eye(D_EXT, dtype=F32)[None] - P
    return cov, N, q, bbt


if __name__ == "__main__":
    key = jax.random.PRNGKey(0)
    pkey, xkey = jax.random.split(key)
    params = init_params(pkey)
    x = jax.random.normal(xkey, (BATCH, D_EXT), F32)

    outs = autoencoder_diffusion_forward(x, params)
    outs = jax.block_until_ready(outs)

    refs = reference_forward(x, params)
    names = ("cov_model", "N", "q", "bbt")
    for name, o, r in zip(names, outs, refs):
        assert o.shape == r.shape, (name, o.shape, r.shape)
        max_err = float(jnp.max(jnp.abs(o - r)))
        scale = 1.0 + float(jnp.max(jnp.abs(r)))
        if max_err > 2e-2 * scale:
            raise AssertionError(f"{name} mismatch: max abs err {max_err}")

    print("KERNEL_OK")
</pallas_src>

<mosaic_0001>
module attributes {stable_mosaic.version = 11 : i64} {
  func.func @_aed_fused_kernel(%arg0: i32, %arg1: memref<8x16xf32, #tpu.memory_space<vmem>>, %arg2: memref<16x32xf32, #tpu.memory_space<vmem>>, %arg3: memref<1x32xf32, #tpu.memory_space<vmem>>, %arg4: memref<32x64xf32, #tpu.memory_space<vmem>>, %arg5: memref<1x64xf32, #tpu.memory_space<vmem>>, %arg6: memref<32x16xf32, #tpu.memory_space<vmem>>, %arg7: memref<1x16xf32, #tpu.memory_space<vmem>>, %arg8: memref<256x16xf32, #tpu.memory_space<vmem>>, %arg9: memref<16x32xf32, #tpu.memory_space<vmem>>, %arg10: memref<1x128xf32, #tpu.memory_space<vmem>>, %arg11: memref<160x80xf32, #tpu.memory_space<vmem>>, %arg12: memref<1x256xf32, #tpu.memory_space<vmem>>, %arg13: memref<8x544xf32, #tpu.memory_space<vmem>>) attributes {dimension_semantics = [#tpu.dimension_semantics<parallel>], iteration_bounds = array<i64: 1>, scalar_prefetch = 0 : i64, scratch_operands = 0 : i64, tpu.core_type = #tpu.core_type<tc>, window_params = [{transform_indices = @transform_0, window_bounds = array<i64: 8, 16>}, {pipeline_mode = #tpu.pipeline_mode<synchronous>, transform_indices = @transform_1, window_bounds = array<i64: 16, 32>}, {pipeline_mode = #tpu.pipeline_mode<synchronous>, transform_indices = @transform_2, window_bounds = array<i64: 1, 32>}, {pipeline_mode = #tpu.pipeline_mode<synchronous>, transform_indices = @transform_3, window_bounds = array<i64: 32, 64>}, {pipeline_mode = #tpu.pipeline_mode<synchronous>, transform_indices = @transform_4, window_bounds = array<i64: 1, 64>}, {pipeline_mode = #tpu.pipeline_mode<synchronous>, transform_indices = @transform_5, window_bounds = array<i64: 32, 16>}, {pipeline_mode = #tpu.pipeline_mode<synchronous>, transform_indices = @transform_6, window_bounds = array<i64: 1, 16>}, {pipeline_mode = #tpu.pipeline_mode<synchronous>, transform_indices = @transform_7, window_bounds = array<i64: 256, 16>}, {pipeline_mode = #tpu.pipeline_mode<synchronous>, transform_indices = @transform_8, window_bounds = array<i64: 16, 32>}, {pipeline_mode = #tpu.pipeline_mode<synchronous>, transform_indices = @transform_9, window_bounds = array<i64: 1, 128>}, {pipeline_mode = #tpu.pipeline_mode<synchronous>, transform_indices = @transform_10, window_bounds = array<i64: 160, 80>}, {pipeline_mode = #tpu.pipeline_mode<synchronous>, transform_indices = @transform_11, window_bounds = array<i64: 1, 256>}, {transform_indices = @transform_12, window_bounds = array<i64: 8, 544>}]} {
    %c0 = arith.constant 0 : index
    %c0_0 = arith.constant 0 : index
    %0 = vector.load %arg1[%c0, %c0_0] : memref<8x16xf32, #tpu.memory_space<vmem>>, vector<8x16xf32>
    %c0_1 = arith.constant 0 : index
    %c0_2 = arith.constant 0 : index
    %1 = vector.load %arg2[%c0_1, %c0_2] : memref<16x32xf32, #tpu.memory_space<vmem>>, vector<16x32xf32>
    %cst = arith.constant dense<0.000000e+00> : vector<8x32xf32>
    %2 = tpu.matmul %0, %1, %cst {dimension_numbers = #tpu.dot_dimension_numbers<[1], [0], [0], [1], [0, 0, 1, 1], [], []>} : vector<8x16xf32>, vector<16x32xf32>, vector<8x32xf32> -> vector<8x32xf32>
    %c0_3 = arith.constant 0 : index
    %c0_4 = arith.constant 0 : index
    %3 = vector.load %arg3[%c0_3, %c0_4] : memref<1x32xf32, #tpu.memory_space<vmem>>, vector<1x32xf32>
    %4 = vector.broadcast %3 : vector<1x32xf32> to vector<8x32xf32>
    %5 = arith.addf %2, %4 : vector<8x32xf32>
    %6 = math.tanh %5 : vector<8x32xf32>
    %c0_5 = arith.constant 0 : index
    %c0_6 = arith.constant 0 : index
    %7 = vector.load %arg4[%c0_5, %c0_6] : memref<32x64xf32, #tpu.memory_space<vmem>>, vector<32x64xf32>
    %cst_7 = arith.constant dense<0.000000e+00> : vector<8x64xf32>
    %8 = tpu.matmul %6, %7, %cst_7 {dimension_numbers = #tpu.dot_dimension_numbers<[1], [0], [0], [1], [0, 0, 1, 1], [], []>} : vector<8x32xf32>, vector<32x64xf32>, vector<8x64xf32> -> vector<8x64xf32>
    %c0_8 = arith.constant 0 : index
    %c0_9 = arith.constant 0 : index
    %9 = vector.load %arg5[%c0_8, %c0_9] : memref<1x64xf32, #tpu.memory_space<vmem>>, vector<1x64xf32>
    %10 = vector.broadcast %9 : vector<1x64xf32> to vector<8x64xf32>
    %11 = arith.addf %8, %10 : vector<8x64xf32>
    %12 = vector.extract_strided_slice %11 {offsets = [0, 0], sizes = [8, 32], strides = [1, 1]} : vector<8x64xf32> to vector<8x32xf32>
    %13 = vector.extract_strided_slice %11 {offsets = [0, 32], sizes = [8, 32], strides = [1, 1]} : vector<8x64xf32> to vector<8x32xf32>
    %14 = math.tanh %12 : vector<8x32xf32>
    %15 = arith.mulf %14, %14 : vector<8x32xf32>
    %cst_10 = arith.constant 1.000000e+00 : f32
    %16 = vector.broadcast %cst_10 : f32 to vector<8x32xf32>
    %17 = arith.subf %16, %15 : vector<8x32xf32>
    %cst_11 = arith.constant -2.000000e+00 : f32
    %18 = vector.broadcast %cst_11 : f32 to vector<8x32xf32>
    %19 = arith.mulf %18, %14 : vector<8x32xf32>
    %20 = arith.mulf %19, %17 : vector<8x32xf32>
    %21 = math.tanh %13 : vector<8x32xf32>
    %c0_12 = arith.constant 0 : index
    %c0_13 = arith.constant 0 : index
    %22 = vector.load %arg6[%c0_12, %c0_13] : memref<32x16xf32, #tpu.memory_space<vmem>>, vector<32x16xf32>
    %cst_14 = arith.constant dense<0.000000e+00> : vector<8x16xf32>
    %23 = tpu.matmul %21, %22, %cst_14 {dimension_numbers = #tpu.dot_dimension_numbers<[1], [0], [0], [1], [0, 0, 1, 1], [], []>} : vector<8x32xf32>, vector<32x16xf32>, vector<8x16xf32> -> vector<8x16xf32>
    %c0_15 = arith.constant 0 : index
    %c0_16 = arith.constant 0 : index
    %24 = vector.load %arg7[%c0_15, %c0_16] : memref<1x16xf32, #tpu.memory_space<vmem>>, vector<1x16xf32>
    %25 = vector.broadcast %24 : vector<1x16xf32> to vector<8x16xf32>
    %26 = arith.addf %23, %25 : vector<8x16xf32>
    %27 = vector.shape_cast %26 : vector<8x16xf32> to vector<8x16x1xf32>
    %28 = vector.broadcast %27 : vector<8x16x1xf32> to vector<8x16x16xf32>
    %29 = vector.shape_cast %28 : vector<8x16x16xf32> to vector<8x256xf32>
    %30 = tpu.concatenate %26, %26, %26, %26, %26, %26, %26, %26, %26, %26, %26, %26, %26, %26, %26, %26 in 1 : vector<8x16xf32>, vector<8x16xf32>, vector<8x16xf32>, vector<8x16xf32>, vector<8x16xf32>, vector<8x16xf32>, vector<8x16xf32>, vector<8x16xf32>, vector<8x16xf32>, vector<8x16xf32>, vector<8x16xf32>, vector<8x16xf32>, vector<8x16xf32>, vector<8x16xf32>, vector<8x16xf32>, vector<8x16xf32> -> vector<8x256xf32>
    %31 = arith.mulf %29, %30 : vector<8x256xf32>
    %c0_17 = arith.constant 0 : index
    %c0_18 = arith.constant 0 : index
    %32 = vector.load %arg8[%c0_17, %c0_18] : memref<256x16xf32, #tpu.memory_space<vmem>>, vector<256x16xf32>
    %cst_19 = arith.constant dense<0.000000e+00> : vector<8x16xf32>
    %33 = tpu.matmul %31, %32, %cst_19 {dimension_numbers = #tpu.dot_dimension_numbers<[1], [0], [0], [1], [0, 0, 1, 1], [], []>} : vector<8x256xf32>, vector<256x16xf32>, vector<8x16xf32> -> vector<8x16xf32>
    %c0_20 = arith.constant 0 : index
    %c0_21 = arith.constant 0 : index
    %34 = vector.load %arg9[%c0_20, %c0_21] : memref<16x32xf32, #tpu.memory_space<vmem>>, vector<16x32xf32>
    %cst_22 = arith.constant dense<0.000000e+00> : vector<8x32xf32>
    %35 = tpu.matmul %33, %34, %cst_22 {dimension_numbers = #tpu.dot_dimension_numbers<[1], [0], [0], [1], [0, 0, 1, 1], [], []>} : vector<8x16xf32>, vector<16x32xf32>, vector<8x32xf32> -> vector<8x32xf32>
    %36 = tpu.concatenate %17, %17, %17, %17 in 1 : vector<8x32xf32>, vector<8x32xf32>, vector<8x32xf32>, vector<8x32xf32> -> vector<8x128xf32>
    %c0_23 = arith.constant 0 : index
    %c0_24 = arith.constant 0 : index
    %37 = vector.load %arg10[%c0_23, %c0_24] : memref<1x128xf32, #tpu.memory_space<vmem>>, vector<1x128xf32>
    %38 = vector.broadcast %37 : vector<1x128xf32> to vector<8x128xf32>
    %39 = arith.mulf %36, %38 : vector<8x128xf32>
    %40 = arith.mulf %20, %35 : vector<8x32xf32>
    %41 = tpu.concatenate %39, %40 in 1 : vector<8x128xf32>, vector<8x32xf32> -> vector<8x160xf32>
    %c0_25 = arith.constant 0 : index
    %c0_26 = arith.constant 0 : index
    %42 = vector.load %arg11[%c0_25, %c0_26] : memref<160x80xf32, #tpu.memory_space<vmem>>, vector<160x80xf32>
    %cst_27 = arith.constant dense<0.000000e+00> : vector<8x80xf32>
    %43 = tpu.matmul %41, %42, %cst_27 {dimension_numbers = #tpu.dot_dimension_numbers<[1], [0], [0], [1], [0, 0, 1, 1], [], []>} : vector<8x160xf32>, vector<160x80xf32>, vector<8x80xf32> -> vector<8x80xf32>
    %44 = vector.extract_strided_slice %43 {offsets = [0, 0], sizes = [8, 64], strides = [1, 1]} : vector<8x80xf32> to vector<8x64xf32>
    %45 = vector.extract_strided_slice %43 {offsets = [0, 64], sizes = [8, 16], strides = [1, 1]} : vector<8x80xf32> to vector<8x16xf32>
    %46 = vector.extract_strided_slice %44 {offsets = [0, 0], sizes = [8, 16], strides = [1, 1]} : vector<8x64xf32> to vector<8x16xf32>
    %47 = vector.extract_strided_slice %44 {offsets = [0, 16], sizes = [8, 16], strides = [1, 1]} : vector<8x64xf32> to vector<8x16xf32>
    %48 = vector.extract_strided_slice %44 {offsets = [0, 32], sizes = [8, 16], strides = [1, 1]} : vector<8x64xf32> to vector<8x16xf32>
    %49 = vector.extract_strided_slice %44 {offsets = [0, 48], sizes = [8, 16], strides = [1, 1]} : vector<8x64xf32> to vector<8x16xf32>
    %50 = arith.mulf %46, %46 : vector<8x16xf32>
    %cst_28 = arith.constant dense<0.000000e+00> : vector<8xf32>
    %51 = vector.multi_reduction <add>, %50, %cst_28 [1] : vector<8x16xf32> to vector<8xf32>
    %52 = vector.shape_cast %51 : vector<8xf32> to vector<8x1xf32>
    %53 = arith.mulf %46, %47 : vector<8x16xf32>
    %cst_29 = arith.constant dense<0.000000e+00> : vector<8xf32>
    %54 = vector.multi_reduction <add>, %53, %cst_29 [1] : vector<8x16xf32> to vector<8xf32>
    %55 = vector.shape_cast %54 : vector<8xf32> to vector<8x1xf32>
    %56 = arith.mulf %46, %48 : vector<8x16xf32>
    %cst_30 = arith.constant dense<0.000000e+00> : vector<8xf32>
    %57 = vector.multi_reduction <add>, %56, %cst_30 [1] : vector<8x16xf32> to vector<8xf32>
    %58 = vector.shape_cast %57 : vector<8xf32> to vector<8x1xf32>
    %59 = arith.mulf %46, %49 : vector<8x16xf32>
    %cst_31 = arith.constant dense<0.000000e+00> : vector<8xf32>
    %60 = vector.multi_reduction <add>, %59, %cst_31 [1] : vector<8x16xf32> to vector<8xf32>
    %61 = vector.shape_cast %60 : vector<8xf32> to vector<8x1xf32>
    %62 = arith.mulf %47, %47 : vector<8x16xf32>
    %cst_32 = arith.constant dense<0.000000e+00> : vector<8xf32>
    %63 = vector.multi_reduction <add>, %62, %cst_32 [1] : vector<8x16xf32> to vector<8xf32>
    %64 = vector.shape_cast %63 : vector<8xf32> to vector<8x1xf32>
    %65 = arith.mulf %47, %48 : vector<8x16xf32>
    %cst_33 = arith.constant dense<0.000000e+00> : vector<8xf32>
    %66 = vector.multi_reduction <add>, %65, %cst_33 [1] : vector<8x16xf32> to vector<8xf32>
    %67 = vector.shape_cast %66 : vector<8xf32> to vector<8x1xf32>
    %68 = arith.mulf %47, %49 : vector<8x16xf32>
    %cst_34 = arith.constant dense<0.000000e+00> : vector<8xf32>
    %69 = vector.multi_reduction <add>, %68, %cst_34 [1] : vector<8x16xf32> to vector<8xf32>
    %70 = vector.shape_cast %69 : vector<8xf32> to vector<8x1xf32>
    %71 = arith.mulf %48, %48 : vector<8x16xf32>
    %cst_35 = arith.constant dense<0.000000e+00> : vector<8xf32>
    %72 = vector.multi_reduction <add>, %71, %cst_35 [1] : vector<8x16xf32> to vector<8xf32>
    %73 = vector.shape_cast %72 : vector<8xf32> to vector<8x1xf32>
    %74 = arith.mulf %48, %49 : vector<8x16xf32>
    %cst_36 = arith.constant dense<0.000000e+00> : vector<8xf32>
    %75 = vector.multi_reduction <add>, %74, %cst_36 [1] : vector<8x16xf32> to vector<8xf32>
    %76 = vector.shape_cast %75 : vector<8xf32> to vector<8x1xf32>
    %77 = arith.mulf %49, %49 : vector<8x16xf32>
    %cst_37 = arith.constant dense<0.000000e+00> : vector<8xf32>
    %78 = vector.multi_reduction <add>, %77, %cst_37 [1] : vector<8x16xf32> to vector<8xf32>
    %79 = vector.shape_cast %78 : vector<8xf32> to vector<8x1xf32>
    %80 = arith.mulf %52, %64 : vector<8x1xf32>
    %81 = arith.mulf %55, %55 : vector<8x1xf32>
    %82 = arith.subf %80, %81 : vector<8x1xf32>
    %83 = arith.mulf %52, %67 : vector<8x1xf32>
    %84 = arith.mulf %55, %58 : vector<8x1xf32>
    %85 = arith.subf %83, %84 : vector<8x1xf32>
    %86 = arith.mulf %52, %70 : vector<8x1xf32>
    %87 = arith.mulf %55, %61 : vector<8x1xf32>
    %88 = arith.subf %86, %87 : vector<8x1xf32>
    %89 = arith.mulf %55, %67 : vector<8x1xf32>
    %90 = arith.mulf %64, %58 : vector<8x1xf32>
    %91 = arith.subf %89, %90 : vector<8x1xf32>
    %92 = arith.mulf %55, %70 : vector<8x1xf32>
    %93 = arith.mulf %64, %61 : vector<8x1xf32>
    %94 = arith.subf %92, %93 : vector<8x1xf32>
    %95 = arith.mulf %58, %70 : vector<8x1xf32>
    %96 = arith.mulf %67, %61 : vector<8x1xf32>
    %97 = arith.subf %95, %96 : vector<8x1xf32>
    %98 = arith.mulf %73, %79 : vector<8x1xf32>
    %99 = arith.mulf %76, %76 : vector<8x1xf32>
    %100 = arith.subf %98, %99 : vector<8x1xf32>
    %101 = arith.mulf %67, %79 : vector<8x1xf32>
    %102 = arith.mulf %70, %76 : vector<8x1xf32>
    %103 = arith.subf %101, %102 : vector<8x1xf32>
    %104 = arith.mulf %67, %76 : vector<8x1xf32>
    %105 = arith.mulf %70, %73 : vector<8x1xf32>
    %106 = arith.subf %104, %105 : vector<8x1xf32>
    %107 = arith.mulf %58, %79 : vector<8x1xf32>
    %108 = arith.mulf %61, %76 : vector<8x1xf32>
    %109 = arith.subf %107, %108 : vector<8x1xf32>
    %110 = arith.mulf %58, %76 : vector<8x1xf32>
    %111 = arith.mulf %61, %73 : vector<8x1xf32>
    %112 = arith.subf %110, %111 : vector<8x1xf32>
    %113 = arith.mulf %58, %70 : vector<8x1xf32>
    %114 = arith.mulf %61, %67 : vector<8x1xf32>
    %115 = arith.subf %113, %114 : vector<8x1xf32>
    %116 = arith.mulf %82, %100 : vector<8x1xf32>
    %117 = arith.mulf %85, %103 : vector<8x1xf32>
    %118 = arith.subf %116, %117 : vector<8x1xf32>
    %119 = arith.mulf %88, %106 : vector<8x1xf32>
    %120 = arith.addf %118, %119 : vector<8x1xf32>
    %121 = arith.mulf %91, %109 : vector<8x1xf32>
    %122 = arith.addf %120, %121 : vector<8x1xf32>
    %123 = arith.mulf %94, %112 : vector<8x1xf32>
    %124 = arith.subf %122, %123 : vector<8x1xf32>
    %125 = arith.mulf %97, %115 : vector<8x1xf32>
    %126 = arith.addf %124, %125 : vector<8x1xf32>
    %cst_38 = arith.constant 1.000000e+00 : f32
    %127 = vector.broadcast %cst_38 : f32 to vector<8x1xf32>
    %128 = arith.divf %127, %126 : vector<8x1xf32>
    %129 = arith.mulf %64, %100 : vector<8x1xf32>
    %130 = arith.mulf %67, %103 : vector<8x1xf32>
    %131 = arith.subf %129, %130 : vector<8x1xf32>
    %132 = arith.mulf %70, %106 : vector<8x1xf32>
    %133 = arith.addf %131, %132 : vector<8x1xf32>
    %134 = arith.mulf %133, %128 : vector<8x1xf32>
    %cst_39 = arith.constant 0.000000e+00 : f32
    %135 = vector.broadcast %cst_39 : f32 to vector<8x1xf32>
    %136 = arith.subf %135, %55 : vector<8x1xf32>
    %137 = arith.mulf %136, %100 : vector<8x1xf32>
    %138 = arith.mulf %58, %103 : vector<8x1xf32>
    %139 = arith.addf %137, %138 : vector<8x1xf32>
    %140 = arith.mulf %61, %106 : vector<8x1xf32>
    %141 = arith.subf %139, %140 : vector<8x1xf32>
    %142 = arith.mulf %141, %128 : vector<8x1xf32>
    %143 = arith.mulf %70, %97 : vector<8x1xf32>
    %144 = arith.mulf %76, %94 : vector<8x1xf32>
    %145 = arith.subf %143, %144 : vector<8x1xf32>
    %146 = arith.mulf %79, %91 : vector<8x1xf32>
    %147 = arith.addf %145, %146 : vector<8x1xf32>
    %148 = arith.mulf %147, %128 : vector<8x1xf32>
    %cst_40 = arith.constant 0.000000e+00 : f32
    %149 = vector.broadcast %cst_40 : f32 to vector<8x1xf32>
    %150 = arith.subf %149, %67 : vector<8x1xf32>
    %151 = arith.mulf %150, %97 : vector<8x1xf32>
    %152 = arith.mulf %73, %94 : vector<8x1xf32>
    %153 = arith.addf %151, %152 : vector<8x1xf32>
    %154 = arith.mulf %76, %91 : vector<8x1xf32>
    %155 = arith.subf %153, %154 : vector<8x1xf32>
    %156 = arith.mulf %155, %128 : vector<8x1xf32>
    %cst_41 = arith.constant 0.000000e+00 : f32
    %157 = vector.broadcast %cst_41 : f32 to vector<8x1xf32>
    %158 = arith.subf %157, %55 : vector<8x1xf32>
    %159 = arith.mulf %158, %100 : vector<8x1xf32>
    %160 = arith.mulf %67, %109 : vector<8x1xf32>
    %161 = arith.addf %159, %160 : vector<8x1xf32>
    %162 = arith.mulf %70, %112 : vector<8x1xf32>
    %163 = arith.subf %161, %162 : vector<8x1xf32>
    %164 = arith.mulf %163, %128 : vector<8x1xf32>
    %165 = arith.mulf %52, %100 : vector<8x1xf32>
    %166 = arith.mulf %58, %109 : vector<8x1xf32>
    %167 = arith.subf %165, %166 : vector<8x1xf32>
    %168 = arith.mulf %61, %112 : vector<8x1xf32>
    %169 = arith.addf %167, %168 : vector<8x1xf32>
    %170 = arith.mulf %169, %128 : vector<8x1xf32>
    %cst_42 = arith.constant 0.000000e+00 : f32
    %171 = vector.broadcast %cst_42 : f32 to vector<8x1xf32>
    %172 = arith.subf %171, %61 : vector<8x1xf32>
    %173 = arith.mulf %172, %97 : vector<8x1xf32>
    %174 = arith.mulf %76, %88 : vector<8x1xf32>
    %175 = arith.addf %173, %174 : vector<8x1xf32>
    %176 = arith.mulf %79, %85 : vector<8x1xf32>
    %177 = arith.subf %175, %176 : vector<8x1xf32>
    %178 = arith.mulf %177, %128 : vector<8x1xf32>
    %179 = arith.mulf %58, %97 : vector<8x1xf32>
    %180 = arith.mulf %73, %88 : vector<8x1xf32>
    %181 = arith.subf %179, %180 : vector<8x1xf32>
    %182 = arith.mulf %76, %85 : vector<8x1xf32>
    %183 = arith.addf %181, %182 : vector<8x1xf32>
    %184 = arith.mulf %183, %128 : vector<8x1xf32>
    %185 = arith.mulf %55, %103 : vector<8x1xf32>
    %186 = arith.mulf %64, %109 : vector<8x1xf32>
    %187 = arith.subf %185, %186 : vector<8x1xf32>
    %188 = arith.mulf %70, %115 : vector<8x1xf32>
    %189 = arith.addf %187, %188 : vector<8x1xf32>
    %190 = arith.mulf %189, %128 : vector<8x1xf32>
    %cst_43 = arith.constant 0.000000e+00 : f32
    %191 = vector.broadcast %cst_43 : f32 to vector<8x1xf32>
    %192 = arith.subf %191, %52 : vector<8x1xf32>
    %193 = arith.mulf %192, %103 : vector<8x1xf32>
    %194 = arith.mulf %55, %109 : vector<8x1xf32>
    %195 = arith.addf %193, %194 : vector<8x1xf32>
    %196 = arith.mulf %61, %115 : vector<8x1xf32>
    %197 = arith.subf %195, %196 : vector<8x1xf32>
    %198 = arith.mulf %197, %128 : vector<8x1xf32>
    %199 = arith.mulf %61, %94 : vector<8x1xf32>
    %200 = arith.mulf %70, %88 : vector<8x1xf32>
    %201 = arith.subf %199, %200 : vector<8x1xf32>
    %202 = arith.mulf %79, %82 : vector<8x1xf32>
    %203 = arith.addf %201, %202 : vector<8x1xf32>
    %204 = arith.mulf %203, %128 : vector<8x1xf32>
    %cst_44 = arith.constant 0.000000e+00 : f32
    %205 = vector.broadcast %cst_44 : f32 to vector<8x1xf32>
    %206 = arith.subf %205, %58 : vector<8x1xf32>
    %207 = arith.mulf %206, %94 : vector<8x1xf32>
    %208 = arith.mulf %67, %88 : vector<8x1xf32>
    %209 = arith.addf %207, %208 : vector<8x1xf32>
    %210 = arith.mulf %76, %82 : vector<8x1xf32>
    %211 = arith.subf %209, %210 : vector<8x1xf32>
    %212 = arith.mulf %211, %128 : vector<8x1xf32>
    %cst_45 = arith.constant 0.000000e+00 : f32
    %213 = vector.broadcast %cst_45 : f32 to vector<8x1xf32>
    %214 = arith.subf %213, %55 : vector<8x1xf32>
    %215 = arith.mulf %214, %106 : vector<8x1xf32>
    %216 = arith.mulf %64, %112 : vector<8x1xf32>
    %217 = arith.addf %215, %216 : vector<8x1xf32>
    %218 = arith.mulf %67, %115 : vector<8x1xf32>
    %219 = arith.subf %217, %218 : vector<8x1xf32>
    %220 = arith.mulf %219, %128 : vector<8x1xf32>
    %221 = arith.mulf %52, %106 : vector<8x1xf32>
    %222 = arith.mulf %55, %112 : vector<8x1xf32>
    %223 = arith.subf %221, %222 : vector<8x1xf32>
    %224 = arith.mulf %58, %115 : vector<8x1xf32>
    %225 = arith.addf %223, %224 : vector<8x1xf32>
    %226 = arith.mulf %225, %128 : vector<8x1xf32>
    %cst_46 = arith.constant 0.000000e+00 : f32
    %227 = vector.broadcast %cst_46 : f32 to vector<8x1xf32>
    %228 = arith.subf %227, %61 : vector<8x1xf32>
    %229 = arith.mulf %228, %91 : vector<8x1xf32>
    %230 = arith.mulf %70, %85 : vector<8x1xf32>
    %231 = arith.addf %229, %230 : vector<8x1xf32>
    %232 = arith.mulf %76, %82 : vector<8x1xf32>
    %233 = arith.subf %231, %232 : vector<8x1xf32>
    %234 = arith.mulf %233, %128 : vector<8x1xf32>
    %235 = arith.mulf %58, %91 : vector<8x1xf32>
    %236 = arith.mulf %67, %85 : vector<8x1xf32>
    %237 = arith.subf %235, %236 : vector<8x1xf32>
    %238 = arith.mulf %73, %82 : vector<8x1xf32>
    %239 = arith.addf %237, %238 : vector<8x1xf32>
    %240 = arith.mulf %239, %128 : vector<8x1xf32>
    %241 = vector.extract_strided_slice %33 {offsets = [0, 0], sizes = [8, 1], strides = [1, 1]} : vector<8x16xf32> to vector<8x1xf32>
    %242 = vector.broadcast %241 : vector<8x1xf32> to vector<8x16xf32>
    %243 = arith.mulf %242, %46 : vector<8x16xf32>
    %244 = vector.broadcast %134 : vector<8x1xf32> to vector<8x16xf32>
    %245 = arith.mulf %244, %46 : vector<8x16xf32>
    %246 = vector.extract_strided_slice %33 {offsets = [0, 1], sizes = [8, 1], strides = [1, 1]} : vector<8x16xf32> to vector<8x1xf32>
    %247 = vector.broadcast %246 : vector<8x1xf32> to vector<8x16xf32>
    %248 = arith.mulf %247, %47 : vector<8x16xf32>
    %249 = arith.addf %243, %248 : vector<8x16xf32>
    %250 = vector.broadcast %142 : vector<8x1xf32> to vector<8x16xf32>
    %251 = arith.mulf %250, %47 : vector<8x16xf32>
    %252 = arith.addf %245, %251 : vector<8x16xf32>
    %253 = vector.extract_strided_slice %33 {offsets = [0, 2], sizes = [8, 1], strides = [1, 1]} : vector<8x16xf32> to vector<8x1xf32>
    %254 = vector.broadcast %253 : vector<8x1xf32> to vector<8x16xf32>
    %255 = arith.mulf %254, %48 : vector<8x16xf32>
    %256 = arith.addf %249, %255 : vector<8x16xf32>
    %257 = vector.broadcast %148 : vector<8x1xf32> to vector<8x16xf32>
    %258 = arith.mulf %257, %48 : vector<8x16xf32>
    %259 = arith.addf %252, %258 : vector<8x16xf32>
    %260 = vector.extract_strided_slice %33 {offsets = [0, 3], sizes = [8, 1], strides = [1, 1]} : vector<8x16xf32> to vector<8x1xf32>
    %261 = vector.broadcast %260 : vector<8x1xf32> to vector<8x16xf32>
    %262 = arith.mulf %261, %49 : vector<8x16xf32>
    %263 = arith.addf %256, %262 : vector<8x16xf32>
    %264 = vector.broadcast %156 : vector<8x1xf32> to vector<8x16xf32>
    %265 = arith.mulf %264, %49 : vector<8x16xf32>
    %266 = arith.addf %259, %265 : vector<8x16xf32>
    %267 = vector.shape_cast %46 : vector<8x16xf32> to vector<8x16x1xf32>
    %268 = vector.broadcast %267 : vector<8x16x1xf32> to vector<8x16x16xf32>
    %269 = vector.shape_cast %268 : vector<8x16x16xf32> to vector<8x256xf32>
    %270 = tpu.concatenate %263, %263, %263, %263, %263, %263, %263, %263, %263, %263, %263, %263, %263, %263, %263, %263 in 1 : vector<8x16xf32>, vector<8x16xf32>, vector<8x16xf32>, vector<8x16xf32>, vector<8x16xf32>, vector<8x16xf32>, vector<8x16xf32>, vector<8x16xf32>, vector<8x16xf32>, vector<8x16xf32>, vector<8x16xf32>, vector<8x16xf32>, vector<8x16xf32>, vector<8x16xf32>, vector<8x16xf32>, vector<8x16xf32> -> vector<8x256xf32>
    %271 = arith.mulf %269, %270 : vector<8x256xf32>
    %272 = tpu.concatenate %266, %266, %266, %266, %266, %266, %266, %266, %266, %266, %266, %266, %266, %266, %266, %266 in 1 : vector<8x16xf32>, vector<8x16xf32>, vector<8x16xf32>, vector<8x16xf32>, vector<8x16xf32>, vector<8x16xf32>, vector<8x16xf32>, vector<8x16xf32>, vector<8x16xf32>, vector<8x16xf32>, vector<8x16xf32>, vector<8x16xf32>, vector<8x16xf32>, vector<8x16xf32>, vector<8x16xf32>, vector<8x16xf32> -> vector<8x256xf32>
    %273 = arith.mulf %269, %272 : vector<8x256xf32>
    %274 = vector.extract_strided_slice %33 {offsets = [0, 4], sizes = [8, 1], strides = [1, 1]} : vector<8x16xf32> to vector<8x1xf32>
    %275 = vector.broadcast %274 : vector<8x1xf32> to vector<8x16xf32>
    %276 = arith.mulf %275, %46 : vector<8x16xf32>
    %277 = vector.broadcast %164 : vector<8x1xf32> to vector<8x16xf32>
    %278 = arith.mulf %277, %46 : vector<8x16xf32>
    %279 = vector.extract_strided_slice %33 {offsets = [0, 5], sizes = [8, 1], strides = [1, 1]} : vector<8x16xf32> to vector<8x1xf32>
    %280 = vector.broadcast %279 : vector<8x1xf32> to vector<8x16xf32>
    %281 = arith.mulf %280, %47 : vector<8x16xf32>
    %282 = arith.addf %276, %281 : vector<8x16xf32>
    %283 = vector.broadcast %170 : vector<8x1xf32> to vector<8x16xf32>
    %284 = arith.mulf %283, %47 : vector<8x16xf32>
    %285 = arith.addf %278, %284 : vector<8x16xf32>
    %286 = vector.extract_strided_slice %33 {offsets = [0, 6], sizes = [8, 1], strides = [1, 1]} : vector<8x16xf32> to vector<8x1xf32>
    %287 = vector.broadcast %286 : vector<8x1xf32> to vector<8x16xf32>
    %288 = arith.mulf %287, %48 : vector<8x16xf32>
    %289 = arith.addf %282, %288 : vector<8x16xf32>
    %290 = vector.broadcast %178 : vector<8x1xf32> to vector<8x16xf32>
    %291 = arith.mulf %290, %48 : vector<8x16xf32>
    %292 = arith.addf %285, %291 : vector<8x16xf32>
    %293 = vector.extract_strided_slice %33 {offsets = [0, 7], sizes = [8, 1], strides = [1, 1]} : vector<8x16xf32> to vector<8x1xf32>
    %294 = vector.broadcast %293 : vector<8x1xf32> to vector<8x16xf32>
    %295 = arith.mulf %294, %49 : vector<8x16xf32>
    %296 = arith.addf %289, %295 : vector<8x16xf32>
    %297 = vector.broadcast %184 : vector<8x1xf32> to vector<8x16xf32>
    %298 = arith.mulf %297, %49 : vector<8x16xf32>
    %299 = arith.addf %292, %298 : vector<8x16xf32>
    %300 = vector.shape_cast %47 : vector<8x16xf32> to vector<8x16x1xf32>
    %301 = vector.broadcast %300 : vector<8x16x1xf32> to vector<8x16x16xf32>
    %302 = vector.shape_cast %301 : vector<8x16x16xf32> to vector<8x256xf32>
    %303 = tpu.concatenate %296, %296, %296, %296, %296, %296, %296, %296, %296, %296, %296, %296, %296, %296, %296, %296 in 1 : vector<8x16xf32>, vector<8x16xf32>, vector<8x16xf32>, vector<8x16xf32>, vector<8x16xf32>, vector<8x16xf32>, vector<8x16xf32>, vector<8x16xf32>, vector<8x16xf32>, vector<8x16xf32>, vector<8x16xf32>, vector<8x16xf32>, vector<8x16xf32>, vector<8x16xf32>, vector<8x16xf32>, vector<8x16xf32> -> vector<8x256xf32>
    %304 = arith.mulf %302, %303 : vector<8x256xf32>
    %305 = tpu.concatenate %299, %299, %299, %299, %299, %299, %299, %299, %299, %299, %299, %299, %299, %299, %299, %299 in 1 : vector<8x16xf32>, vector<8x16xf32>, vector<8x16xf32>, vector<8x16xf32>, vector<8x16xf32>, vector<8x16xf32>, vector<8x16xf32>, vector<8x16xf32>, vector<8x16xf32>, vector<8x16xf32>, vector<8x16xf32>, vector<8x16xf32>, vector<8x16xf32>, vector<8x16xf32>, vector<8x16xf32>, vector<8x16xf32> -> vector<8x256xf32>
    %306 = arith.mulf %302, %305 : vector<8x256xf32>
    %307 = arith.addf %271, %304 : vector<8x256xf32>
    %308 = arith.addf %273, %306 : vector<8x256xf32>
    %309 = vector.extract_strided_slice %33 {offsets = [0, 8], sizes = [8, 1], strides = [1, 1]} : vector<8x16xf32> to vector<8x1xf32>
    %310 = vector.broadcast %309 : vector<8x1xf32> to vector<8x16xf32>
    %311 = arith.mulf %310, %46 : vector<8x16xf32>
    %312 = vector.broadcast %190 : vector<8x1xf32> to vector<8x16xf32>
    %313 = arith.mulf %312, %46 : vector<8x16xf32>
    %314 = vector.extract_strided_slice %33 {offsets = [0, 9], sizes = [8, 1], strides = [1, 1]} : vector<8x16xf32> to vector<8x1xf32>
    %315 = vector.broadcast %314 : vector<8x1xf32> to vector<8x16xf32>
    %316 = arith.mulf %315, %47 : vector<8x16xf32>
    %317 = arith.addf %311, %316 : vector<8x16xf32>
    %318 = vector.broadcast %198 : vector<8x1xf32> to vector<8x16xf32>
    %319 = arith.mulf %318, %47 : vector<8x16xf32>
    %320 = arith.addf %313, %319 : vector<8x16xf32>
    %321 = vector.extract_strided_slice %33 {offsets = [0, 10], sizes = [8, 1], strides = [1, 1]} : vector<8x16xf32> to vector<8x1xf32>
    %322 = vector.broadcast %321 : vector<8x1xf32> to vector<8x16xf32>
    %323 = arith.mulf %322, %48 : vector<8x16xf32>
    %324 = arith.addf %317, %323 : vector<8x16xf32>
    %325 = vector.broadcast %204 : vector<8x1xf32> to vector<8x16xf32>
    %326 = arith.mulf %325, %48 : vector<8x16xf32>
    %327 = arith.addf %320, %326 : vector<8x16xf32>
    %328 = vector.extract_strided_slice %33 {offsets = [0, 11], sizes = [8, 1], strides = [1, 1]} : vector<8x16xf32> to vector<8x1xf32>
    %329 = vector.broadcast %328 : vector<8x1xf32> to vector<8x16xf32>
    %330 = arith.mulf %329, %49 : vector<8x16xf32>
    %331 = arith.addf %324, %330 : vector<8x16xf32>
    %332 = vector.broadcast %212 : vector<8x1xf32> to vector<8x16xf32>
    %333 = arith.mulf %332, %49 : vector<8x16xf32>
    %334 = arith.addf %327, %333 : vector<8x16xf32>
    %335 = vector.shape_cast %48 : vector<8x16xf32> to vector<8x16x1xf32>
    %336 = vector.broadcast %335 : vector<8x16x1xf32> to vector<8x16x16xf32>
    %337 = vector.shape_cast %336 : vector<8x16x16xf32> to vector<8x256xf32>
    %338 = tpu.concatenate %331, %331, %331, %331, %331, %331, %331, %331, %331, %331, %331, %331, %331, %331, %331, %331 in 1 : vector<8x16xf32>, vector<8x16xf32>, vector<8x16xf32>, vector<8x16xf32>, vector<8x16xf32>, vector<8x16xf32>, vector<8x16xf32>, vector<8x16xf32>, vector<8x16xf32>, vector<8x16xf32>, vector<8x16xf32>, vector<8x16xf32>, vector<8x16xf32>, vector<8x16xf32>, vector<8x16xf32>, vector<8x16xf32> -> vector<8x256xf32>
    %339 = arith.mulf %337, %338 : vector<8x256xf32>
    %340 = tpu.concatenate %334, %334, %334, %334, %334, %334, %334, %334, %334, %334, %334, %334, %334, %334, %334, %334 in 1 : vector<8x16xf32>, vector<8x16xf32>, vector<8x16xf32>, vector<8x16xf32>, vector<8x16xf32>, vector<8x16xf32>, vector<8x16xf32>, vector<8x16xf32>, vector<8x16xf32>, vector<8x16xf32>, vector<8x16xf32>, vector<8x16xf32>, vector<8x16xf32>, vector<8x16xf32>, vector<8x16xf32>, vector<8x16xf32> -> vector<8x256xf32>
    %341 = arith.mulf %337, %340 : vector<8x256xf32>
    %342 = arith.addf %307, %339 : vector<8x256xf32>
    %343 = arith.addf %308, %341 : vector<8x256xf32>
    %344 = vector.extract_strided_slice %33 {offsets = [0, 12], sizes = [8, 1], strides = [1, 1]} : vector<8x16xf32> to vector<8x1xf32>
    %345 = vector.broadcast %344 : vector<8x1xf32> to vector<8x16xf32>
    %346 = arith.mulf %345, %46 : vector<8x16xf32>
    %347 = vector.broadcast %220 : vector<8x1xf32> to vector<8x16xf32>
    %348 = arith.mulf %347, %46 : vector<8x16xf32>
    %349 = vector.extract_strided_slice %33 {offsets = [0, 13], sizes = [8, 1], strides = [1, 1]} : vector<8x16xf32> to vector<8x1xf32>
    %350 = vector.broadcast %349 : vector<8x1xf32> to vector<8x16xf32>
    %351 = arith.mulf %350, %47 : vector<8x16xf32>
    %352 = arith.addf %346, %351 : vector<8x16xf32>
    %353 = vector.broadcast %226 : vector<8x1xf32> to vector<8x16xf32>
    %354 = arith.mulf %353, %47 : vector<8x16xf32>
    %355 = arith.addf %348, %354 : vector<8x16xf32>
    %356 = vector.extract_strided_slice %33 {offsets = [0, 14], sizes = [8, 1], strides = [1, 1]} : vector<8x16xf32> to vector<8x1xf32>
    %357 = vector.broadcast %356 : vector<8x1xf32> to vector<8x16xf32>
    %358 = arith.mulf %357, %48 : vector<8x16xf32>
    %359 = arith.addf %352, %358 : vector<8x16xf32>
    %360 = vector.broadcast %234 : vector<8x1xf32> to vector<8x16xf32>
    %361 = arith.mulf %360, %48 : vector<8x16xf32>
    %362 = arith.addf %355, %361 : vector<8x16xf32>
    %363 = vector.extract_strided_slice %33 {offsets = [0, 15], sizes = [8, 1], strides = [1, 1]} : vector<8x16xf32> to vector<8x1xf32>
    %364 = vector.broadcast %363 : vector<8x1xf32> to vector<8x16xf32>
    %365 = arith.mulf %364, %49 : vector<8x16xf32>
    %366 = arith.addf %359, %365 : vector<8x16xf32>
    %367 = vector.broadcast %240 : vector<8x1xf32> to vector<8x16xf32>
    %368 = arith.mulf %367, %49 : vector<8x16xf32>
    %369 = arith.addf %362, %368 : vector<8x16xf32>
    %370 = vector.shape_cast %49 : vector<8x16xf32> to vector<8x16x1xf32>
    %371 = vector.broadcast %370 : vector<8x16x1xf32> to vector<8x16x16xf32>
    %372 = vector.shape_cast %371 : vector<8x16x16xf32> to vector<8x256xf32>
    %373 = tpu.concatenate %366, %366, %366, %366, %366, %366, %366, %366, %366, %366, %366, %366, %366, %366, %366, %366 in 1 : vector<8x16xf32>, vector<8x16xf32>, vector<8x16xf32>, vector<8x16xf32>, vector<8x16xf32>, vector<8x16xf32>, vector<8x16xf32>, vector<8x16xf32>, vector<8x16xf32>, vector<8x16xf32>, vector<8x16xf32>, vector<8x16xf32>, vector<8x16xf32>, vector<8x16xf32>, vector<8x16xf32>, vector<8x16xf32> -> vector<8x256xf32>
    %374 = arith.mulf %372, %373 : vector<8x256xf32>
    %375 = tpu.concatenate %369, %369, %369, %369, %369, %369, %369, %369, %369, %369, %369, %369, %369, %369, %369, %369 in 1 : vector<8x16xf32>, vector<8x16xf32>, vector<8x16xf32>, vector<8x16xf32>, vector<8x16xf32>, vector<8x16xf32>, vector<8x16xf32>, vector<8x16xf32>, vector<8x16xf32>, vector<8x16xf32>, vector<8x16xf32>, vector<8x16xf32>, vector<8x16xf32>, vector<8x16xf32>, vector<8x16xf32>, vector<8x16xf32> -> vector<8x256xf32>
    %376 = arith.mulf %372, %375 : vector<8x256xf32>
    %377 = arith.addf %342, %374 : vector<8x256xf32>
    %378 = arith.addf %343, %376 : vector<8x256xf32>
    %c0_47 = arith.constant 0 : index
    %c0_48 = arith.constant 0 : index
    %379 = vector.load %arg12[%c0_47, %c0_48] : memref<1x256xf32, #tpu.memory_space<vmem>>, vector<1x256xf32>
    %380 = vector.broadcast %379 : vector<1x256xf32> to vector<8x256xf32>
    %381 = arith.subf %380, %378 : vector<8x256xf32>
    %c0_49 = arith.constant 0 : index
    %c0_50 = arith.constant 0 : index
    %382 = vector.load %arg13[%c0_49, %c0_50] : memref<8x544xf32, #tpu.memory_space<vmem>>, vector<8x256xf32>
    tpu.vector_store %arg13[%c0_49, %c0_50], %377 {strides = array<i32>} : memref<8x544xf32, #tpu.memory_space<vmem>>, vector<8x256xf32>,
    %c0_51 = arith.constant 0 : index
    %c256 = arith.constant 256 : index
    %383 = vector.load %arg13[%c0_51, %c256] : memref<8x544xf32, #tpu.memory_space<vmem>>, vector<8x256xf32>
    tpu.vector_store %arg13[%c0_51, %c256], %381 {strides = array<i32>} : memref<8x544xf32, #tpu.memory_space<vmem>>, vector<8x256xf32>,
    %c0_52 = arith.constant 0 : index
    %c512 = arith.constant 512 : index
    %384 = vector.load %arg13[%c0_52, %c512] : memref<8x544xf32, #tpu.memory_space<vmem>>, vector<8x16xf32>
    tpu.vector_store %arg13[%c0_52, %c512], %45 {strides = array<i32>} : memref<8x544xf32, #tpu.memory_space<vmem>>, vector<8x16xf32>,
    %c0_53 = arith.constant 0 : index
    %c528 = arith.constant 528 : index
    %385 = vector.load %arg13[%c0_53, %c528] : memref<8x544xf32, #tpu.memory_space<vmem>>, vector<8x16xf32>
    tpu.vector_store %arg13[%c0_53, %c528], %33 {strides = array<i32>} : memref<8x544xf32, #tpu.memory_space<vmem>>, vector<8x16xf32>,
    return
  }
  func.func @transform_0(%arg0: i32) -> (i32, i32) {
    %c0_i32 = arith.constant 0 : i32
    %c0_i32_0 = arith.constant 0 : i32
    return %arg0, %c0_i32 : i32, i32
  }
  func.func @transform_1(%arg0: i32) -> (i32, i32) {
    %c0_i32 = arith.constant 0 : i32
    %c0_i32_0 = arith.constant 0 : i32
    %c0_i32_1 = arith.constant 0 : i32
    return %c0_i32, %c0_i32_0 : i32, i32
  }
  func.func @transform_2(%arg0: i32) -> (i32, i32) {
    %c0_i32 = arith.constant 0 : i32
    %c0_i32_0 = arith.constant 0 : i32
    %c0_i32_1 = arith.constant 0 : i32
    return %c0_i32, %c0_i32_0 : i32, i32
  }
  func.func @transform_3(%arg0: i32) -> (i32, i32) {
    %c0_i32 = arith.constant 0 : i32
    %c0_i32_0 = arith.constant 0 : i32
    %c0_i32_1 = arith.constant 0 : i32
    return %c0_i32, %c0_i32_0 : i32, i32
  }
  func.func @transform_4(%arg0: i32) -> (i32, i32) {
    %c0_i32 = arith.constant 0 : i32
    %c0_i32_0 = arith.constant 0 : i32
    %c0_i32_1 = arith.constant 0 : i32
    return %c0_i32, %c0_i32_0 : i32, i32
  }
  func.func @transform_5(%arg0: i32) -> (i32, i32) {
    %c0_i32 = arith.constant 0 : i32
    %c0_i32_0 = arith.constant 0 : i32
    %c0_i32_1 = arith.constant 0 : i32
    return %c0_i32, %c0_i32_0 : i32, i32
  }
  func.func @transform_6(%arg0: i32) -> (i32, i32) {
    %c0_i32 = arith.constant 0 : i32
    %c0_i32_0 = arith.constant 0 : i32
    %c0_i32_1 = arith.constant 0 : i32
    return %c0_i32, %c0_i32_0 : i32, i32
  }
  func.func @transform_7(%arg0: i32) -> (i32, i32) {
    %c0_i32 = arith.constant 0 : i32
    %c0_i32_0 = arith.constant 0 : i32
    %c0_i32_1 = arith.constant 0 : i32
    return %c0_i32, %c0_i32_0 : i32, i32
  }
  func.func @transform_8(%arg0: i32) -> (i32, i32) {
    %c0_i32 = arith.constant 0 : i32
    %c0_i32_0 = arith.constant 0 : i32
    %c0_i32_1 = arith.constant 0 : i32
    return %c0_i32, %c0_i32_0 : i32, i32
  }
  func.func @transform_9(%arg0: i32) -> (i32, i32) {
    %c0_i32 = arith.constant 0 : i32
    %c0_i32_0 = arith.constant 0 : i32
    %c0_i32_1 = arith.constant 0 : i32
    return %c0_i32, %c0_i32_0 : i32, i32
  }
  func.func @transform_10(%arg0: i32) -> (i32, i32) {
    %c0_i32 = arith.constant 0 : i32
    %c0_i32_0 = arith.constant 0 : i32
    %c0_i32_1 = arith.constant 0 : i32
    return %c0_i32, %c0_i32_0 : i32, i32
  }
  func.func @transform_11(%arg0: i32) -> (i32, i32) {
    %c0_i32 = arith.constant 0 : i32
    %c0_i32_0 = arith.constant 0 : i32
    %c0_i32_1 = arith.constant 0 : i32
    return %c0_i32, %c0_i32_0 : i32, i32
  }
  func.func @transform_12(%arg0: i32) -> (i32, i32) {
    %c0_i32 = arith.constant 0 : i32
    %c0_i32_0 = arith.constant 0 : i32
    return %arg0, %c0_i32 : i32, i32
  }
}

</mosaic_0001>

<llo_original>
// kernel: tpu_custom_call.1
$region0: #{tpu_custom_call.1}
  #allocation0 [shape = 'u32[]', space=smem, size = 0x4, offset = 0x4, fixed_abs, tag = 'smem constant byte address 0x4 - core index']
  #allocation1 [shape = 'u32[144,128]{1,0:T(1,128)}', space=vmem, size = 0x12000, scoped, tag = 'internal scratch']
  %s0 = inlined_call_operand.vmem [shape: f32[8,16], index: 0, kind: input, shape index: {}]
  %s1 = inlined_call_operand.vmem [shape: f32[16,32], index: 1, kind: input, shape index: {}]
  %s2 = inlined_call_operand.vmem [shape: f32[1,32], index: 2, kind: input, shape index: {}]
  %s3 = inlined_call_operand.vmem [shape: f32[32,64], index: 3, kind: input, shape index: {}]
  %s4 = inlined_call_operand.vmem [shape: f32[1,64], index: 4, kind: input, shape index: {}]
  %s5 = inlined_call_operand.vmem [shape: f32[32,16], index: 5, kind: input, shape index: {}]
  %s6 = inlined_call_operand.vmem [shape: f32[1,16], index: 6, kind: input, shape index: {}]
  %s7 = inlined_call_operand.vmem [shape: f32[256,16], index: 7, kind: input, shape index: {}]
  %s8 = inlined_call_operand.vmem [shape: f32[16,32], index: 8, kind: input, shape index: {}]
  %s9 = inlined_call_operand.vmem [shape: f32[1,128], index: 9, kind: input, shape index: {}]
  %s10 = inlined_call_operand.vmem [shape: f32[160,80], index: 10, kind: input, shape index: {}]
  %s11 = inlined_call_operand.vmem [shape: f32[1,256], index: 11, kind: input, shape index: {}]
  %s12 = inlined_call_operand.hbm [shape: f32[8,544], index: 12, kind: output, shape index: {}]
  %s13 = sld [smem:[#allocation0]]
  $region58: #{tpu_custom_call.1} parent=0
    _
  %s15 = ssub.s32 1, %s13
  %s16 = scalar_select 0, %s15, %s13
  $region1: #{tpu_custom_call.1} parent=0
    #allocation2 [shape = 'u8[20480]{0}', space=vmem, size = 0x5000, scoped, tag = 'output window, operand 0, single buffered']
    #allocation3 [shape = 's32[1]{0}', space=sflag, size = 0x4, scoped, tag = 'scoped memory for tpu_custom_call.1']
    %17 = vsyncpa [#allocation3], 0
    // Predicated region
    $region2: #{tpu_custom_call.1} parent=1 // pred_check
      _
    $region3: #{tpu_custom_call.1} parent=1 // pred_check_branch
      %19 = sbr.rel (0) target = $region5
    $region4: #{tpu_custom_call.1} parent=1 // pred_region
      _
    $region5: #{tpu_custom_call.1} parent=1 // pred_fallthru
      _
    // Predicated region
    $region6: #{tpu_custom_call.1} parent=1 // pred_check
      _
    $region7: #{tpu_custom_call.1} parent=1 // pred_check_branch
      %21 = sbr.rel (0) target = $region9
    $region8: #{tpu_custom_call.1} parent=1 // pred_region
      _
    $region9: #{tpu_custom_call.1} parent=1 // pred_fallthru
      _
    // Predicated region
    $region10: #{tpu_custom_call.1} parent=1 // pred_check
      _
    $region11: #{tpu_custom_call.1} parent=1 // pred_check_branch
      %23 = sbr.rel (0) target = $region13
    $region12: #{tpu_custom_call.1} parent=1 // pred_region
      _
    $region13: #{tpu_custom_call.1} parent=1 // pred_fallthru
      _
    // Predicated region
    $region14: #{tpu_custom_call.1} parent=1 // pred_check
      _
    $region15: #{tpu_custom_call.1} parent=1 // pred_check_branch
      %25 = sbr.rel (0) target = $region17
    $region16: #{tpu_custom_call.1} parent=1 // pred_region
      _
    $region17: #{tpu_custom_call.1} parent=1 // pred_fallthru
      _
    // Predicated region
    $region18: #{tpu_custom_call.1} parent=1 // pred_check
      _
    $region19: #{tpu_custom_call.1} parent=1 // pred_check_branch
      %27 = sbr.rel (0) target = $region21
    $region20: #{tpu_custom_call.1} parent=1 // pred_region
      _
    $region21: #{tpu_custom_call.1} parent=1 // pred_fallthru
      _
    // Predicated region
    $region22: #{tpu_custom_call.1} parent=1 // pred_check
      _
    $region23: #{tpu_custom_call.1} parent=1 // pred_check_branch
      %29 = sbr.rel (0) target = $region25
    $region24: #{tpu_custom_call.1} parent=1 // pred_region
      _
    $region25: #{tpu_custom_call.1} parent=1 // pred_fallthru
      _
    // Predicated region
    $region26: #{tpu_custom_call.1} parent=1 // pred_check
      _
    $region27: #{tpu_custom_call.1} parent=1 // pred_check_branch
      %31 = sbr.rel (0) target = $region29
    $region28: #{tpu_custom_call.1} parent=1 // pred_region
      _
    $region29: #{tpu_custom_call.1} parent=1 // pred_fallthru
      _
    // Predicated region
    $region30: #{tpu_custom_call.1} parent=1 // pred_check
      _
    $region31: #{tpu_custom_call.1} parent=1 // pred_check_branch
      %33 = sbr.rel (0) target = $region33
    $region32: #{tpu_custom_call.1} parent=1 // pred_region
      _
    $region33: #{tpu_custom_call.1} parent=1 // pred_fallthru
      _
    // Predicated region
    $region34: #{tpu_custom_call.1} parent=1 // pred_check
      _
    $region35: #{tpu_custom_call.1} parent=1 // pred_check_branch
      %35 = sbr.rel (0) target = $region37
    $region36: #{tpu_custom_call.1} parent=1 // pred_region
      _
    $region37: #{tpu_custom_call.1} parent=1 // pred_fallthru
      _
    // Predicated region
    $region38: #{tpu_custom_call.1} parent=1 // pred_check
      _
    $region39: #{tpu_custom_call.1} parent=1 // pred_check_branch
      %37 = sbr.rel (0) target = $region41
    $region40: #{tpu_custom_call.1} parent=1 // pred_region
      _
    $region41: #{tpu_custom_call.1} parent=1 // pred_fallthru
      _
    // Predicated region
    $region42: #{tpu_custom_call.1} parent=1 // pred_check
      _
    $region43: #{tpu_custom_call.1} parent=1 // pred_check_branch
      %39 = sbr.rel (0) target = $region45
    $region44: #{tpu_custom_call.1} parent=1 // pred_region
      _
    $region45: #{tpu_custom_call.1} parent=1 // pred_fallthru
      _
    // Predicated region
    $region46: #{tpu_custom_call.1} parent=1 // pred_check
      _
    $region47: #{tpu_custom_call.1} parent=1 // pred_check_branch
      %41 = sbr.rel (0) target = $region49
    $region48: #{tpu_custom_call.1} parent=1 // pred_region
      _
    $region49: #{tpu_custom_call.1} parent=1 // pred_fallthru
      _
    %v42 = vld [vmem:[%s0] sm:$0xff]
    %v43 = vld [vmem:[%s1] sm:$0xff]
    %v44 = vld [vmem:[%s1 + $0x8] sm:$0xff]
    %v45 = vld [vmem:[%s2] sm:$0x1]
    %v47 = vlaneseq
    %v48 = vshrl.u32 %v47, 7
    %v49 = vsub.s32 0, %v48
    %v50 = vrot.slane %v45, %v49
    %vm52 = vcmask 130048
    %v54 = vsel %vm52, %v42, 0
    %56 = vmatprep.subr.mxu0 0.0
    %57 = vmatpush1.msra.mxu0 0.0
    %58 = vmatprep.subr.mxu0 0.0
    %59 = vmatpush1.msra.mxu0 0.0
    %60 = vmatprep.subr.mxu0 0.0
    %61 = vmatpush1.msra.mxu0 0.0
    %62 = vmatprep.subr.mxu0 0.0
    %63 = vmatpush1.msra.mxu0 0.0
    %64 = vmatprep.subr.mxu0 0.0
    %65 = vmatpush1.msra.mxu0 0.0
    %66 = vmatprep.subr.mxu0 0.0
    %67 = vmatpush1.msra.mxu0 0.0
    %68 = vmatprep.subr.mxu0 0.0
    %69 = vmatpush1.msra.mxu0 0.0
    %70 = vmatprep.subr.mxu0 0.0
    %71 = vmatpush1.msra.mxu0 0.0
    %72 = vmatprep.subr.mxu0 0.0
    %73 = vmatpush1.msra.mxu0 0.0
    %74 = vmatprep.subr.mxu0 0.0
    %75 = vmatpush1.msra.mxu0 0.0
    %76 = vmatprep.subr.mxu0 0.0
    %77 = vmatpush1.msra.mxu0 0.0
    %78 = vmatprep.subr.mxu0 0.0
    %79 = vmatpush1.msra.mxu0 0.0
    %80 = vmatprep.subr.mxu0 0.0
    %81 = vmatpush1.msra.mxu0 0.0
    %82 = vmatprep.subr.mxu0 0.0
    %83 = vmatpush1.msra.mxu0 0.0
    %84 = vmatprep.subr.mxu0 0.0
    %85 = vmatpush1.msra.mxu0 %v44
    %86 = vmatprep.subr.mxu0 0.0
    %87 = vmatpush1.msra.mxu0 %v43
    %88 = vmatprep.subr.mxu0 0.0
    %89 = vmatpush2.msra.mxu0 0.0
    %90 = vmatprep.subr.mxu0 0.0
    %91 = vmatpush2.msra.mxu0 0.0
    %92 = vmatprep.subr.mxu0 0.0
    %93 = vmatpush2.msra.mxu0 0.0
    %94 = vmatprep.subr.mxu0 0.0
    %95 = vmatpush2.msra.mxu0 0.0
    %96 = vmatprep.subr.mxu0 0.0
    %97 = vmatpush2.msra.mxu0 0.0
    %98 = vmatprep.subr.mxu0 0.0
    %99 = vmatpush2.msra.mxu0 0.0
    %100 = vmatprep.subr.mxu0 0.0
    %101 = vmatpush2.msra.mxu0 0.0
    %102 = vmatprep.subr.mxu0 0.0
    %103 = vmatpush2.msra.mxu0 0.0
    %104 = vmatprep.subr.mxu0 0.0
    %105 = vmatpush2.msra.mxu0 0.0
    %106 = vmatprep.subr.mxu0 0.0
    %107 = vmatpush2.msra.mxu0 0.0
    %108 = vmatprep.subr.mxu0 0.0
    %109 = vmatpush2.msra.mxu0 0.0
    %110 = vmatprep.subr.mxu0 0.0
    %111 = vmatpush2.msra.mxu0 0.0
    %112 = vmatprep.subr.mxu0 0.0
    %113 = vmatpush2.msra.mxu0 0.0
    %114 = vmatprep.subr.mxu0 0.0
    %115 = vmatpush2.msra.mxu0 0.0
    %116 = vmatprep.subr.mxu0 0.0
    %117 = vmatpush2.msra.mxu0 0.0
    %118 = vmatprep.subr.mxu0 0.0
    %119 = vmatpush2.msra.mxu0 0.0
    %120 = vmatprep.mubr.f32.mxu0 0.0
    %121 = vmatmul.mubr.f32.gmra.mxu0 %v54
    %v122 = vpop.f32.mrf.mxu0
    %v123 = vadd.f32 %v50, %v122
    %v124 = vpop.f32.mrf.mxu0
    %125 = vdwg.mxu0
    %v126 = vtanh.pop %v123
    %v127 = vld [vmem:[%s3] sm:$0xff]
    %v128 = vld [vmem:[%s3 + $0x8] sm:$0xff]
    %v129 = vld [vmem:[%s3 + $0x10] sm:$0xff]
    %v130 = vld [vmem:[%s3 + $0x18] sm:$0xff]
    %v131 = vld [vmem:[%s4] sm:$0x1]
    %v133 = vlaneseq
    %v134 = vshrl.u32 %v133, 7
    %v135 = vsub.s32 0, %v134
    %v136 = vrot.slane %v131, %v135
    %vm138 = vcmask 261120
    %v140 = vsel %vm138, %v126, 0
    %142 = vmatprep.subr.mxu0 0.0
    %143 = vmatpush1.msra.mxu0 0.0
    %144 = vmatprep.subr.mxu0 0.0
    %145 = vmatpush1.msra.mxu0 0.0
    %146 = vmatprep.subr.mxu0 0.0
    %147 = vmatpush1.msra.mxu0 0.0
    %148 = vmatprep.subr.mxu0 0.0
    %149 = vmatpush1.msra.mxu0 0.0
    %150 = vmatprep.subr.mxu0 0.0
    %151 = vmatpush1.msra.mxu0 0.0
    %152 = vmatprep.subr.mxu0 0.0
    %153 = vmatpush1.msra.mxu0 0.0
    %154 = vmatprep.subr.mxu0 0.0
    %155 = vmatpush1.msra.mxu0 0.0
    %156 = vmatprep.subr.mxu0 0.0
    %157 = vmatpush1.msra.mxu0 0.0
    %158 = vmatprep.subr.mxu0 0.0
    %159 = vmatpush1.msra.mxu0 0.0
    %160 = vmatprep.subr.mxu0 0.0
    %161 = vmatpush1.msra.mxu0 0.0
    %162 = vmatprep.subr.mxu0 0.0
    %163 = vmatpush1.msra.mxu0 0.0
    %164 = vmatprep.subr.mxu0 0.0
    %165 = vmatpush1.msra.mxu0 0.0
    %166 = vmatprep.subr.mxu0 0.0
    %167 = vmatpush1.msra.mxu0 %v130
    %168 = vmatprep.subr.mxu0 0.0
    %169 = vmatpush1.msra.mxu0 %v129
    %170 = vmatprep.subr.mxu0 0.0
    %171 = vmatpush1.msra.mxu0 %v128
    %172 = vmatprep.subr.mxu0 0.0
    %173 = vmatpush1.msra.mxu0 %v127
    %174 = vmatprep.subr.mxu0 0.0
    %175 = vmatpush2.msra.mxu0 0.0
    %176 = vmatprep.subr.mxu0 0.0
    %177 = vmatpush2.msra.mxu0 0.0
    %178 = vmatprep.subr.mxu0 0.0
    %179 = vmatpush2.msra.mxu0 0.0
    %180 = vmatprep.subr.mxu0 0.0
    %181 = vmatpush2.msra.mxu0 0.0
    %182 = vmatprep.subr.mxu0 0.0
    %183 = vmatpush2.msra.mxu0 0.0
    %184 = vmatprep.subr.mxu0 0.0
    %185 = vmatpush2.msra.mxu0 0.0
    %186 = vmatprep.subr.mxu0 0.0
    %187 = vmatpush2.msra.mxu0 0.0
    %188 = vmatprep.subr.mxu0 0.0
    %189 = vmatpush2.msra.mxu0 0.0
    %190 = vmatprep.subr.mxu0 0.0
    %191 = vmatpush2.msra.mxu0 0.0
    %192 = vmatprep.subr.mxu0 0.0
    %193 = vmatpush2.msra.mxu0 0.0
    %194 = vmatprep.subr.mxu0 0.0
    %195 = vmatpush2.msra.mxu0 0.0
    %196 = vmatprep.subr.mxu0 0.0
    %197 = vmatpush2.msra.mxu0 0.0
    %198 = vmatprep.subr.mxu0 0.0
    %199 = vmatpush2.msra.mxu0 0.0
    %200 = vmatprep.subr.mxu0 0.0
    %201 = vmatpush2.msra.mxu0 0.0
    %202 = vmatprep.subr.mxu0 0.0
    %203 = vmatpush2.msra.mxu0 0.0
    %204 = vmatprep.subr.mxu0 0.0
    %205 = vmatpush2.msra.mxu0 0.0
    %206 = vmatprep.mubr.f32.mxu0 0.0
    %207 = vmatmul.mubr.f32.gmra.mxu0 %v140
    %v208 = vpop.f32.mrf.mxu0
    %v209 = vadd.f32 %v136, %v208
    %v210 = vpop.f32.mrf.mxu0
    %211 = vdwg.mxu0
    %v212 = vtanh.pop %v209
    %v213 = vmul.f32 %v212, %v212
    %v214 = vsub.f32 1.0, %v213
    %v215 = vmul.f32 %v212, -2.0
    %v216 = vmul.f32 %v215, %v214
    %v217 = vld [vmem:[%s5] sm:$0xff]
    %v218 = vld [vmem:[%s5 + $0x8] sm:$0xff]
    %v219 = vld [vmem:[%s5 + $0x10] sm:$0xff]
    %v220 = vld [vmem:[%s5 + $0x18] sm:$0xff]
    %v221 = vld [vmem:[%s6] sm:$0x1]
    %v223 = vlaneseq
    %v224 = vshrl.u32 %v223, 7
    %v225 = vsub.s32 0, %v224
    %v226 = vrot.slane %v221, %v225
    %229 = vrot.lane.b32.xlu0 %v212, 96
    %v230 = vpop.permute.xlu0 %229
    %v231 = vsel %vm138, %v230, 0
    %233 = vmatprep.subr.mxu0 0.0
    %234 = vmatpush1.msra.mxu0 0.0
    %235 = vmatprep.subr.mxu0 0.0
    %236 = vmatpush1.msra.mxu0 0.0
    %237 = vmatprep.subr.mxu0 0.0
    %238 = vmatpush1.msra.mxu0 0.0
    %239 = vmatprep.subr.mxu0 0.0
    %240 = vmatpush1.msra.mxu0 0.0
    %241 = vmatprep.subr.mxu0 0.0
    %242 = vmatpush1.msra.mxu0 0.0
    %243 = vmatprep.subr.mxu0 0.0
    %244 = vmatpush1.msra.mxu0 0.0
    %245 = vmatprep.subr.mxu0 0.0
    %246 = vmatpush1.msra.mxu0 0.0
    %247 = vmatprep.subr.mxu0 0.0
    %248 = vmatpush1.msra.mxu0 0.0
    %249 = vmatprep.subr.mxu0 0.0
    %250 = vmatpush1.msra.mxu0 0.0
    %251 = vmatprep.subr.mxu0 0.0
    %252 = vmatpush1.msra.mxu0 0.0
    %253 = vmatprep.subr.mxu0 0.0
    %254 = vmatpush1.msra.mxu0 0.0
    %255 = vmatprep.subr.mxu0 0.0
    %256 = vmatpush1.msra.mxu0 0.0
    %257 = vmatprep.subr.mxu0 0.0
    %258 = vmatpush1.msra.mxu0 %v220
    %259 = vmatprep.subr.mxu0 0.0
    %260 = vmatpush1.msra.mxu0 %v219
    %261 = vmatprep.subr.mxu0 0.0
    %262 = vmatpush1.msra.mxu0 %v218
    %263 = vmatprep.subr.mxu0 0.0
    %264 = vmatpush1.msra.mxu0 %v217
    %265 = vmatprep.subr.mxu0 0.0
    %266 = vmatpush2.msra.mxu0 0.0
    %267 = vmatprep.subr.mxu0 0.0
    %268 = vmatpush2.msra.mxu0 0.0
    %269 = vmatprep.subr.mxu0 0.0
    %270 = vmatpush2.msra.mxu0 0.0
    %271 = vmatprep.subr.mxu0 0.0
    %272 = vmatpush2.msra.mxu0 0.0
    %273 = vmatprep.subr.mxu0 0.0
    %274 = vmatpush2.msra.mxu0 0.0
    %275 = vmatprep.subr.mxu0 0.0
    %276 = vmatpush2.msra.mxu0 0.0
    %277 = vmatprep.subr.mxu0 0.0
    %278 = vmatpush2.msra.mxu0 0.0
    %279 = vmatprep.subr.mxu0 0.0
    %280 = vmatpush2.msra.mxu0 0.0
    %281 = vmatprep.subr.mxu0 0.0
    %282 = vmatpush2.msra.mxu0 0.0
    %283 = vmatprep.subr.mxu0 0.0
    %284 = vmatpush2.msra.mxu0 0.0
    %285 = vmatprep.subr.mxu0 0.0
    %286 = vmatpush2.msra.mxu0 0.0
    %287 = vmatprep.subr.mxu0 0.0
    %288 = vmatpush2.msra.mxu0 0.0
    %289 = vmatprep.subr.mxu0 0.0
    %290 = vmatpush2.msra.mxu0 0.0
    %291 = vmatprep.subr.mxu0 0.0
    %292 = vmatpush2.msra.mxu0 0.0
    %293 = vmatprep.subr.mxu0 0.0
    %294 = vmatpush2.msra.mxu0 0.0
    %295 = vmatprep.subr.mxu0 0.0
    %296 = vmatpush2.msra.mxu0 0.0
    %297 = vmatprep.mubr.f32.mxu0 0.0
    %298 = vmatmul.mubr.f32.gmra.mxu0 %v231
    %v299 = vpop.f32.mrf.mxu0
    %v300 = vadd.f32 %v226, %v299
    %v301 = vpop.f32.mrf.mxu0
    %302 = vdwg.mxu0
    %v303 = vlaneseq
    %v304 = vshrl.u32 %v303, 7
    %v305 = vsub.s32 0, %v304
    %v306 = vrot.slane %v300, %v305
    %308 = vbcast.lane.b32.xlu0 %v306, 256
    %v309 = vpop.permute.xlu0 %308
    %s311 = sor.u32 256, 8
    %312 = vbcast.lane.b32.xlu0 %v306, %s311
    %v313 = vpop.permute.xlu0 %312
    %v314 = vlaneseq
    %v315 = vshrl.u32 %v314, 7
    %v316 = vsub.s32 1, %v315
    %v317 = vrot.slane %v300, %v316
    %319 = vbcast.lane.b32.xlu0 %v317, 256
    %v320 = vpop.permute.xlu0 %319
    %s322 = sor.u32 256, 8
    %323 = vbcast.lane.b32.xlu0 %v317, %s322
    %v324 = vpop.permute.xlu0 %323
    %v325 = vlaneseq
    %v326 = vshrl.u32 %v325, 7
    %v327 = vsub.s32 2, %v326
    %v328 = vrot.slane %v300, %v327
    %330 = vbcast.lane.b32.xlu0 %v328, 256
    %v331 = vpop.permute.xlu0 %330
    %s333 = sor.u32 256, 8
    %334 = vbcast.lane.b32.xlu0 %v328, %s333
    %v335 = vpop.permute.xlu0 %334
    %v336 = vlaneseq
    %v337 = vshrl.u32 %v336, 7
    %v338 = vsub.s32 3, %v337
    %v339 = vrot.slane %v300, %v338
    %341 = vbcast.lane.b32.xlu0 %v339, 256
    %v342 = vpop.permute.xlu0 %341
    %s344 = sor.u32 256, 8
    %345 = vbcast.lane.b32.xlu0 %v339, %s344
    %v346 = vpop.permute.xlu0 %345
    %v347 = vlaneseq
    %v348 = vshrl.u32 %v347, 7
    %v349 = vsub.s32 4, %v348
    %v350 = vrot.slane %v300, %v349
    %352 = vbcast.lane.b32.xlu0 %v350, 256
    %v353 = vpop.permute.xlu0 %352
    %s355 = sor.u32 256, 8
    %356 = vbcast.lane.b32.xlu0 %v350, %s355
    %v357 = vpop.permute.xlu0 %356
    %v358 = vlaneseq
    %v359 = vshrl.u32 %v358, 7
    %v360 = vsub.s32 5, %v359
    %v361 = vrot.slane %v300, %v360
    %363 = vbcast.lane.b32.xlu0 %v361, 256
    %v364 = vpop.permute.xlu0 %363
    %s366 = sor.u32 256, 8
    %367 = vbcast.lane.b32.xlu0 %v361, %s366
    %v368 = vpop.permute.xlu0 %367
    %v369 = vlaneseq
    %v370 = vshrl.u32 %v369, 7
    %v371 = vsub.s32 6, %v370
    %v372 = vrot.slane %v300, %v371
    %374 = vbcast.lane.b32.xlu0 %v372, 256
    %v375 = vpop.permute.xlu0 %374
    %s377 = sor.u32 256, 8
    %378 = vbcast.lane.b32.xlu0 %v372, %s377
    %v379 = vpop.permute.xlu0 %378
    %v380 = vlaneseq
    %v381 = vshrl.u32 %v380, 7
    %v382 = vsub.s32 7, %v381
    %v383 = vrot.slane %v300, %v382
    %385 = vbcast.lane.b32.xlu0 %v383, 256
    %v386 = vpop.permute.xlu0 %385
    %s388 = sor.u32 256, 8
    %389 = vbcast.lane.b32.xlu0 %v383, %s388
    %v390 = vpop.permute.xlu0 %389
    %v391 = vcombine.low %v309, %v331
    %v392 = vcombine.high %v309, %v331
    %v394 = vunpack.c.l.s4 1983009808
    %v395 = vunpack.c.0.s8 %v394
    %v396 = vlaneseq
    %v397 = vshrl.u32 %v396, 7
    %v398 = vsub.s32 %v395, %v397
    %v399 = vrot.slane %v391, %v398
    %v401 = vunpack.c.l.s4 1983009808
    %v402 = vunpack.c.0.s8 %v401
    %v403 = vlaneseq
    %v404 = vshrl.u32 %v403, 7
    %v405 = vsub.s32 %v402, %v404
    %v406 = vrot.slane %v392, %v405
    %v407 = vcombine.low %v320, %v342
    %v408 = vcombine.high %v320, %v342
    %v410 = vunpack.c.l.s4 1983009808
    %v411 = vunpack.c.0.s8 %v410
    %v412 = vlaneseq
    %v413 = vshrl.u32 %v412, 7
    %v414 = vsub.s32 %v411, %v413
    %v415 = vrot.slane %v407, %v414
    %v417 = vunpack.c.l.s4 1983009808
    %v418 = vunpack.c.0.s8 %v417
    %v419 = vlaneseq
    %v420 = vshrl.u32 %v419, 7
    %v421 = vsub.s32 %v418, %v420
    %v422 = vrot.slane %v408, %v421
    %v423 = vcombine.low %v353, %v375
    %v424 = vcombine.high %v353, %v375
    %v426 = vunpack.c.l.s4 1983009808
    %v427 = vunpack.c.0.s8 %v426
    %v428 = vlaneseq
    %v429 = vshrl.u32 %v428, 7
    %v430 = vsub.s32 %v427, %v429
    %v431 = vrot.slane %v423, %v430
    %v433 = vunpack.c.l.s4 1983009808
    %v434 = vunpack.c.0.s8 %v433
    %v435 = vlaneseq
    %v436 = vshrl.u32 %v435, 7
    %v437 = vsub.s32 %v434, %v436
    %v438 = vrot.slane %v424, %v437
    %v439 = vcombine.low %v364, %v386
    %v440 = vcombine.high %v364, %v386
    %v442 = vunpack.c.l.s4 1983009808
    %v443 = vunpack.c.0.s8 %v442
    %v444 = vlaneseq
    %v445 = vshrl.u32 %v444, 7
    %v446 = vsub.s32 %v443, %v445
    %v447 = vrot.slane %v439, %v446
    %v449 = vunpack.c.l.s4 1983009808
    %v450 = vunpack.c.0.s8 %v449
    %v451 = vlaneseq
    %v452 = vshrl.u32 %v451, 7
    %v453 = vsub.s32 %v450, %v452
    %v454 = vrot.slane %v440, %v453
    %v455 = vcombine.low %v399, %v415
    %v456 = vcombine.high %v399, %v415
    %v458 = vunpack.c.l.s4 1934713408
    %v459 = vunpack.c.0.s8 %v458
    %v460 = vlaneseq
    %v461 = vshrl.u32 %v460, 7
    %v462 = vsub.s32 %v459, %v461
    %v463 = vrot.slane %v455, %v462
    %v465 = vunpack.c.l.s4 1934713408
    %v466 = vunpack.c.0.s8 %v465
    %v467 = vlaneseq
    %v468 = vshrl.u32 %v467, 7
    %v469 = vsub.s32 %v466, %v468
    %v470 = vrot.slane %v456, %v469
    %v471 = vcombine.low %v406, %v422
    %v472 = vcombine.high %v406, %v422
    %v474 = vunpack.c.l.s4 1934713408
    %v475 = vunpack.c.0.s8 %v474
    %v476 = vlaneseq
    %v477 = vshrl.u32 %v476, 7
    %v478 = vsub.s32 %v475, %v477
    %v479 = vrot.slane %v471, %v478
    %v481 = vunpack.c.l.s4 1934713408
    %v482 = vunpack.c.0.s8 %v481
    %v483 = vlaneseq
    %v484 = vshrl.u32 %v483, 7
    %v485 = vsub.s32 %v482, %v484
    %v486 = vrot.slane %v472, %v485
    %v487 = vcombine.low %v431, %v447
    %v488 = vcombine.high %v431, %v447
    %v490 = vunpack.c.l.s4 1934713408
    %v491 = vunpack.c.0.s8 %v490
    %v492 = vlaneseq
    %v493 = vshrl.u32 %v492, 7
    %v494 = vsub.s32 %v491, %v493
    %v495 = vrot.slane %v487, %v494
    %v497 = vunpack.c.l.s4 1934713408
    %v498 = vunpack.c.0.s8 %v497
    %v499 = vlaneseq
    %v500 = vshrl.u32 %v499, 7
    %v501 = vsub.s32 %v498, %v500
    %v502 = vrot.slane %v488, %v501
    %v503 = vcombine.low %v438, %v454
    %v504 = vcombine.high %v438, %v454
    %v506 = vunpack.c.l.s4 1934713408
    %v507 = vunpack.c.0.s8 %v506
    %v508 = vlaneseq
    %v509 = vshrl.u32 %v508, 7
    %v510 = vsub.s32 %v507, %v509
    %v511 = vrot.slane %v503, %v510
    %v513 = vunpack.c.l.s4 1934713408
    %v514 = vunpack.c.0.s8 %v513
    %v515 = vlaneseq
    %v516 = vshrl.u32 %v515, 7
    %v517 = vsub.s32 %v514, %v516
    %v518 = vrot.slane %v504, %v517
    %v519 = vcombine.low %v463, %v495
    %v520 = vcombine.high %v463, %v495
    %v521 = vcombine.low %v470, %v502
    %v522 = vcombine.high %v470, %v502
    %v523 = vcombine.low %v479, %v511
    %v524 = vcombine.high %v479, %v511
    %v525 = vcombine.low %v486, %v518
    %v526 = vcombine.high %v486, %v518
    %v527 = vcombine.low %v313, %v335
    %v528 = vcombine.high %v313, %v335
    %v530 = vunpack.c.l.s4 1983009808
    %v531 = vunpack.c.0.s8 %v530
    %v532 = vlaneseq
    %v533 = vshrl.u32 %v532, 7
    %v534 = vsub.s32 %v531, %v533
    %v535 = vrot.slane %v527, %v534
    %v537 = vunpack.c.l.s4 1983009808
    %v538 = vunpack.c.0.s8 %v537
    %v539 = vlaneseq
    %v540 = vshrl.u32 %v539, 7
    %v541 = vsub.s32 %v538, %v540
    %v542 = vrot.slane %v528, %v541
    %v543 = vcombine.low %v324, %v346
    %v544 = vcombine.high %v324, %v346
    %v546 = vunpack.c.l.s4 1983009808
    %v547 = vunpack.c.0.s8 %v546
    %v548 = vlaneseq
    %v549 = vshrl.u32 %v548, 7
    %v550 = vsub.s32 %v547, %v549
    %v551 = vrot.slane %v543, %v550
    %v553 = vunpack.c.l.s4 1983009808
    %v554 = vunpack.c.0.s8 %v553
    %v555 = vlaneseq
    %v556 = vshrl.u32 %v555, 7
    %v557 = vsub.s32 %v554, %v556
    %v558 = vrot.slane %v544, %v557
    %v559 = vcombine.low %v357, %v379
    %v560 = vcombine.high %v357, %v379
    %v562 = vunpack.c.l.s4 1983009808
    %v563 = vunpack.c.0.s8 %v562
    %v564 = vlaneseq
    %v565 = vshrl.u32 %v564, 7
    %v566 = vsub.s32 %v563, %v565
    %v567 = vrot.slane %v559, %v566
    %v569 = vunpack.c.l.s4 1983009808
    %v570 = vunpack.c.0.s8 %v569
    %v571 = vlaneseq
    %v572 = vshrl.u32 %v571, 7
    %v573 = vsub.s32 %v570, %v572
    %v574 = vrot.slane %v560, %v573
    %v575 = vcombine.low %v368, %v390
    %v576 = vcombine.high %v368, %v390
    %v578 = vunpack.c.l.s4 1983009808
    %v579 = vunpack.c.0.s8 %v578
    %v580 = vlaneseq
    %v581 = vshrl.u32 %v580, 7
    %v582 = vsub.s32 %v579, %v581
    %v583 = vrot.slane %v575, %v582
    %v585 = vunpack.c.l.s4 1983009808
    %v586 = vunpack.c.0.s8 %v585
    %v587 = vlaneseq
    %v588 = vshrl.u32 %v587, 7
    %v589 = vsub.s32 %v586, %v588
    %v590 = vrot.slane %v576, %v589
    %v591 = vcombine.low %v535, %v551
    %v592 = vcombine.high %v535, %v551
    %v594 = vunpack.c.l.s4 1934713408
    %v595 = vunpack.c.0.s8 %v594
    %v596 = vlaneseq
    %v597 = vshrl.u32 %v596, 7
    %v598 = vsub.s32 %v595, %v597
    %v599 = vrot.slane %v591, %v598
    %v601 = vunpack.c.l.s4 1934713408
    %v602 = vunpack.c.0.s8 %v601
    %v603 = vlaneseq
    %v604 = vshrl.u32 %v603, 7
    %v605 = vsub.s32 %v602, %v604
    %v606 = vrot.slane %v592, %v605
    %v607 = vcombine.low %v542, %v558
    %v608 = vcombine.high %v542, %v558
    %v610 = vunpack.c.l.s4 1934713408
    %v611 = vunpack.c.0.s8 %v610
    %v612 = vlaneseq
    %v613 = vshrl.u32 %v612, 7
    %v614 = vsub.s32 %v611, %v613
    %v615 = vrot.slane %v607, %v614
    %v617 = vunpack.c.l.s4 1934713408
    %v618 = vunpack.c.0.s8 %v617
    %v619 = vlaneseq
    %v620 = vshrl.u32 %v619, 7
    %v621 = vsub.s32 %v618, %v620
    %v622 = vrot.slane %v608, %v621
    %v623 = vcombine.low %v567, %v583
    %v624 = vcombine.high %v567, %v583
    %v626 = vunpack.c.l.s4 1934713408
    %v627 = vunpack.c.0.s8 %v626
    %v628 = vlaneseq
    %v629 = vshrl.u32 %v628, 7
    %v630 = vsub.s32 %v627, %v629
    %v631 = vrot.slane %v623, %v630
    %v633 = vunpack.c.l.s4 1934713408
    %v634 = vunpack.c.0.s8 %v633
    %v635 = vlaneseq
    %v636 = vshrl.u32 %v635, 7
    %v637 = vsub.s32 %v634, %v636
    %v638 = vrot.slane %v624, %v637
    %v639 = vcombine.low %v574, %v590
    %v640 = vcombine.high %v574, %v590
    %v642 = vunpack.c.l.s4 1934713408
    %v643 = vunpack.c.0.s8 %v642
    %v644 = vlaneseq
    %v645 = vshrl.u32 %v644, 7
    %v646 = vsub.s32 %v643, %v645
    %v647 = vrot.slane %v639, %v646
    %v649 = vunpack.c.l.s4 1934713408
    %v650 = vunpack.c.0.s8 %v649
    %v651 = vlaneseq
    %v652 = vshrl.u32 %v651, 7
    %v653 = vsub.s32 %v650, %v652
    %v654 = vrot.slane %v640, %v653
    %v655 = vcombine.low %v599, %v631
    %v656 = vcombine.high %v599, %v631
    %v657 = vcombine.low %v606, %v638
    %v658 = vcombine.high %v606, %v638
    %v659 = vcombine.low %v615, %v647
    %v660 = vcombine.high %v615, %v647
    %v661 = vcombine.low %v622, %v654
    %v662 = vcombine.high %v622, %v654
    %664 = vrot.lane.b32.xlu0 %v520, 16
    %v665 = vpop.permute.xlu0 %664
    %668 = vrot.lane.b32.xlu0 %v521, 32
    %v669 = vpop.permute.xlu0 %668
    %672 = vrot.lane.b32.xlu0 %v522, 48
    %v673 = vpop.permute.xlu0 %672
    %676 = vrot.lane.b32.xlu0 %v523, 64
    %v677 = vpop.permute.xlu0 %676
    %680 = vrot.lane.b32.xlu0 %v524, 80
    %v681 = vpop.permute.xlu0 %680
    %684 = vrot.lane.b32.xlu0 %v525, 96
    %v685 = vpop.permute.xlu0 %684
    %688 = vrot.lane.b32.xlu0 %v526, 112
    %v689 = vpop.permute.xlu0 %688
    %692 = vrot.lane.b32.xlu0 %v656, 16
    %v693 = vpop.permute.xlu0 %692
    %696 = vrot.lane.b32.xlu0 %v657, 32
    %v697 = vpop.permute.xlu0 %696
    %700 = vrot.lane.b32.xlu0 %v658, 48
    %v701 = vpop.permute.xlu0 %700
    %704 = vrot.lane.b32.xlu0 %v659, 64
    %v705 = vpop.permute.xlu0 %704
    %708 = vrot.lane.b32.xlu0 %v660, 80
    %v709 = vpop.permute.xlu0 %708
    %712 = vrot.lane.b32.xlu0 %v661, 96
    %v713 = vpop.permute.xlu0 %712
    %716 = vrot.lane.b32.xlu0 %v662, 112
    %v717 = vpop.permute.xlu0 %716
    %v719 = vsel %vm52, %v519, %v665
    %v720 = vsel %vm138, %v719, %v669
    %vm721 = vcmask 392192
    %v722 = vsel %vm721, %v720, %v673
    %vm723 = vcmask 523264
    %v724 = vsel %vm723, %v722, %v677
    %vm725 = vcmask 654336
    %v726 = vsel %vm725, %v724, %v681
    %vm727 = vcmask 785408
    %v728 = vsel %vm727, %v726, %v685
    %vm729 = vcmask 916480
    %v730 = vsel %vm729, %v728, %v689
    %v731 = vsel %vm52, %v655, %v693
    %v732 = vsel %vm138, %v731, %v697
    %v733 = vsel %vm721, %v732, %v701
    %v734 = vsel %vm723, %v733, %v705
    %v735 = vsel %vm725, %v734, %v709
    %v736 = vsel %vm727, %v735, %v713
    %v737 = vsel %vm729, %v736, %v717
    %739 = vrot.lane.b32.xlu0 %v300, 16
    %v740 = vpop.permute.xlu0 %739
    %742 = vrot.lane.b32.xlu0 %v300, 32
    %v743 = vpop.permute.xlu0 %742
    %745 = vrot.lane.b32.xlu0 %v300, 48
    %v746 = vpop.permute.xlu0 %745
    %748 = vrot.lane.b32.xlu0 %v300, 64
    %v749 = vpop.permute.xlu0 %748
    %751 = vrot.lane.b32.xlu0 %v300, 80
    %v752 = vpop.permute.xlu0 %751
    %754 = vrot.lane.b32.xlu0 %v300, 96
    %v755 = vpop.permute.xlu0 %754
    %757 = vrot.lane.b32.xlu0 %v300, 112
    %v758 = vpop.permute.xlu0 %757
    %v760 = vsel %vm52, %v300, %v740
    %v761 = vsel %vm138, %v760, %v743
    %v762 = vsel %vm721, %v761, %v746
    %v763 = vsel %vm723, %v762, %v749
    %v764 = vsel %vm725, %v763, %v752
    %v765 = vsel %vm727, %v764, %v755
    %v766 = vsel %vm729, %v765, %v758
    %v767 = vmul.f32 %v730, %v766
    %v768 = vmul.f32 %v737, %v766
    %v769 = vld [vmem:[%s7] sm:$0xff]
    %v770 = vld [vmem:[%s7 + $0x8] sm:$0xff]
    %v771 = vld [vmem:[%s7 + $0x10] sm:$0xff]
    %v772 = vld [vmem:[%s7 + $0x18] sm:$0xff]
    %v773 = vld [vmem:[%s7 + $0x20] sm:$0xff]
    %v774 = vld [vmem:[%s7 + $0x28] sm:$0xff]
    %v775 = vld [vmem:[%s7 + $0x30] sm:$0xff]
    %v776 = vld [vmem:[%s7 + $0x38] sm:$0xff]
    %v777 = vld [vmem:[%s7 + $0x40] sm:$0xff]
    %v778 = vld [vmem:[%s7 + $0x48] sm:$0xff]
    %v779 = vld [vmem:[%s7 + $0x50] sm:$0xff]
    %v780 = vld [vmem:[%s7 + $0x58] sm:$0xff]
    %v781 = vld [vmem:[%s7 + $0x60] sm:$0xff]
    %v782 = vld [vmem:[%s7 + $0x68] sm:$0xff]
    %v783 = vld [vmem:[%s7 + $0x70] sm:$0xff]
    %v784 = vld [vmem:[%s7 + $0x78] sm:$0xff]
    %v785 = vld [vmem:[%s7 + $0x80] sm:$0xff]
    %v786 = vld [vmem:[%s7 + $0x88] sm:$0xff]
    %v787 = vld [vmem:[%s7 + $0x90] sm:$0xff]
    %v788 = vld [vmem:[%s7 + $0x98] sm:$0xff]
    %v789 = vld [vmem:[%s7 + $0xa0] sm:$0xff]
    %v790 = vld [vmem:[%s7 + $0xa8] sm:$0xff]
    %v791 = vld [vmem:[%s7 + $0xb0] sm:$0xff]
    %v792 = vld [vmem:[%s7 + $0xb8] sm:$0xff]
    %v793 = vld [vmem:[%s7 + $0xc0] sm:$0xff]
    %v794 = vld [vmem:[%s7 + $0xc8] sm:$0xff]
    %v795 = vld [vmem:[%s7 + $0xd0] sm:$0xff]
    %v796 = vld [vmem:[%s7 + $0xd8] sm:$0xff]
    %v797 = vld [vmem:[%s7 + $0xe0] sm:$0xff]
    %v798 = vld [vmem:[%s7 + $0xe8] sm:$0xff]
    %v799 = vld [vmem:[%s7 + $0xf0] sm:$0xff]
    %v800 = vld [vmem:[%s7 + $0xf8] sm:$0xff]
    %801 = vmatprep.subr.mxu0 0.0
    %802 = vmatpush1.msra.mxu0 %v784
    %803 = vmatprep.subr.mxu0 0.0
    %804 = vmatpush1.msra.mxu0 %v783
    %805 = vmatprep.subr.mxu0 0.0
    %806 = vmatpush1.msra.mxu0 %v782
    %807 = vmatprep.subr.mxu0 0.0
    %808 = vmatpush1.msra.mxu0 %v781
    %809 = vmatprep.subr.mxu0 0.0
    %810 = vmatpush1.msra.mxu0 %v780
    %811 = vmatprep.subr.mxu0 0.0
    %812 = vmatpush1.msra.mxu0 %v779
    %813 = vmatprep.subr.mxu0 0.0
    %814 = vmatpush1.msra.mxu0 %v778
    %815 = vmatprep.subr.mxu0 0.0
    %816 = vmatpush1.msra.mxu0 %v777
    %817 = vmatprep.subr.mxu0 0.0
    %818 = vmatpush1.msra.mxu0 %v776
    %819 = vmatprep.subr.mxu0 0.0
    %820 = vmatpush1.msra.mxu0 %v775
    %821 = vmatprep.subr.mxu0 0.0
    %822 = vmatpush1.msra.mxu0 %v774
    %823 = vmatprep.subr.mxu0 0.0
    %824 = vmatpush1.msra.mxu0 %v773
    %825 = vmatprep.subr.mxu0 0.0
    %826 = vmatpush1.msra.mxu0 %v772
    %827 = vmatprep.subr.mxu0 0.0
    %828 = vmatpush1.msra.mxu0 %v771
    %829 = vmatprep.subr.mxu0 0.0
    %830 = vmatpush1.msra.mxu0 %v770
    %831 = vmatprep.subr.mxu0 0.0
    %832 = vmatpush1.msra.mxu0 %v769
    %833 = vmatprep.subr.mxu0 0.0
    %834 = vmatpush2.msra.mxu0 %v800
    %835 = vmatprep.subr.mxu0 0.0
    %836 = vmatpush2.msra.mxu0 %v799
    %837 = vmatprep.subr.mxu0 0.0
    %838 = vmatpush2.msra.mxu0 %v798
    %839 = vmatprep.subr.mxu0 0.0
    %840 = vmatpush2.msra.mxu0 %v797
    %841 = vmatprep.subr.mxu0 0.0
    %842 = vmatpush2.msra.mxu0 %v796
    %843 = vmatprep.subr.mxu0 0.0
    %844 = vmatpush2.msra.mxu0 %v795
    %845 = vmatprep.subr.mxu0 0.0
    %846 = vmatpush2.msra.mxu0 %v794
    %847 = vmatprep.subr.mxu0 0.0
    %848 = vmatpush2.msra.mxu0 %v793
    %849 = vmatprep.subr.mxu0 0.0
    %850 = vmatpush2.msra.mxu0 %v792
    %851 = vmatprep.subr.mxu0 0.0
    %852 = vmatpush2.msra.mxu0 %v791
    %853 = vmatprep.subr.mxu0 0.0
    %854 = vmatpush2.msra.mxu0 %v790
    %855 = vmatprep.subr.mxu0 0.0
    %856 = vmatpush2.msra.mxu0 %v789
    %857 = vmatprep.subr.mxu0 0.0
    %858 = vmatpush2.msra.mxu0 %v788
    %859 = vmatprep.subr.mxu0 0.0
    %860 = vmatpush2.msra.mxu0 %v787
    %861 = vmatprep.subr.mxu0 0.0
    %862 = vmatpush2.msra.mxu0 %v786
    %863 = vmatprep.subr.mxu0 0.0
    %864 = vmatpush2.msra.mxu0 %v785
    %865 = vmatprep.mubr.f32.mxu0 %v768
    %866 = vmatmul.mubr.f32.gmra.mxu0 %v767
    %v867 = vpop.f32.mrf.mxu0
    %v868 = vadd.f32 0.0, %v867
    %v869 = vpop.f32.mrf.mxu0
    %870 = vdwg.mxu0
    %v871 = vld [vmem:[%s8] sm:$0xff]
    %v872 = vld [vmem:[%s8 + $0x8] sm:$0xff]
    %v874 = vsel %vm52, %v868, 0
    %876 = vmatprep.subr.mxu0 0.0
    %877 = vmatpush1.msra.mxu0 0.0
    %878 = vmatprep.subr.mxu0 0.0
    %879 = vmatpush1.msra.mxu0 0.0
    %880 = vmatprep.subr.mxu0 0.0
    %881 = vmatpush1.msra.mxu0 0.0
    %882 = vmatprep.subr.mxu0 0.0
    %883 = vmatpush1.msra.mxu0 0.0
    %884 = vmatprep.subr.mxu0 0.0
    %885 = vmatpush1.msra.mxu0 0.0
    %886 = vmatprep.subr.mxu0 0.0
    %887 = vmatpush1.msra.mxu0 0.0
    %888 = vmatprep.subr.mxu0 0.0
    %889 = vmatpush1.msra.mxu0 0.0
    %890 = vmatprep.subr.mxu0 0.0
    %891 = vmatpush1.msra.mxu0 0.0
    %892 = vmatprep.subr.mxu0 0.0
    %893 = vmatpush1.msra.mxu0 0.0
    %894 = vmatprep.subr.mxu0 0.0
    %895 = vmatpush1.msra.mxu0 0.0
    %896 = vmatprep.subr.mxu0 0.0
    %897 = vmatpush1.msra.mxu0 0.0
    %898 = vmatprep.subr.mxu0 0.0
    %899 = vmatpush1.msra.mxu0 0.0
    %900 = vmatprep.subr.mxu0 0.0
    %901 = vmatpush1.msra.mxu0 0.0
    %902 = vmatprep.subr.mxu0 0.0
    %903 = vmatpush1.msra.mxu0 0.0
    %904 = vmatprep.subr.mxu0 0.0
    %905 = vmatpush1.msra.mxu0 %v872
    %906 = vmatprep.subr.mxu0 0.0
    %907 = vmatpush1.msra.mxu0 %v871
    %908 = vmatprep.subr.mxu0 0.0
    %909 = vmatpush2.msra.mxu0 0.0
    %910 = vmatprep.subr.mxu0 0.0
    %911 = vmatpush2.msra.mxu0 0.0
    %912 = vmatprep.subr.mxu0 0.0
    %913 = vmatpush2.msra.mxu0 0.0
    %914 = vmatprep.subr.mxu0 0.0
    %915 = vmatpush2.msra.mxu0 0.0
    %916 = vmatprep.subr.mxu0 0.0
    %917 = vmatpush2.msra.mxu0 0.0
    %918 = vmatprep.subr.mxu0 0.0
    %919 = vmatpush2.msra.mxu0 0.0
    %920 = vmatprep.subr.mxu0 0.0
    %921 = vmatpush2.msra.mxu0 0.0
    %922 = vmatprep.subr.mxu0 0.0
    %923 = vmatpush2.msra.mxu0 0.0
    %924 = vmatprep.subr.mxu0 0.0
    %925 = vmatpush2.msra.mxu0 0.0
    %926 = vmatprep.subr.mxu0 0.0
    %927 = vmatpush2.msra.mxu0 0.0
    %928 = vmatprep.subr.mxu0 0.0
    %929 = vmatpush2.msra.mxu0 0.0
    %930 = vmatprep.subr.mxu0 0.0
    %931 = vmatpush2.msra.mxu0 0.0
    %932 = vmatprep.subr.mxu0 0.0
    %933 = vmatpush2.msra.mxu0 0.0
    %934 = vmatprep.subr.mxu0 0.0
    %935 = vmatpush2.msra.mxu0 0.0
    %936 = vmatprep.subr.mxu0 0.0
    %937 = vmatpush2.msra.mxu0 0.0
    %938 = vmatprep.subr.mxu0 0.0
    %939 = vmatpush2.msra.mxu0 0.0
    %940 = vmatprep.mubr.f32.mxu0 0.0
    %941 = vmatmul.mubr.f32.gmra.mxu0 %v874
    %v942 = vpop.f32.mrf.mxu0
    %v943 = vadd.f32 0.0, %v942
    %v944 = vpop.f32.mrf.mxu0
    %945 = vdwg.mxu0
    %947 = vrot.lane.b32.xlu0 %v214, 32
    %v948 = vpop.permute.xlu0 %947
    %950 = vrot.lane.b32.xlu0 %v214, 64
    %v951 = vpop.permute.xlu0 %950
    %953 = vrot.lane.b32.xlu0 %v214, 96
    %v954 = vpop.permute.xlu0 %953
    %v956 = vsel %vm138, %v214, %v948
    %v957 = vsel %vm723, %v956, %v951
    %v958 = vsel %vm727, %v957, %v954
    %v959 = vld [vmem:[%s9] sm:$0x1]
    %v961 = vlaneseq
    %v962 = vshrl.u32 %v961, 7
    %v963 = vsub.s32 0, %v962
    %v964 = vrot.slane %v959, %v963
    %v966 = vmul.f32 %v958, %v964
    %v967 = vmul.f32 %v216, %v943
    %v968 = vld [vmem:[%s10] sm:$0xff]
    %v969 = vld [vmem:[%s10 + $0x8] sm:$0xff]
    %v970 = vld [vmem:[%s10 + $0x10] sm:$0xff]
    %v971 = vld [vmem:[%s10 + $0x18] sm:$0xff]
    %v972 = vld [vmem:[%s10 + $0x20] sm:$0xff]
    %v973 = vld [vmem:[%s10 + $0x28] sm:$0xff]
    %v974 = vld [vmem:[%s10 + $0x30] sm:$0xff]
    %v975 = vld [vmem:[%s10 + $0x38] sm:$0xff]
    %v976 = vld [vmem:[%s10 + $0x40] sm:$0xff]
    %v977 = vld [vmem:[%s10 + $0x48] sm:$0xff]
    %v978 = vld [vmem:[%s10 + $0x50] sm:$0xff]
    %v979 = vld [vmem:[%s10 + $0x58] sm:$0xff]
    %v980 = vld [vmem:[%s10 + $0x60] sm:$0xff]
    %v981 = vld [vmem:[%s10 + $0x68] sm:$0xff]
    %v982 = vld [vmem:[%s10 + $0x70] sm:$0xff]
    %v983 = vld [vmem:[%s10 + $0x78] sm:$0xff]
    %v984 = vld [vmem:[%s10 + $0x80] sm:$0xff]
    %v985 = vld [vmem:[%s10 + $0x88] sm:$0xff]
    %v986 = vld [vmem:[%s10 + $0x90] sm:$0xff]
    %v987 = vld [vmem:[%s10 + $0x98] sm:$0xff]
    %v989 = vsel %vm138, %v967, 0
    %991 = vmatprep.subr.mxu0 0.0
    %992 = vmatpush1.msra.mxu0 %v983
    %993 = vmatprep.subr.mxu0 0.0
    %994 = vmatpush1.msra.mxu0 %v982
    %995 = vmatprep.subr.mxu0 0.0
    %996 = vmatpush1.msra.mxu0 %v981
    %997 = vmatprep.subr.mxu0 0.0
    %998 = vmatpush1.msra.mxu0 %v980
    %999 = vmatprep.subr.mxu0 0.0
    %1000 = vmatpush1.msra.mxu0 %v979
    %1001 = vmatprep.subr.mxu0 0.0
    %1002 = vmatpush1.msra.mxu0 %v978
    %1003 = vmatprep.subr.mxu0 0.0
    %1004 = vmatpush1.msra.mxu0 %v977
    %1005 = vmatprep.subr.mxu0 0.0
    %1006 = vmatpush1.msra.mxu0 %v976
    %1007 = vmatprep.subr.mxu0 0.0
    %1008 = vmatpush1.msra.mxu0 %v975
    %1009 = vmatprep.subr.mxu0 0.0
    %1010 = vmatpush1.msra.mxu0 %v974
    %1011 = vmatprep.subr.mxu0 0.0
    %1012 = vmatpush1.msra.mxu0 %v973
    %1013 = vmatprep.subr.mxu0 0.0
    %1014 = vmatpush1.msra.mxu0 %v972
    %1015 = vmatprep.subr.mxu0 0.0
    %1016 = vmatpush1.msra.mxu0 %v971
    %1017 = vmatprep.subr.mxu0 0.0
    %1018 = vmatpush1.msra.mxu0 %v970
    %1019 = vmatprep.subr.mxu0 0.0
    %1020 = vmatpush1.msra.mxu0 %v969
    %1021 = vmatprep.subr.mxu0 0.0
    %1022 = vmatpush1.msra.mxu0 %v968
    %1023 = vmatprep.subr.mxu0 0.0
    %1024 = vmatpush2.msra.mxu0 0.0
    %1025 = vmatprep.subr.mxu0 0.0
    %1026 = vmatpush2.msra.mxu0 0.0
    %1027 = vmatprep.subr.mxu0 0.0
    %1028 = vmatpush2.msra.mxu0 0.0
    %1029 = vmatprep.subr.mxu0 0.0
    %1030 = vmatpush2.msra.mxu0 0.0
    %1031 = vmatprep.subr.mxu0 0.0
    %1032 = vmatpush2.msra.mxu0 0.0
    %1033 = vmatprep.subr.mxu0 0.0
    %1034 = vmatpush2.msra.mxu0 0.0
    %1035 = vmatprep.subr.mxu0 0.0
    %1036 = vmatpush2.msra.mxu0 0.0
    %1037 = vmatprep.subr.mxu0 0.0
    %1038 = vmatpush2.msra.mxu0 0.0
    %1039 = vmatprep.subr.mxu0 0.0
    %1040 = vmatpush2.msra.mxu0 0.0
    %1041 = vmatprep.subr.mxu0 0.0
    %1042 = vmatpush2.msra.mxu0 0.0
    %1043 = vmatprep.subr.mxu0 0.0
    %1044 = vmatpush2.msra.mxu0 0.0
    %1045 = vmatprep.subr.mxu0 0.0
    %1046 = vmatpush2.msra.mxu0 0.0
    %1047 = vmatprep.subr.mxu0 0.0
    %1048 = vmatpush2.msra.mxu0 %v987
    %1049 = vmatprep.subr.mxu0 0.0
    %1050 = vmatpush2.msra.mxu0 %v986
    %1051 = vmatprep.subr.mxu0 0.0
    %1052 = vmatpush2.msra.mxu0 %v985
    %1053 = vmatprep.subr.mxu0 0.0
    %1054 = vmatpush2.msra.mxu0 %v984
    %1055 = vmatprep.mubr.f32.mxu0 %v989
    %1056 = vmatmul.mubr.f32.gmra.mxu0 %v966
    %v1057 = vpop.f32.mrf.mxu0
    %v1058 = vadd.f32 0.0, %v1057
    %v1059 = vpop.f32.mrf.mxu0
    %1060 = vdwg.mxu0
    %v1061 = vmul.f32 %v1058, %v1058
    %v1062 = vsel %vm52, %v1061, 0.0
    %1063 = vadd.xlane.f32.xlu0 %v1062
    %v1064 = vpop.xlane.xlu0 %1063
    %1066 = vrot.lane.b32.xlu0 %v1058, 112
    %v1067 = vpop.permute.xlu0 %1066
    %v1069 = vmul.f32 %v1058, %v1067
    %v1070 = vsel %vm52, %v1069, 0.0
    %1071 = vadd.xlane.f32.xlu0 %v1070
    %v1072 = vpop.xlane.xlu0 %1071
    %1073 = vrot.lane.b32.xlu0 %v1058, 96
    %v1074 = vpop.permute.xlu0 %1073
    %v1076 = vmul.f32 %v1058, %v1074
    %v1077 = vsel %vm52, %v1076, 0.0
    %1078 = vadd.xlane.f32.xlu0 %v1077
    %v1079 = vpop.xlane.xlu0 %1078
    %1080 = vrot.lane.b32.xlu0 %v1058, 80
    %v1081 = vpop.permute.xlu0 %1080
    %v1083 = vmul.f32 %v1058, %v1081
    %v1084 = vsel %vm52, %v1083, 0.0
    %1085 = vadd.xlane.f32.xlu0 %v1084
    %v1086 = vpop.xlane.xlu0 %1085
    %1088 = vrot.lane.b32.xlu0 %v1061, 112
    %v1089 = vpop.permute.xlu0 %1088
    %v1091 = vsel %vm52, %v1089, 0.0
    %1092 = vadd.xlane.f32.xlu0 %v1091
    %v1093 = vpop.xlane.xlu0 %1092
    %1095 = vrot.lane.b32.xlu0 %v1069, 112
    %v1096 = vpop.permute.xlu0 %1095
    %v1098 = vsel %vm52, %v1096, 0.0
    %1099 = vadd.xlane.f32.xlu0 %v1098
    %v1100 = vpop.xlane.xlu0 %1099
    %1102 = vrot.lane.b32.xlu0 %v1076, 112
    %v1103 = vpop.permute.xlu0 %1102
    %v1105 = vsel %vm52, %v1103, 0.0
    %1106 = vadd.xlane.f32.xlu0 %v1105
    %v1107 = vpop.xlane.xlu0 %1106
    %1108 = vrot.lane.b32.xlu0 %v1061, 96
    %v1109 = vpop.permute.xlu0 %1108
    %v1111 = vsel %vm52, %v1109, 0.0
    %1112 = vadd.xlane.f32.xlu0 %v1111
    %v1113 = vpop.xlane.xlu0 %1112
    %1114 = vrot.lane.b32.xlu0 %v1069, 96
    %v1115 = vpop.permute.xlu0 %1114
    %v1117 = vsel %vm52, %v1115, 0.0
    %1118 = vadd.xlane.f32.xlu0 %v1117
    %v1119 = vpop.xlane.xlu0 %1118
    %1120 = vrot.lane.b32.xlu0 %v1061, 80
    %v1121 = vpop.permute.xlu0 %1120
    %v1123 = vsel %vm52, %v1121, 0.0
    %1124 = vadd.xlane.f32.xlu0 %v1123
    %v1125 = vpop.xlane.xlu0 %1124
    %v1126 = vmul.f32 %v1064, %v1093
    %v1127 = vmul.f32 %v1072, %v1072
    %v1128 = vsub.f32 %v1126, %v1127
    %v1129 = vmul.f32 %v1064, %v1100
    %v1130 = vmul.f32 %v1072, %v1079
    %v1131 = vsub.f32 %v1129, %v1130
    %v1132 = vmul.f32 %v1064, %v1107
    %v1133 = vmul.f32 %v1072, %v1086
    %v1134 = vsub.f32 %v1132, %v1133
    %v1135 = vmul.f32 %v1072, %v1100
    %v1136 = vmul.f32 %v1093, %v1079
    %v1137 = vsub.f32 %v1135, %v1136
    %v1138 = vmul.f32 %v1072, %v1107
    %v1139 = vmul.f32 %v1093, %v1086
    %v1140 = vsub.f32 %v1138, %v1139
    %v1141 = vmul.f32 %v1079, %v1107
    %v1142 = vmul.f32 %v1100, %v1086
    %v1143 = vsub.f32 %v1141, %v1142
    %v1144 = vmul.f32 %v1113, %v1125
    %v1145 = vmul.f32 %v1119, %v1119
    %v1146 = vsub.f32 %v1144, %v1145
    %v1147 = vmul.f32 %v1100, %v1125
    %v1148 = vmul.f32 %v1107, %v1119
    %v1149 = vsub.f32 %v1147, %v1148
    %v1150 = vmul.f32 %v1100, %v1119
    %v1151 = vmul.f32 %v1107, %v1113
    %v1152 = vsub.f32 %v1150, %v1151
    %v1153 = vmul.f32 %v1079, %v1125
    %v1154 = vmul.f32 %v1086, %v1119
    %v1155 = vsub.f32 %v1153, %v1154
    %v1156 = vmul.f32 %v1079, %v1119
    %v1157 = vmul.f32 %v1086, %v1113
    %v1158 = vsub.f32 %v1156, %v1157
    %v1159 = vmul.f32 %v1128, %v1146
    %v1160 = vmul.f32 %v1131, %v1149
    %v1161 = vsub.f32 %v1159, %v1160
    %v1162 = vmul.f32 %v1134, %v1152
    %v1163 = vadd.f32 %v1161, %v1162
    %v1164 = vmul.f32 %v1137, %v1155
    %v1165 = vadd.f32 %v1163, %v1164
    %v1166 = vmul.f32 %v1140, %v1158
    %v1167 = vsub.f32 %v1165, %v1166
    %v1168 = vmul.f32 %v1143, %v1143
    %v1169 = vadd.f32 %v1167, %v1168
    %v1170 = vrcp.pop %v1169
    %v1171 = vmul.f32 1.0, %v1170
    %v1172 = vmul.f32 %v1093, %v1146
    %v1173 = vmul.f32 %v1100, %v1149
    %v1174 = vsub.f32 %v1172, %v1173
    %v1175 = vmul.f32 %v1107, %v1152
    %v1176 = vadd.f32 %v1174, %v1175
    %v1177 = vmul.f32 %v1176, %v1171
    %v1178 = vsub.f32 0.0, %v1072
    %v1179 = vmul.f32 %v1178, %v1146
    %v1180 = vmul.f32 %v1079, %v1149
    %v1181 = vadd.f32 %v1179, %v1180
    %v1182 = vmul.f32 %v1086, %v1152
    %v1183 = vsub.f32 %v1181, %v1182
    %v1184 = vmul.f32 %v1183, %v1171
    %v1185 = vmul.f32 %v1107, %v1143
    %v1186 = vmul.f32 %v1119, %v1140
    %v1187 = vsub.f32 %v1185, %v1186
    %v1188 = vmul.f32 %v1125, %v1137
    %v1189 = vadd.f32 %v1187, %v1188
    %v1190 = vmul.f32 %v1189, %v1171
    %v1191 = vsub.f32 0.0, %v1100
    %v1192 = vmul.f32 %v1191, %v1143
    %v1193 = vmul.f32 %v1113, %v1140
    %v1194 = vadd.f32 %v1192, %v1193
    %v1195 = vmul.f32 %v1119, %v1137
    %v1196 = vsub.f32 %v1194, %v1195
    %v1197 = vmul.f32 %v1196, %v1171
    %v1198 = vmul.f32 %v1100, %v1155
    %v1199 = vadd.f32 %v1179, %v1198
    %v1200 = vmul.f32 %v1107, %v1158
    %v1201 = vsub.f32 %v1199, %v1200
    %v1202 = vmul.f32 %v1201, %v1171
    %v1203 = vmul.f32 %v1064, %v1146
    %v1204 = vmul.f32 %v1079, %v1155
    %v1205 = vsub.f32 %v1203, %v1204
    %v1206 = vmul.f32 %v1086, %v1158
    %v1207 = vadd.f32 %v1205, %v1206
    %v1208 = vmul.f32 %v1207, %v1171
    %v1209 = vsub.f32 0.0, %v1086
    %v1210 = vmul.f32 %v1209, %v1143
    %v1211 = vmul.f32 %v1119, %v1134
    %v1212 = vadd.f32 %v1210, %v1211
    %v1213 = vmul.f32 %v1125, %v1131
    %v1214 = vsub.f32 %v1212, %v1213
    %v1215 = vmul.f32 %v1214, %v1171
    %v1216 = vmul.f32 %v1079, %v1143
    %v1217 = vmul.f32 %v1113, %v1134
    %v1218 = vsub.f32 %v1216, %v1217
    %v1219 = vmul.f32 %v1119, %v1131
    %v1220 = vadd.f32 %v1218, %v1219
    %v1221 = vmul.f32 %v1220, %v1171
    %v1222 = vmul.f32 %v1072, %v1149
    %v1223 = vmul.f32 %v1093, %v1155
    %v1224 = vsub.f32 %v1222, %v1223
    %v1225 = vadd.f32 %v1224, %v1185
    %v1226 = vmul.f32 %v1225, %v1171
    %v1227 = vsub.f32 0.0, %v1064
    %v1228 = vmul.f32 %v1227, %v1149
    %v1229 = vmul.f32 %v1072, %v1155
    %v1230 = vadd.f32 %v1228, %v1229
    %v1231 = vmul.f32 %v1086, %v1143
    %v1232 = vsub.f32 %v1230, %v1231
    %v1233 = vmul.f32 %v1232, %v1171
    %v1234 = vmul.f32 %v1086, %v1140
    %v1235 = vmul.f32 %v1107, %v1134
    %v1236 = vsub.f32 %v1234, %v1235
    %v1237 = vmul.f32 %v1125, %v1128
    %v1238 = vadd.f32 %v1236, %v1237
    %v1239 = vmul.f32 %v1238, %v1171
    %v1240 = vsub.f32 0.0, %v1079
    %v1241 = vmul.f32 %v1240, %v1140
    %v1242 = vmul.f32 %v1100, %v1134
    %v1243 = vadd.f32 %v1241, %v1242
    %v1244 = vmul.f32 %v1119, %v1128
    %v1245 = vsub.f32 %v1243, %v1244
    %v1246 = vmul.f32 %v1245, %v1171
    %v1247 = vmul.f32 %v1178, %v1152
    %v1248 = vmul.f32 %v1093, %v1158
    %v1249 = vadd.f32 %v1247, %v1248
    %v1250 = vmul.f32 %v1100, %v1143
    %v1251 = vsub.f32 %v1249, %v1250
    %v1252 = vmul.f32 %v1251, %v1171
    %v1253 = vmul.f32 %v1064, %v1152
    %v1254 = vmul.f32 %v1072, %v1158
    %v1255 = vsub.f32 %v1253, %v1254
    %v1256 = vadd.f32 %v1255, %v1216
    %v1257 = vmul.f32 %v1256, %v1171
    %v1258 = vmul.f32 %v1209, %v1137
    %v1259 = vmul.f32 %v1107, %v1131
    %v1260 = vadd.f32 %v1258, %v1259
    %v1261 = vsub.f32 %v1260, %v1244
    %v1262 = vmul.f32 %v1261, %v1171
    %v1263 = vmul.f32 %v1079, %v1137
    %v1264 = vmul.f32 %v1100, %v1131
    %v1265 = vsub.f32 %v1263, %v1264
    %v1266 = vmul.f32 %v1113, %v1128
    %v1267 = vadd.f32 %v1265, %v1266
    %v1268 = vmul.f32 %v1267, %v1171
    %1269 = vset.pattern.permute.xlu0 0
    %1270 = vperm.xlu0 %1269, %v868
    %v1271 = vpop.permute.xlu0 %1270
    %v1273 = vmul.f32 %v1271, %v1058
    %v1274 = vmul.f32 %v1177, %v1058
    %1275 = vset.pattern.permute.xlu0 1
    %1276 = vperm.xlu0 %1275, %v868
    %v1277 = vpop.permute.xlu0 %1276
    %v1279 = vmul.f32 %v1277, %v1058
    %1281 = vrot.lane.b32.xlu0 %v1279, 112
    %v1282 = vpop.permute.xlu0 %1281
    %v1284 = vadd.f32 %v1273, %v1282
    %v1285 = vmul.f32 %v1184, %v1058
    %1287 = vrot.lane.b32.xlu0 %v1285, 112
    %v1288 = vpop.permute.xlu0 %1287
    %v1290 = vadd.f32 %v1274, %v1288
    %1291 = vset.pattern.permute.xlu0 2
    %1292 = vperm.xlu0 %1291, %v868
    %v1293 = vpop.permute.xlu0 %1292
    %v1295 = vmul.f32 %v1293, %v1058
    %1297 = vrot.lane.b32.xlu0 %v1295, 96
    %v1298 = vpop.permute.xlu0 %1297
    %v1300 = vadd.f32 %v1284, %v1298
    %v1301 = vmul.f32 %v1190, %v1058
    %1303 = vrot.lane.b32.xlu0 %v1301, 96
    %v1304 = vpop.permute.xlu0 %1303
    %v1306 = vadd.f32 %v1290, %v1304
    %1307 = vset.pattern.permute.xlu0 3
    %1308 = vperm.xlu0 %1307, %v868
    %v1309 = vpop.permute.xlu0 %1308
    %v1311 = vmul.f32 %v1309, %v1058
    %1313 = vrot.lane.b32.xlu0 %v1311, 80
    %v1314 = vpop.permute.xlu0 %1313
    %v1316 = vadd.f32 %v1300, %v1314
    %v1317 = vmul.f32 %v1197, %v1058
    %1319 = vrot.lane.b32.xlu0 %v1317, 80
    %v1320 = vpop.permute.xlu0 %1319
    %v1322 = vadd.f32 %v1306, %v1320
    %v1323 = vlaneseq
    %v1324 = vshrl.u32 %v1323, 7
    %v1325 = vsub.s32 0, %v1324
    %v1326 = vrot.slane %v1058, %v1325
    %1328 = vbcast.lane.b32.xlu0 %v1326, 256
    %v1329 = vpop.permute.xlu0 %1328
    %s1331 = sor.u32 256, 8
    %1332 = vbcast.lane.b32.xlu0 %v1326, %s1331
    %v1333 = vpop.permute.xlu0 %1332
    %v1334 = vlaneseq
    %v1335 = vshrl.u32 %v1334, 7
    %v1336 = vsub.s32 1, %v1335
    %v1337 = vrot.slane %v1058, %v1336
    %1339 = vbcast.lane.b32.xlu0 %v1337, 256
    %v1340 = vpop.permute.xlu0 %1339
    %s1342 = sor.u32 256, 8
    %1343 = vbcast.lane.b32.xlu0 %v1337, %s1342
    %v1344 = vpop.permute.xlu0 %1343
    %v1345 = vlaneseq
    %v1346 = vshrl.u32 %v1345, 7
    %v1347 = vsub.s32 2, %v1346
    %v1348 = vrot.slane %v1058, %v1347
    %1350 = vbcast.lane.b32.xlu0 %v1348, 256
    %v1351 = vpop.permute.xlu0 %1350
    %s1353 = sor.u32 256, 8
    %1354 = vbcast.lane.b32.xlu0 %v1348, %s1353
    %v1355 = vpop.permute.xlu0 %1354
    %v1356 = vlaneseq
    %v1357 = vshrl.u32 %v1356, 7
    %v1358 = vsub.s32 3, %v1357
    %v1359 = vrot.slane %v1058, %v1358
    %1361 = vbcast.lane.b32.xlu0 %v1359, 256
    %v1362 = vpop.permute.xlu0 %1361
    %s1364 = sor.u32 256, 8
    %1365 = vbcast.lane.b32.xlu0 %v1359, %s1364
    %v1366 = vpop.permute.xlu0 %1365
    %v1367 = vlaneseq
    %v1368 = vshrl.u32 %v1367, 7
    %v1369 = vsub.s32 4, %v1368
    %v1370 = vrot.slane %v1058, %v1369
    %1372 = vbcast.lane.b32.xlu0 %v1370, 256
    %v1373 = vpop.permute.xlu0 %1372
    %s1375 = sor.u32 256, 8
    %1376 = vbcast.lane.b32.xlu0 %v1370, %s1375
    %v1377 = vpop.permute.xlu0 %1376
    %v1378 = vlaneseq
    %v1379 = vshrl.u32 %v1378, 7
    %v1380 = vsub.s32 5, %v1379
    %v1381 = vrot.slane %v1058, %v1380
    %1383 = vbcast.lane.b32.xlu0 %v1381, 256
    %v1384 = vpop.permute.xlu0 %1383
    %s1386 = sor.u32 256, 8
    %1387 = vbcast.lane.b32.xlu0 %v1381, %s1386
    %v1388 = vpop.permute.xlu0 %1387
    %v1389 = vlaneseq
    %v1390 = vshrl.u32 %v1389, 7
    %v1391 = vsub.s32 6, %v1390
    %v1392 = vrot.slane %v1058, %v1391
    %1394 = vbcast.lane.b32.xlu0 %v1392, 256
    %v1395 = vpop.permute.xlu0 %1394
    %s1397 = sor.u32 256, 8
    %1398 = vbcast.lane.b32.xlu0 %v1392, %s1397
    %v1399 = vpop.permute.xlu0 %1398
    %v1400 = vlaneseq
    %v1401 = vshrl.u32 %v1400, 7
    %v1402 = vsub.s32 7, %v1401
    %v1403 = vrot.slane %v1058, %v1402
    %1405 = vbcast.lane.b32.xlu0 %v1403, 256
    %v1406 = vpop.permute.xlu0 %1405
    %s1408 = sor.u32 256, 8
    %1409 = vbcast.lane.b32.xlu0 %v1403, %s1408
    %v1410 = vpop.permute.xlu0 %1409
    %v1411 = vcombine.low %v1329, %v1351
    %v1412 = vcombine.high %v1329, %v1351
    %v1414 = vunpack.c.l.s4 1983009808
    %v1415 = vunpack.c.0.s8 %v1414
    %v1416 = vlaneseq
    %v1417 = vshrl.u32 %v1416, 7
    %v1418 = vsub.s32 %v1415, %v1417
    %v1419 = vrot.slane %v1411, %v1418
    %v1421 = vunpack.c.l.s4 1983009808
    %v1422 = vunpack.c.0.s8 %v1421
    %v1423 = vlaneseq
    %v1424 = vshrl.u32 %v1423, 7
    %v1425 = vsub.s32 %v1422, %v1424
    %v1426 = vrot.slane %v1412, %v1425
    %v1427 = vcombine.low %v1340, %v1362
    %v1428 = vcombine.high %v1340, %v1362
    %v1430 = vunpack.c.l.s4 1983009808
    %v1431 = vunpack.c.0.s8 %v1430
    %v1432 = vlaneseq
    %v1433 = vshrl.u32 %v1432, 7
    %v1434 = vsub.s32 %v1431, %v1433
    %v1435 = vrot.slane %v1427, %v1434
    %v1437 = vunpack.c.l.s4 1983009808
    %v1438 = vunpack.c.0.s8 %v1437
    %v1439 = vlaneseq
    %v1440 = vshrl.u32 %v1439, 7
    %v1441 = vsub.s32 %v1438, %v1440
    %v1442 = vrot.slane %v1428, %v1441
    %v1443 = vcombine.low %v1373, %v1395
    %v1444 = vcombine.high %v1373, %v1395
    %v1446 = vunpack.c.l.s4 1983009808
    %v1447 = vunpack.c.0.s8 %v1446
    %v1448 = vlaneseq
    %v1449 = vshrl.u32 %v1448, 7
    %v1450 = vsub.s32 %v1447, %v1449
    %v1451 = vrot.slane %v1443, %v1450
    %v1453 = vunpack.c.l.s4 1983009808
    %v1454 = vunpack.c.0.s8 %v1453
    %v1455 = vlaneseq
    %v1456 = vshrl.u32 %v1455, 7
    %v1457 = vsub.s32 %v1454, %v1456
    %v1458 = vrot.slane %v1444, %v1457
    %v1459 = vcombine.low %v1384, %v1406
    %v1460 = vcombine.high %v1384, %v1406
    %v1462 = vunpack.c.l.s4 1983009808
    %v1463 = vunpack.c.0.s8 %v1462
    %v1464 = vlaneseq
    %v1465 = vshrl.u32 %v1464, 7
    %v1466 = vsub.s32 %v1463, %v1465
    %v1467 = vrot.slane %v1459, %v1466
    %v1469 = vunpack.c.l.s4 1983009808
    %v1470 = vunpack.c.0.s8 %v1469
    %v1471 = vlaneseq
    %v1472 = vshrl.u32 %v1471, 7
    %v1473 = vsub.s32 %v1470, %v1472
    %v1474 = vrot.slane %v1460, %v1473
    %v1475 = vcombine.low %v1419, %v1435
    %v1476 = vcombine.high %v1419, %v1435
    %v1478 = vunpack.c.l.s4 1934713408
    %v1479 = vunpack.c.0.s8 %v1478
    %v1480 = vlaneseq
    %v1481 = vshrl.u32 %v1480, 7
    %v1482 = vsub.s32 %v1479, %v1481
    %v1483 = vrot.slane %v1475, %v1482
    %v1485 = vunpack.c.l.s4 1934713408
    %v1486 = vunpack.c.0.s8 %v1485
    %v1487 = vlaneseq
    %v1488 = vshrl.u32 %v1487, 7
    %v1489 = vsub.s32 %v1486, %v1488
    %v1490 = vrot.slane %v1476, %v1489
    %v1491 = vcombine.low %v1426, %v1442
    %v1492 = vcombine.high %v1426, %v1442
    %v1494 = vunpack.c.l.s4 1934713408
    %v1495 = vunpack.c.0.s8 %v1494
    %v1496 = vlaneseq
    %v1497 = vshrl.u32 %v1496, 7
    %v1498 = vsub.s32 %v1495, %v1497
    %v1499 = vrot.slane %v1491, %v1498
    %v1501 = vunpack.c.l.s4 1934713408
    %v1502 = vunpack.c.0.s8 %v1501
    %v1503 = vlaneseq
    %v1504 = vshrl.u32 %v1503, 7
    %v1505 = vsub.s32 %v1502, %v1504
    %v1506 = vrot.slane %v1492, %v1505
    %v1507 = vcombine.low %v1451, %v1467
    %v1508 = vcombine.high %v1451, %v1467
    %v1510 = vunpack.c.l.s4 1934713408
    %v1511 = vunpack.c.0.s8 %v1510
    %v1512 = vlaneseq
    %v1513 = vshrl.u32 %v1512, 7
    %v1514 = vsub.s32 %v1511, %v1513
    %v1515 = vrot.slane %v1507, %v1514
    %v1517 = vunpack.c.l.s4 1934713408
    %v1518 = vunpack.c.0.s8 %v1517
    %v1519 = vlaneseq
    %v1520 = vshrl.u32 %v1519, 7
    %v1521 = vsub.s32 %v1518, %v1520
    %v1522 = vrot.slane %v1508, %v1521
    %v1523 = vcombine.low %v1458, %v1474
    %v1524 = vcombine.high %v1458, %v1474
    %v1526 = vunpack.c.l.s4 1934713408
    %v1527 = vunpack.c.0.s8 %v1526
    %v1528 = vlaneseq
    %v1529 = vshrl.u32 %v1528, 7
    %v1530 = vsub.s32 %v1527, %v1529
    %v1531 = vrot.slane %v1523, %v1530
    %v1533 = vunpack.c.l.s4 1934713408
    %v1534 = vunpack.c.0.s8 %v1533
    %v1535 = vlaneseq
    %v1536 = vshrl.u32 %v1535, 7
    %v1537 = vsub.s32 %v1534, %v1536
    %v1538 = vrot.slane %v1524, %v1537
    %v1539 = vcombine.low %v1483, %v1515
    %v1540 = vcombine.high %v1483, %v1515
    %v1541 = vcombine.low %v1490, %v1522
    %v1542 = vcombine.high %v1490, %v1522
    %v1543 = vcombine.low %v1499, %v1531
    %v1544 = vcombine.high %v1499, %v1531
    %v1545 = vcombine.low %v1506, %v1538
    %v1546 = vcombine.high %v1506, %v1538
    %v1547 = vcombine.low %v1333, %v1355
    %v1548 = vcombine.high %v1333, %v1355
    %v1550 = vunpack.c.l.s4 1983009808
    %v1551 = vunpack.c.0.s8 %v1550
    %v1552 = vlaneseq
    %v1553 = vshrl.u32 %v1552, 7
    %v1554 = vsub.s32 %v1551, %v1553
    %v1555 = vrot.slane %v1547, %v1554
    %v1557 = vunpack.c.l.s4 1983009808
    %v1558 = vunpack.c.0.s8 %v1557
    %v1559 = vlaneseq
    %v1560 = vshrl.u32 %v1559, 7
    %v1561 = vsub.s32 %v1558, %v1560
    %v1562 = vrot.slane %v1548, %v1561
    %v1563 = vcombine.low %v1344, %v1366
    %v1564 = vcombine.high %v1344, %v1366
    %v1566 = vunpack.c.l.s4 1983009808
    %v1567 = vunpack.c.0.s8 %v1566
    %v1568 = vlaneseq
    %v1569 = vshrl.u32 %v1568, 7
    %v1570 = vsub.s32 %v1567, %v1569
    %v1571 = vrot.slane %v1563, %v1570
    %v1573 = vunpack.c.l.s4 1983009808
    %v1574 = vunpack.c.0.s8 %v1573
    %v1575 = vlaneseq
    %v1576 = vshrl.u32 %v1575, 7
    %v1577 = vsub.s32 %v1574, %v1576
    %v1578 = vrot.slane %v1564, %v1577
    %v1579 = vcombine.low %v1377, %v1399
    %v1580 = vcombine.high %v1377, %v1399
    %v1582 = vunpack.c.l.s4 1983009808
    %v1583 = vunpack.c.0.s8 %v1582
    %v1584 = vlaneseq
    %v1585 = vshrl.u32 %v1584, 7
    %v1586 = vsub.s32 %v1583, %v1585
    %v1587 = vrot.slane %v1579, %v1586
    %v1589 = vunpack.c.l.s4 1983009808
    %v1590 = vunpack.c.0.s8 %v1589
    %v1591 = vlaneseq
    %v1592 = vshrl.u32 %v1591, 7
    %v1593 = vsub.s32 %v1590, %v1592
    %v1594 = vrot.slane %v1580, %v1593
    %v1595 = vcombine.low %v1388, %v1410
    %v1596 = vcombine.high %v1388, %v1410
    %v1598 = vunpack.c.l.s4 1983009808
    %v1599 = vunpack.c.0.s8 %v1598
    %v1600 = vlaneseq
    %v1601 = vshrl.u32 %v1600, 7
    %v1602 = vsub.s32 %v1599, %v1601
    %v1603 = vrot.slane %v1595, %v1602
    %v1605 = vunpack.c.l.s4 1983009808
    %v1606 = vunpack.c.0.s8 %v1605
    %v1607 = vlaneseq
    %v1608 = vshrl.u32 %v1607, 7
    %v1609 = vsub.s32 %v1606, %v1608
    %v1610 = vrot.slane %v1596, %v1609
    %v1611 = vcombine.low %v1555, %v1571
    %v1612 = vcombine.high %v1555, %v1571
    %v1614 = vunpack.c.l.s4 1934713408
    %v1615 = vunpack.c.0.s8 %v1614
    %v1616 = vlaneseq
    %v1617 = vshrl.u32 %v1616, 7
    %v1618 = vsub.s32 %v1615, %v1617
    %v1619 = vrot.slane %v1611, %v1618
    %v1621 = vunpack.c.l.s4 1934713408
    %v1622 = vunpack.c.0.s8 %v1621
    %v1623 = vlaneseq
    %v1624 = vshrl.u32 %v1623, 7
    %v1625 = vsub.s32 %v1622, %v1624
    %v1626 = vrot.slane %v1612, %v1625
    %v1627 = vcombine.low %v1562, %v1578
    %v1628 = vcombine.high %v1562, %v1578
    %v1630 = vunpack.c.l.s4 1934713408
    %v1631 = vunpack.c.0.s8 %v1630
    %v1632 = vlaneseq
    %v1633 = vshrl.u32 %v1632, 7
    %v1634 = vsub.s32 %v1631, %v1633
    %v1635 = vrot.slane %v1627, %v1634
    %v1637 = vunpack.c.l.s4 1934713408
    %v1638 = vunpack.c.0.s8 %v1637
    %v1639 = vlaneseq
    %v1640 = vshrl.u32 %v1639, 7
    %v1641 = vsub.s32 %v1638, %v1640
    %v1642 = vrot.slane %v1628, %v1641
    %v1643 = vcombine.low %v1587, %v1603
    %v1644 = vcombine.high %v1587, %v1603
    %v1646 = vunpack.c.l.s4 1934713408
    %v1647 = vunpack.c.0.s8 %v1646
    %v1648 = vlaneseq
    %v1649 = vshrl.u32 %v1648, 7
    %v1650 = vsub.s32 %v1647, %v1649
    %v1651 = vrot.slane %v1643, %v1650
    %v1653 = vunpack.c.l.s4 1934713408
    %v1654 = vunpack.c.0.s8 %v1653
    %v1655 = vlaneseq
    %v1656 = vshrl.u32 %v1655, 7
    %v1657 = vsub.s32 %v1654, %v1656
    %v1658 = vrot.slane %v1644, %v1657
    %v1659 = vcombine.low %v1594, %v1610
    %v1660 = vcombine.high %v1594, %v1610
    %v1662 = vunpack.c.l.s4 1934713408
    %v1663 = vunpack.c.0.s8 %v1662
    %v1664 = vlaneseq
    %v1665 = vshrl.u32 %v1664, 7
    %v1666 = vsub.s32 %v1663, %v1665
    %v1667 = vrot.slane %v1659, %v1666
    %v1669 = vunpack.c.l.s4 1934713408
    %v1670 = vunpack.c.0.s8 %v1669
    %v1671 = vlaneseq
    %v1672 = vshrl.u32 %v1671, 7
    %v1673 = vsub.s32 %v1670, %v1672
    %v1674 = vrot.slane %v1660, %v1673
    %v1675 = vcombine.low %v1619, %v1651
    %v1676 = vcombine.high %v1619, %v1651
    %v1677 = vcombine.low %v1626, %v1658
    %v1678 = vcombine.high %v1626, %v1658
    %v1679 = vcombine.low %v1635, %v1667
    %v1680 = vcombine.high %v1635, %v1667
    %v1681 = vcombine.low %v1642, %v1674
    %v1682 = vcombine.high %v1642, %v1674
    %1684 = vrot.lane.b32.xlu0 %v1540, 16
    %v1685 = vpop.permute.xlu0 %1684
    %1688 = vrot.lane.b32.xlu0 %v1541, 32
    %v1689 = vpop.permute.xlu0 %1688
    %1692 = vrot.lane.b32.xlu0 %v1542, 48
    %v1693 = vpop.permute.xlu0 %1692
    %1696 = vrot.lane.b32.xlu0 %v1543, 64
    %v1697 = vpop.permute.xlu0 %1696
    %1700 = vrot.lane.b32.xlu0 %v1544, 80
    %v1701 = vpop.permute.xlu0 %1700
    %1704 = vrot.lane.b32.xlu0 %v1545, 96
    %v1705 = vpop.permute.xlu0 %1704
    %1708 = vrot.lane.b32.xlu0 %v1546, 112
    %v1709 = vpop.permute.xlu0 %1708
    %1712 = vrot.lane.b32.xlu0 %v1676, 16
    %v1713 = vpop.permute.xlu0 %1712
    %1716 = vrot.lane.b32.xlu0 %v1677, 32
    %v1717 = vpop.permute.xlu0 %1716
    %1720 = vrot.lane.b32.xlu0 %v1678, 48
    %v1721 = vpop.permute.xlu0 %1720
    %1724 = vrot.lane.b32.xlu0 %v1679, 64
    %v1725 = vpop.permute.xlu0 %1724
    %1728 = vrot.lane.b32.xlu0 %v1680, 80
    %v1729 = vpop.permute.xlu0 %1728
    %1732 = vrot.lane.b32.xlu0 %v1681, 96
    %v1733 = vpop.permute.xlu0 %1732
    %1736 = vrot.lane.b32.xlu0 %v1682, 112
    %v1737 = vpop.permute.xlu0 %1736
    %v1739 = vsel %vm52, %v1539, %v1685
    %v1740 = vsel %vm138, %v1739, %v1689
    %v1741 = vsel %vm721, %v1740, %v1693
    %v1742 = vsel %vm723, %v1741, %v1697
    %v1743 = vsel %vm725, %v1742, %v1701
    %v1744 = vsel %vm727, %v1743, %v1705
    %v1745 = vsel %vm729, %v1744, %v1709
    %v1746 = vsel %vm52, %v1675, %v1713
    %v1747 = vsel %vm138, %v1746, %v1717
    %v1748 = vsel %vm721, %v1747, %v1721
    %v1749 = vsel %vm723, %v1748, %v1725
    %v1750 = vsel %vm725, %v1749, %v1729
    %v1751 = vsel %vm727, %v1750, %v1733
    %v1752 = vsel %vm729, %v1751, %v1737
    %1754 = vrot.lane.b32.xlu0 %v1316, 16
    %v1755 = vpop.permute.xlu0 %1754
    %1757 = vrot.lane.b32.xlu0 %v1316, 32
    %v1758 = vpop.permute.xlu0 %1757
    %1760 = vrot.lane.b32.xlu0 %v1316, 48
    %v1761 = vpop.permute.xlu0 %1760
    %1763 = vrot.lane.b32.xlu0 %v1316, 64
    %v1764 = vpop.permute.xlu0 %1763
    %1766 = vrot.lane.b32.xlu0 %v1316, 80
    %v1767 = vpop.permute.xlu0 %1766
    %1769 = vrot.lane.b32.xlu0 %v1316, 96
    %v1770 = vpop.permute.xlu0 %1769
    %1772 = vrot.lane.b32.xlu0 %v1316, 112
    %v1773 = vpop.permute.xlu0 %1772
    %v1775 = vsel %vm52, %v1316, %v1755
    %v1776 = vsel %vm138, %v1775, %v1758
    %v1777 = vsel %vm721, %v1776, %v1761
    %v1778 = vsel %vm723, %v1777, %v1764
    %v1779 = vsel %vm725, %v1778, %v1767
    %v1780 = vsel %vm727, %v1779, %v1770
    %v1781 = vsel %vm729, %v1780, %v1773
    %v1782 = vmul.f32 %v1745, %v1781
    %v1783 = vmul.f32 %v1752, %v1781
    %1785 = vrot.lane.b32.xlu0 %v1322, 16
    %v1786 = vpop.permute.xlu0 %1785
    %1788 = vrot.lane.b32.xlu0 %v1322, 32
    %v1789 = vpop.permute.xlu0 %1788
    %1791 = vrot.lane.b32.xlu0 %v1322, 48
    %v1792 = vpop.permute.xlu0 %1791
    %1794 = vrot.lane.b32.xlu0 %v1322, 64
    %v1795 = vpop.permute.xlu0 %1794
    %1797 = vrot.lane.b32.xlu0 %v1322, 80
    %v1798 = vpop.permute.xlu0 %1797
    %1800 = vrot.lane.b32.xlu0 %v1322, 96
    %v1801 = vpop.permute.xlu0 %1800
    %1803 = vrot.lane.b32.xlu0 %v1322, 112
    %v1804 = vpop.permute.xlu0 %1803
    %v1806 = vsel %vm52, %v1322, %v1786
    %v1807 = vsel %vm138, %v1806, %v1789
    %v1808 = vsel %vm721, %v1807, %v1792
    %v1809 = vsel %vm723, %v1808, %v1795
    %v1810 = vsel %vm725, %v1809, %v1798
    %v1811 = vsel %vm727, %v1810, %v1801
    %v1812 = vsel %vm729, %v1811, %v1804
    %v1813 = vmul.f32 %v1745, %v1812
    %v1814 = vmul.f32 %v1752, %v1812
    %1815 = vset.pattern.permute.xlu0 4
    %1816 = vperm.xlu0 %1815, %v868
    %v1817 = vpop.permute.xlu0 %1816
    %v1819 = vmul.f32 %v1817, %v1058
    %v1820 = vmul.f32 %v1202, %v1058
    %1821 = vset.pattern.permute.xlu0 5
    %1822 = vperm.xlu0 %1821, %v868
    %v1823 = vpop.permute.xlu0 %1822
    %v1825 = vmul.f32 %v1823, %v1058
    %1827 = vrot.lane.b32.xlu0 %v1825, 112
    %v1828 = vpop.permute.xlu0 %1827
    %v1830 = vadd.f32 %v1819, %v1828
    %v1831 = vmul.f32 %v1208, %v1058
    %1833 = vrot.lane.b32.xlu0 %v1831, 112
    %v1834 = vpop.permute.xlu0 %1833
    %v1836 = vadd.f32 %v1820, %v1834
    %1837 = vset.pattern.permute.xlu0 6
    %1838 = vperm.xlu0 %1837, %v868
    %v1839 = vpop.permute.xlu0 %1838
    %v1841 = vmul.f32 %v1839, %v1058
    %1843 = vrot.lane.b32.xlu0 %v1841, 96
    %v1844 = vpop.permute.xlu0 %1843
    %v1846 = vadd.f32 %v1830, %v1844
    %v1847 = vmul.f32 %v1215, %v1058
    %1849 = vrot.lane.b32.xlu0 %v1847, 96
    %v1850 = vpop.permute.xlu0 %1849
    %v1852 = vadd.f32 %v1836, %v1850
    %1853 = vset.pattern.permute.xlu0 7
    %1854 = vperm.xlu0 %1853, %v868
    %v1855 = vpop.permute.xlu0 %1854
    %v1857 = vmul.f32 %v1855, %v1058
    %1859 = vrot.lane.b32.xlu0 %v1857, 80
    %v1860 = vpop.permute.xlu0 %1859
    %v1862 = vadd.f32 %v1846, %v1860
    %v1863 = vmul.f32 %v1221, %v1058
    %1865 = vrot.lane.b32.xlu0 %v1863, 80
    %v1866 = vpop.permute.xlu0 %1865
    %v1868 = vadd.f32 %v1852, %v1866
    %s1870 = sor.u32 256, 16
    %1871 = vbcast.lane.b32.xlu0 %v1326, %s1870
    %v1872 = vpop.permute.xlu0 %1871
    %s1874 = sor.u32 256, 24
    %1875 = vbcast.lane.b32.xlu0 %v1326, %s1874
    %v1876 = vpop.permute.xlu0 %1875
    %s1878 = sor.u32 256, 16
    %1879 = vbcast.lane.b32.xlu0 %v1337, %s1878
    %v1880 = vpop.permute.xlu0 %1879
    %s1882 = sor.u32 256, 24
    %1883 = vbcast.lane.b32.xlu0 %v1337, %s1882
    %v1884 = vpop.permute.xlu0 %1883
    %s1886 = sor.u32 256, 16
    %1887 = vbcast.lane.b32.xlu0 %v1348, %s1886
    %v1888 = vpop.permute.xlu0 %1887
    %s1890 = sor.u32 256, 24
    %1891 = vbcast.lane.b32.xlu0 %v1348, %s1890
    %v1892 = vpop.permute.xlu0 %1891
    %s1894 = sor.u32 256, 16
    %1895 = vbcast.lane.b32.xlu0 %v1359, %s1894
    %v1896 = vpop.permute.xlu0 %1895
    %s1898 = sor.u32 256, 24
    %1899 = vbcast.lane.b32.xlu0 %v1359, %s1898
    %v1900 = vpop.permute.xlu0 %1899
    %s1902 = sor.u32 256, 16
    %1903 = vbcast.lane.b32.xlu0 %v1370, %s1902
    %v1904 = vpop.permute.xlu0 %1903
    %s1906 = sor.u32 256, 24
    %1907 = vbcast.lane.b32.xlu0 %v1370, %s1906
    %v1908 = vpop.permute.xlu0 %1907
    %s1910 = sor.u32 256, 16
    %1911 = vbcast.lane.b32.xlu0 %v1381, %s1910
    %v1912 = vpop.permute.xlu0 %1911
    %s1914 = sor.u32 256, 24
    %1915 = vbcast.lane.b32.xlu0 %v1381, %s1914
    %v1916 = vpop.permute.xlu0 %1915
    %s1918 = sor.u32 256, 16
    %1919 = vbcast.lane.b32.xlu0 %v1392, %s1918
    %v1920 = vpop.permute.xlu0 %1919
    %s1922 = sor.u32 256, 24
    %1923 = vbcast.lane.b32.xlu0 %v1392, %s1922
    %v1924 = vpop.permute.xlu0 %1923
    %s1926 = sor.u32 256, 16
    %1927 = vbcast.lane.b32.xlu0 %v1403, %s1926
    %v1928 = vpop.permute.xlu0 %1927
    %s1930 = sor.u32 256, 24
    %1931 = vbcast.lane.b32.xlu0 %v1403, %s1930
    %v1932 = vpop.permute.xlu0 %1931
    %v1933 = vcombine.low %v1872, %v1888
    %v1934 = vcombine.high %v1872, %v1888
    %v1936 = vunpack.c.l.s4 1983009808
    %v1937 = vunpack.c.0.s8 %v1936
    %v1938 = vlaneseq
    %v1939 = vshrl.u32 %v1938, 7
    %v1940 = vsub.s32 %v1937, %v1939
    %v1941 = vrot.slane %v1933, %v1940
    %v1943 = vunpack.c.l.s4 1983009808
    %v1944 = vunpack.c.0.s8 %v1943
    %v1945 = vlaneseq
    %v1946 = vshrl.u32 %v1945, 7
    %v1947 = vsub.s32 %v1944, %v1946
    %v1948 = vrot.slane %v1934, %v1947
    %v1949 = vcombine.low %v1880, %v1896
    %v1950 = vcombine.high %v1880, %v1896
    %v1952 = vunpack.c.l.s4 1983009808
    %v1953 = vunpack.c.0.s8 %v1952
    %v1954 = vlaneseq
    %v1955 = vshrl.u32 %v1954, 7
    %v1956 = vsub.s32 %v1953, %v1955
    %v1957 = vrot.slane %v1949, %v1956
    %v1959 = vunpack.c.l.s4 1983009808
    %v1960 = vunpack.c.0.s8 %v1959
    %v1961 = vlaneseq
    %v1962 = vshrl.u32 %v1961, 7
    %v1963 = vsub.s32 %v1960, %v1962
    %v1964 = vrot.slane %v1950, %v1963
    %v1965 = vcombine.low %v1904, %v1920
    %v1966 = vcombine.high %v1904, %v1920
    %v1968 = vunpack.c.l.s4 1983009808
    %v1969 = vunpack.c.0.s8 %v1968
    %v1970 = vlaneseq
    %v1971 = vshrl.u32 %v1970, 7
    %v1972 = vsub.s32 %v1969, %v1971
    %v1973 = vrot.slane %v1965, %v1972
    %v1975 = vunpack.c.l.s4 1983009808
    %v1976 = vunpack.c.0.s8 %v1975
    %v1977 = vlaneseq
    %v1978 = vshrl.u32 %v1977, 7
    %v1979 = vsub.s32 %v1976, %v1978
    %v1980 = vrot.slane %v1966, %v1979
    %v1981 = vcombine.low %v1912, %v1928
    %v1982 = vcombine.high %v1912, %v1928
    %v1984 = vunpack.c.l.s4 1983009808
    %v1985 = vunpack.c.0.s8 %v1984
    %v1986 = vlaneseq
    %v1987 = vshrl.u32 %v1986, 7
    %v1988 = vsub.s32 %v1985, %v1987
    %v1989 = vrot.slane %v1981, %v1988
    %v1991 = vunpack.c.l.s4 1983009808
    %v1992 = vunpack.c.0.s8 %v1991
    %v1993 = vlaneseq
    %v1994 = vshrl.u32 %v1993, 7
    %v1995 = vsub.s32 %v1992, %v1994
    %v1996 = vrot.slane %v1982, %v1995
    %v1997 = vcombine.low %v1941, %v1957
    %v1998 = vcombine.high %v1941, %v1957
    %v2000 = vunpack.c.l.s4 1934713408
    %v2001 = vunpack.c.0.s8 %v2000
    %v2002 = vlaneseq
    %v2003 = vshrl.u32 %v2002, 7
    %v2004 = vsub.s32 %v2001, %v2003
    %v2005 = vrot.slane %v1997, %v2004
    %v2007 = vunpack.c.l.s4 1934713408
    %v2008 = vunpack.c.0.s8 %v2007
    %v2009 = vlaneseq
    %v2010 = vshrl.u32 %v2009, 7
    %v2011 = vsub.s32 %v2008, %v2010
    %v2012 = vrot.slane %v1998, %v2011
    %v2013 = vcombine.low %v1948, %v1964
    %v2014 = vcombine.high %v1948, %v1964
    %v2016 = vunpack.c.l.s4 1934713408
    %v2017 = vunpack.c.0.s8 %v2016
    %v2018 = vlaneseq
    %v2019 = vshrl.u32 %v2018, 7
    %v2020 = vsub.s32 %v2017, %v2019
    %v2021 = vrot.slane %v2013, %v2020
    %v2023 = vunpack.c.l.s4 1934713408
    %v2024 = vunpack.c.0.s8 %v2023
    %v2025 = vlaneseq
    %v2026 = vshrl.u32 %v2025, 7
    %v2027 = vsub.s32 %v2024, %v2026
    %v2028 = vrot.slane %v2014, %v2027
    %v2029 = vcombine.low %v1973, %v1989
    %v2030 = vcombine.high %v1973, %v1989
    %v2032 = vunpack.c.l.s4 1934713408
    %v2033 = vunpack.c.0.s8 %v2032
    %v2034 = vlaneseq
    %v2035 = vshrl.u32 %v2034, 7
    %v2036 = vsub.s32 %v2033, %v2035
    %v2037 = vrot.slane %v2029, %v2036
    %v2039 = vunpack.c.l.s4 1934713408
    %v2040 = vunpack.c.0.s8 %v2039
    %v2041 = vlaneseq
    %v2042 = vshrl.u32 %v2041, 7
    %v2043 = vsub.s32 %v2040, %v2042
    %v2044 = vrot.slane %v2030, %v2043
    %v2045 = vcombine.low %v1980, %v1996
    %v2046 = vcombine.high %v1980, %v1996
    %v2048 = vunpack.c.l.s4 1934713408
    %v2049 = vunpack.c.0.s8 %v2048
    %v2050 = vlaneseq
    %v2051 = vshrl.u32 %v2050, 7
    %v2052 = vsub.s32 %v2049, %v2051
    %v2053 = vrot.slane %v2045, %v2052
    %v2055 = vunpack.c.l.s4 1934713408
    %v2056 = vunpack.c.0.s8 %v2055
    %v2057 = vlaneseq
    %v2058 = vshrl.u32 %v2057, 7
    %v2059 = vsub.s32 %v2056, %v2058
    %v2060 = vrot.slane %v2046, %v2059
    %v2061 = vcombine.low %v2005, %v2037
    %v2062 = vcombine.high %v2005, %v2037
    %v2063 = vcombine.low %v2012, %v2044
    %v2064 = vcombine.high %v2012, %v2044
    %v2065 = vcombine.low %v2021, %v2053
    %v2066 = vcombine.high %v2021, %v2053
    %v2067 = vcombine.low %v2028, %v2060
    %v2068 = vcombine.high %v2028, %v2060
    %v2069 = vcombine.low %v1876, %v1892
    %v2070 = vcombine.high %v1876, %v1892
    %v2072 = vunpack.c.l.s4 1983009808
    %v2073 = vunpack.c.0.s8 %v2072
    %v2074 = vlaneseq
    %v2075 = vshrl.u32 %v2074, 7
    %v2076 = vsub.s32 %v2073, %v2075
    %v2077 = vrot.slane %v2069, %v2076
    %v2079 = vunpack.c.l.s4 1983009808
    %v2080 = vunpack.c.0.s8 %v2079
    %v2081 = vlaneseq
    %v2082 = vshrl.u32 %v2081, 7
    %v2083 = vsub.s32 %v2080, %v2082
    %v2084 = vrot.slane %v2070, %v2083
    %v2085 = vcombine.low %v1884, %v1900
    %v2086 = vcombine.high %v1884, %v1900
    %v2088 = vunpack.c.l.s4 1983009808
    %v2089 = vunpack.c.0.s8 %v2088
    %v2090 = vlaneseq
    %v2091 = vshrl.u32 %v2090, 7
    %v2092 = vsub.s32 %v2089, %v2091
    %v2093 = vrot.slane %v2085, %v2092
    %v2095 = vunpack.c.l.s4 1983009808
    %v2096 = vunpack.c.0.s8 %v2095
    %v2097 = vlaneseq
    %v2098 = vshrl.u32 %v2097, 7
    %v2099 = vsub.s32 %v2096, %v2098
    %v2100 = vrot.slane %v2086, %v2099
    %v2101 = vcombine.low %v1908, %v1924
    %v2102 = vcombine.high %v1908, %v1924
    %v2104 = vunpack.c.l.s4 1983009808
    %v2105 = vunpack.c.0.s8 %v2104
    %v2106 = vlaneseq
    %v2107 = vshrl.u32 %v2106, 7
    %v2108 = vsub.s32 %v2105, %v2107
    %v2109 = vrot.slane %v2101, %v2108
    %v2111 = vunpack.c.l.s4 1983009808
    %v2112 = vunpack.c.0.s8 %v2111
    %v2113 = vlaneseq
    %v2114 = vshrl.u32 %v2113, 7
    %v2115 = vsub.s32 %v2112, %v2114
    %v2116 = vrot.slane %v2102, %v2115
    %v2117 = vcombine.low %v1916, %v1932
    %v2118 = vcombine.high %v1916, %v1932
    %v2120 = vunpack.c.l.s4 1983009808
    %v2121 = vunpack.c.0.s8 %v2120
    %v2122 = vlaneseq
    %v2123 = vshrl.u32 %v2122, 7
    %v2124 = vsub.s32 %v2121, %v2123
    %v2125 = vrot.slane %v2117, %v2124
    %v2127 = vunpack.c.l.s4 1983009808
    %v2128 = vunpack.c.0.s8 %v2127
    %v2129 = vlaneseq
    %v2130 = vshrl.u32 %v2129, 7
    %v2131 = vsub.s32 %v2128, %v2130
    %v2132 = vrot.slane %v2118, %v2131
    %v2133 = vcombine.low %v2077, %v2093
    %v2134 = vcombine.high %v2077, %v2093
    %v2136 = vunpack.c.l.s4 1934713408
    %v2137 = vunpack.c.0.s8 %v2136
    %v2138 = vlaneseq
    %v2139 = vshrl.u32 %v2138, 7
    %v2140 = vsub.s32 %v2137, %v2139
    %v2141 = vrot.slane %v2133, %v2140
    %v2143 = vunpack.c.l.s4 1934713408
    %v2144 = vunpack.c.0.s8 %v2143
    %v2145 = vlaneseq
    %v2146 = vshrl.u32 %v2145, 7
    %v2147 = vsub.s32 %v2144, %v2146
    %v2148 = vrot.slane %v2134, %v2147
    %v2149 = vcombine.low %v2084, %v2100
    %v2150 = vcombine.high %v2084, %v2100
    %v2152 = vunpack.c.l.s4 1934713408
    %v2153 = vunpack.c.0.s8 %v2152
    %v2154 = vlaneseq
    %v2155 = vshrl.u32 %v2154, 7
    %v2156 = vsub.s32 %v2153, %v2155
    %v2157 = vrot.slane %v2149, %v2156
    %v2159 = vunpack.c.l.s4 1934713408
    %v2160 = vunpack.c.0.s8 %v2159
    %v2161 = vlaneseq
    %v2162 = vshrl.u32 %v2161, 7
    %v2163 = vsub.s32 %v2160, %v2162
    %v2164 = vrot.slane %v2150, %v2163
    %v2165 = vcombine.low %v2109, %v2125
    %v2166 = vcombine.high %v2109, %v2125
    %v2168 = vunpack.c.l.s4 1934713408
    %v2169 = vunpack.c.0.s8 %v2168
    %v2170 = vlaneseq
    %v2171 = vshrl.u32 %v2170, 7
    %v2172 = vsub.s32 %v2169, %v2171
    %v2173 = vrot.slane %v2165, %v2172
    %v2175 = vunpack.c.l.s4 1934713408
    %v2176 = vunpack.c.0.s8 %v2175
    %v2177 = vlaneseq
    %v2178 = vshrl.u32 %v2177, 7
    %v2179 = vsub.s32 %v2176, %v2178
    %v2180 = vrot.slane %v2166, %v2179
    %v2181 = vcombine.low %v2116, %v2132
    %v2182 = vcombine.high %v2116, %v2132
    %v2184 = vunpack.c.l.s4 1934713408
    %v2185 = vunpack.c.0.s8 %v2184
    %v2186 = vlaneseq
    %v2187 = vshrl.u32 %v2186, 7
    %v2188 = vsub.s32 %v2185, %v2187
    %v2189 = vrot.slane %v2181, %v2188
    %v2191 = vunpack.c.l.s4 1934713408
    %v2192 = vunpack.c.0.s8 %v2191
    %v2193 = vlaneseq
    %v2194 = vshrl.u32 %v2193, 7
    %v2195 = vsub.s32 %v2192, %v2194
    %v2196 = vrot.slane %v2182, %v2195
    %v2197 = vcombine.low %v2141, %v2173
    %v2198 = vcombine.high %v2141, %v2173
    %v2199 = vcombine.low %v2148, %v2180
    %v2200 = vcombine.high %v2148, %v2180
    %v2201 = vcombine.low %v2157, %v2189
    %v2202 = vcombine.high %v2157, %v2189
    %v2203 = vcombine.low %v2164, %v2196
    %v2204 = vcombine.high %v2164, %v2196
    %2206 = vrot.lane.b32.xlu0 %v2062, 16
    %v2207 = vpop.permute.xlu0 %2206
    %2210 = vrot.lane.b32.xlu0 %v2063, 32
    %v2211 = vpop.permute.xlu0 %2210
    %2214 = vrot.lane.b32.xlu0 %v2064, 48
    %v2215 = vpop.permute.xlu0 %2214
    %2218 = vrot.lane.b32.xlu0 %v2065, 64
    %v2219 = vpop.permute.xlu0 %2218
    %2222 = vrot.lane.b32.xlu0 %v2066, 80
    %v2223 = vpop.permute.xlu0 %2222
    %2226 = vrot.lane.b32.xlu0 %v2067, 96
    %v2227 = vpop.permute.xlu0 %2226
    %2230 = vrot.lane.b32.xlu0 %v2068, 112
    %v2231 = vpop.permute.xlu0 %2230
    %2234 = vrot.lane.b32.xlu0 %v2198, 16
    %v2235 = vpop.permute.xlu0 %2234
    %2238 = vrot.lane.b32.xlu0 %v2199, 32
    %v2239 = vpop.permute.xlu0 %2238
    %2242 = vrot.lane.b32.xlu0 %v2200, 48
    %v2243 = vpop.permute.xlu0 %2242
    %2246 = vrot.lane.b32.xlu0 %v2201, 64
    %v2247 = vpop.permute.xlu0 %2246
    %2250 = vrot.lane.b32.xlu0 %v2202, 80
    %v2251 = vpop.permute.xlu0 %2250
    %2254 = vrot.lane.b32.xlu0 %v2203, 96
    %v2255 = vpop.permute.xlu0 %2254
    %2258 = vrot.lane.b32.xlu0 %v2204, 112
    %v2259 = vpop.permute.xlu0 %2258
    %v2261 = vsel %vm52, %v2061, %v2207
    %v2262 = vsel %vm138, %v2261, %v2211
    %v2263 = vsel %vm721, %v2262, %v2215
    %v2264 = vsel %vm723, %v2263, %v2219
    %v2265 = vsel %vm725, %v2264, %v2223
    %v2266 = vsel %vm727, %v2265, %v2227
    %v2267 = vsel %vm729, %v2266, %v2231
    %v2268 = vsel %vm52, %v2197, %v2235
    %v2269 = vsel %vm138, %v2268, %v2239
    %v2270 = vsel %vm721, %v2269, %v2243
    %v2271 = vsel %vm723, %v2270, %v2247
    %v2272 = vsel %vm725, %v2271, %v2251
    %v2273 = vsel %vm727, %v2272, %v2255
    %v2274 = vsel %vm729, %v2273, %v2259
    %2276 = vrot.lane.b32.xlu0 %v1862, 16
    %v2277 = vpop.permute.xlu0 %2276
    %2279 = vrot.lane.b32.xlu0 %v1862, 32
    %v2280 = vpop.permute.xlu0 %2279
    %2282 = vrot.lane.b32.xlu0 %v1862, 48
    %v2283 = vpop.permute.xlu0 %2282
    %2285 = vrot.lane.b32.xlu0 %v1862, 64
    %v2286 = vpop.permute.xlu0 %2285
    %2288 = vrot.lane.b32.xlu0 %v1862, 80
    %v2289 = vpop.permute.xlu0 %2288
    %2291 = vrot.lane.b32.xlu0 %v1862, 96
    %v2292 = vpop.permute.xlu0 %2291
    %2294 = vrot.lane.b32.xlu0 %v1862, 112
    %v2295 = vpop.permute.xlu0 %2294
    %v2297 = vsel %vm52, %v1862, %v2277
    %v2298 = vsel %vm138, %v2297, %v2280
    %v2299 = vsel %vm721, %v2298, %v2283
    %v2300 = vsel %vm723, %v2299, %v2286
    %v2301 = vsel %vm725, %v2300, %v2289
    %v2302 = vsel %vm727, %v2301, %v2292
    %v2303 = vsel %vm729, %v2302, %v2295
    %v2304 = vmul.f32 %v2267, %v2303
    %v2305 = vmul.f32 %v2274, %v2303
    %2307 = vrot.lane.b32.xlu0 %v1868, 16
    %v2308 = vpop.permute.xlu0 %2307
    %2310 = vrot.lane.b32.xlu0 %v1868, 32
    %v2311 = vpop.permute.xlu0 %2310
    %2313 = vrot.lane.b32.xlu0 %v1868, 48
    %v2314 = vpop.permute.xlu0 %2313
    %2316 = vrot.lane.b32.xlu0 %v1868, 64
    %v2317 = vpop.permute.xlu0 %2316
    %2319 = vrot.lane.b32.xlu0 %v1868, 80
    %v2320 = vpop.permute.xlu0 %2319
    %2322 = vrot.lane.b32.xlu0 %v1868, 96
    %v2323 = vpop.permute.xlu0 %2322
    %2325 = vrot.lane.b32.xlu0 %v1868, 112
    %v2326 = vpop.permute.xlu0 %2325
    %v2328 = vsel %vm52, %v1868, %v2308
    %v2329 = vsel %vm138, %v2328, %v2311
    %v2330 = vsel %vm721, %v2329, %v2314
    %v2331 = vsel %vm723, %v2330, %v2317
    %v2332 = vsel %vm725, %v2331, %v2320
    %v2333 = vsel %vm727, %v2332, %v2323
    %v2334 = vsel %vm729, %v2333, %v2326
    %v2335 = vmul.f32 %v2267, %v2334
    %v2336 = vmul.f32 %v2274, %v2334
    %v2337 = vadd.f32 %v1782, %v2304
    %v2338 = vadd.f32 %v1783, %v2305
    %v2339 = vadd.f32 %v1813, %v2335
    %v2340 = vadd.f32 %v1814, %v2336
    %2341 = vset.pattern.permute.xlu0 8
    %2342 = vperm.xlu0 %2341, %v868
    %v2343 = vpop.permute.xlu0 %2342
    %v2345 = vmul.f32 %v2343, %v1058
    %v2346 = vmul.f32 %v1226, %v1058
    %2347 = vset.pattern.permute.xlu0 9
    %2348 = vperm.xlu0 %2347, %v868
    %v2349 = vpop.permute.xlu0 %2348
    %v2351 = vmul.f32 %v2349, %v1058
    %2353 = vrot.lane.b32.xlu0 %v2351, 112
    %v2354 = vpop.permute.xlu0 %2353
    %v2356 = vadd.f32 %v2345, %v2354
    %v2357 = vmul.f32 %v1233, %v1058
    %2359 = vrot.lane.b32.xlu0 %v2357, 112
    %v2360 = vpop.permute.xlu0 %2359
    %v2362 = vadd.f32 %v2346, %v2360
    %2363 = vset.pattern.permute.xlu0 10
    %2364 = vperm.xlu0 %2363, %v868
    %v2365 = vpop.permute.xlu0 %2364
    %v2367 = vmul.f32 %v2365, %v1058
    %2369 = vrot.lane.b32.xlu0 %v2367, 96
    %v2370 = vpop.permute.xlu0 %2369
    %v2372 = vadd.f32 %v2356, %v2370
    %v2373 = vmul.f32 %v1239, %v1058
    %2375 = vrot.lane.b32.xlu0 %v2373, 96
    %v2376 = vpop.permute.xlu0 %2375
    %v2378 = vadd.f32 %v2362, %v2376
    %2379 = vset.pattern.permute.xlu0 11
    %2380 = vperm.xlu0 %2379, %v868
    %v2381 = vpop.permute.xlu0 %2380
    %v2383 = vmul.f32 %v2381, %v1058
    %2385 = vrot.lane.b32.xlu0 %v2383, 80
    %v2386 = vpop.permute.xlu0 %2385
    %v2388 = vadd.f32 %v2372, %v2386
    %v2389 = vmul.f32 %v1246, %v1058
    %2391 = vrot.lane.b32.xlu0 %v2389, 80
    %v2392 = vpop.permute.xlu0 %2391
    %v2394 = vadd.f32 %v2378, %v2392
    %s2396 = sor.u32 256, 32
    %2397 = vbcast.lane.b32.xlu0 %v1326, %s2396
    %v2398 = vpop.permute.xlu0 %2397
    %s2400 = sor.u32 256, 40
    %2401 = vbcast.lane.b32.xlu0 %v1326, %s2400
    %v2402 = vpop.permute.xlu0 %2401
    %s2404 = sor.u32 256, 32
    %2405 = vbcast.lane.b32.xlu0 %v1337, %s2404
    %v2406 = vpop.permute.xlu0 %2405
    %s2408 = sor.u32 256, 40
    %2409 = vbcast.lane.b32.xlu0 %v1337, %s2408
    %v2410 = vpop.permute.xlu0 %2409
    %s2412 = sor.u32 256, 32
    %2413 = vbcast.lane.b32.xlu0 %v1348, %s2412
    %v2414 = vpop.permute.xlu0 %2413
    %s2416 = sor.u32 256, 40
    %2417 = vbcast.lane.b32.xlu0 %v1348, %s2416
    %v2418 = vpop.permute.xlu0 %2417
    %s2420 = sor.u32 256, 32
    %2421 = vbcast.lane.b32.xlu0 %v1359, %s2420
    %v2422 = vpop.permute.xlu0 %2421
    %s2424 = sor.u32 256, 40
    %2425 = vbcast.lane.b32.xlu0 %v1359, %s2424
    %v2426 = vpop.permute.xlu0 %2425
    %s2428 = sor.u32 256, 32
    %2429 = vbcast.lane.b32.xlu0 %v1370, %s2428
    %v2430 = vpop.permute.xlu0 %2429
    %s2432 = sor.u32 256, 40
    %2433 = vbcast.lane.b32.xlu0 %v1370, %s2432
    %v2434 = vpop.permute.xlu0 %2433
    %s2436 = sor.u32 256, 32
    %2437 = vbcast.lane.b32.xlu0 %v1381, %s2436
    %v2438 = vpop.permute.xlu0 %2437
    %s2440 = sor.u32 256, 40
    %2441 = vbcast.lane.b32.xlu0 %v1381, %s2440
    %v2442 = vpop.permute.xlu0 %2441
    %s2444 = sor.u32 256, 32
    %2445 = vbcast.lane.b32.xlu0 %v1392, %s2444
    %v2446 = vpop.permute.xlu0 %2445
    %s2448 = sor.u32 256, 40
    %2449 = vbcast.lane.b32.xlu0 %v1392, %s2448
    %v2450 = vpop.permute.xlu0 %2449
    %s2452 = sor.u32 256, 32
    %2453 = vbcast.lane.b32.xlu0 %v1403, %s2452
    %v2454 = vpop.permute.xlu0 %2453
    %s2456 = sor.u32 256, 40
    %2457 = vbcast.lane.b32.xlu0 %v1403, %s2456
    %v2458 = vpop.permute.xlu0 %2457
    %v2459 = vcombine.low %v2398, %v2414
    %v2460 = vcombine.high %v2398, %v2414
    %v2462 = vunpack.c.l.s4 1983009808
    %v2463 = vunpack.c.0.s8 %v2462
    %v2464 = vlaneseq
    %v2465 = vshrl.u32 %v2464, 7
    %v2466 = vsub.s32 %v2463, %v2465
    %v2467 = vrot.slane %v2459, %v2466
    %v2469 = vunpack.c.l.s4 1983009808
    %v2470 = vunpack.c.0.s8 %v2469
    %v2471 = vlaneseq
    %v2472 = vshrl.u32 %v2471, 7
    %v2473 = vsub.s32 %v2470, %v2472
    %v2474 = vrot.slane %v2460, %v2473
    %v2475 = vcombine.low %v2406, %v2422
    %v2476 = vcombine.high %v2406, %v2422
    %v2478 = vunpack.c.l.s4 1983009808
    %v2479 = vunpack.c.0.s8 %v2478
    %v2480 = vlaneseq
    %v2481 = vshrl.u32 %v2480, 7
    %v2482 = vsub.s32 %v2479, %v2481
    %v2483 = vrot.slane %v2475, %v2482
    %v2485 = vunpack.c.l.s4 1983009808
    %v2486 = vunpack.c.0.s8 %v2485
    %v2487 = vlaneseq
    %v2488 = vshrl.u32 %v2487, 7
    %v2489 = vsub.s32 %v2486, %v2488
    %v2490 = vrot.slane %v2476, %v2489
    %v2491 = vcombine.low %v2430, %v2446
    %v2492 = vcombine.high %v2430, %v2446
    %v2494 = vunpack.c.l.s4 1983009808
    %v2495 = vunpack.c.0.s8 %v2494
    %v2496 = vlaneseq
    %v2497 = vshrl.u32 %v2496, 7
    %v2498 = vsub.s32 %v2495, %v2497
    %v2499 = vrot.slane %v2491, %v2498
    %v2501 = vunpack.c.l.s4 1983009808
    %v2502 = vunpack.c.0.s8 %v2501
    %v2503 = vlaneseq
    %v2504 = vshrl.u32 %v2503, 7
    %v2505 = vsub.s32 %v2502, %v2504
    %v2506 = vrot.slane %v2492, %v2505
    %v2507 = vcombine.low %v2438, %v2454
    %v2508 = vcombine.high %v2438, %v2454
    %v2510 = vunpack.c.l.s4 1983009808
    %v2511 = vunpack.c.0.s8 %v2510
    %v2512 = vlaneseq
    %v2513 = vshrl.u32 %v2512, 7
    %v2514 = vsub.s32 %v2511, %v2513
    %v2515 = vrot.slane %v2507, %v2514
    %v2517 = vunpack.c.l.s4 1983009808
    %v2518 = vunpack.c.0.s8 %v2517
    %v2519 = vlaneseq
    %v2520 = vshrl.u32 %v2519, 7
    %v2521 = vsub.s32 %v2518, %v2520
    %v2522 = vrot.slane %v2508, %v2521
    %v2523 = vcombine.low %v2467, %v2483
    %v2524 = vcombine.high %v2467, %v2483
    %v2526 = vunpack.c.l.s4 1934713408
    %v2527 = vunpack.c.0.s8 %v2526
    %v2528 = vlaneseq
    %v2529 = vshrl.u32 %v2528, 7
    %v2530 = vsub.s32 %v2527, %v2529
    %v2531 = vrot.slane %v2523, %v2530
    %v2533 = vunpack.c.l.s4 1934713408
    %v2534 = vunpack.c.0.s8 %v2533
    %v2535 = vlaneseq
    %v2536 = vshrl.u32 %v2535, 7
    %v2537 = vsub.s32 %v2534, %v2536
    %v2538 = vrot.slane %v2524, %v2537
    %v2539 = vcombine.low %v2474, %v2490
    %v2540 = vcombine.high %v2474, %v2490
    %v2542 = vunpack.c.l.s4 1934713408
    %v2543 = vunpack.c.0.s8 %v2542
    %v2544 = vlaneseq
    %v2545 = vshrl.u32 %v2544, 7
    %v2546 = vsub.s32 %v2543, %v2545
    %v2547 = vrot.slane %v2539, %v2546
    %v2549 = vunpack.c.l.s4 1934713408
    %v2550 = vunpack.c.0.s8 %v2549
    %v2551 = vlaneseq
    %v2552 = vshrl.u32 %v2551, 7
    %v2553 = vsub.s32 %v2550, %v2552
    %v2554 = vrot.slane %v2540, %v2553
    %v2555 = vcombine.low %v2499, %v2515
    %v2556 = vcombine.high %v2499, %v2515
    %v2558 = vunpack.c.l.s4 1934713408
    %v2559 = vunpack.c.0.s8 %v2558
    %v2560 = vlaneseq
    %v2561 = vshrl.u32 %v2560, 7
    %v2562 = vsub.s32 %v2559, %v2561
    %v2563 = vrot.slane %v2555, %v2562
    %v2565 = vunpack.c.l.s4 1934713408
    %v2566 = vunpack.c.0.s8 %v2565
    %v2567 = vlaneseq
    %v2568 = vshrl.u32 %v2567, 7
    %v2569 = vsub.s32 %v2566, %v2568
    %v2570 = vrot.slane %v2556, %v2569
    %v2571 = vcombine.low %v2506, %v2522
    %v2572 = vcombine.high %v2506, %v2522
    %v2574 = vunpack.c.l.s4 1934713408
    %v2575 = vunpack.c.0.s8 %v2574
    %v2576 = vlaneseq
    %v2577 = vshrl.u32 %v2576, 7
    %v2578 = vsub.s32 %v2575, %v2577
    %v2579 = vrot.slane %v2571, %v2578
    %v2581 = vunpack.c.l.s4 1934713408
    %v2582 = vunpack.c.0.s8 %v2581
    %v2583 = vlaneseq
    %v2584 = vshrl.u32 %v2583, 7
    %v2585 = vsub.s32 %v2582, %v2584
    %v2586 = vrot.slane %v2572, %v2585
    %v2587 = vcombine.low %v2531, %v2563
    %v2588 = vcombine.high %v2531, %v2563
    %v2589 = vcombine.low %v2538, %v2570
    %v2590 = vcombine.high %v2538, %v2570
    %v2591 = vcombine.low %v2547, %v2579
    %v2592 = vcombine.high %v2547, %v2579
    %v2593 = vcombine.low %v2554, %v2586
    %v2594 = vcombine.high %v2554, %v2586
    %v2595 = vcombine.low %v2402, %v2418
    %v2596 = vcombine.high %v2402, %v2418
    %v2598 = vunpack.c.l.s4 1983009808
    %v2599 = vunpack.c.0.s8 %v2598
    %v2600 = vlaneseq
    %v2601 = vshrl.u32 %v2600, 7
    %v2602 = vsub.s32 %v2599, %v2601
    %v2603 = vrot.slane %v2595, %v2602
    %v2605 = vunpack.c.l.s4 1983009808
    %v2606 = vunpack.c.0.s8 %v2605
    %v2607 = vlaneseq
    %v2608 = vshrl.u32 %v2607, 7
    %v2609 = vsub.s32 %v2606, %v2608
    %v2610 = vrot.slane %v2596, %v2609
    %v2611 = vcombine.low %v2410, %v2426
    %v2612 = vcombine.high %v2410, %v2426
    %v2614 = vunpack.c.l.s4 1983009808
    %v2615 = vunpack.c.0.s8 %v2614
    %v2616 = vlaneseq
    %v2617 = vshrl.u32 %v2616, 7
    %v2618 = vsub.s32 %v2615, %v2617
    %v2619 = vrot.slane %v2611, %v2618
    %v2621 = vunpack.c.l.s4 1983009808
    %v2622 = vunpack.c.0.s8 %v2621
    %v2623 = vlaneseq
    %v2624 = vshrl.u32 %v2623, 7
    %v2625 = vsub.s32 %v2622, %v2624
    %v2626 = vrot.slane %v2612, %v2625
    %v2627 = vcombine.low %v2434, %v2450
    %v2628 = vcombine.high %v2434, %v2450
    %v2630 = vunpack.c.l.s4 1983009808
    %v2631 = vunpack.c.0.s8 %v2630
    %v2632 = vlaneseq
    %v2633 = vshrl.u32 %v2632, 7
    %v2634 = vsub.s32 %v2631, %v2633
    %v2635 = vrot.slane %v2627, %v2634
    %v2637 = vunpack.c.l.s4 1983009808
    %v2638 = vunpack.c.0.s8 %v2637
    %v2639 = vlaneseq
    %v2640 = vshrl.u32 %v2639, 7
    %v2641 = vsub.s32 %v2638, %v2640
    %v2642 = vrot.slane %v2628, %v2641
    %v2643 = vcombine.low %v2442, %v2458
    %v2644 = vcombine.high %v2442, %v2458
    %v2646 = vunpack.c.l.s4 1983009808
    %v2647 = vunpack.c.0.s8 %v2646
    %v2648 = vlaneseq
    %v2649 = vshrl.u32 %v2648, 7
    %v2650 = vsub.s32 %v2647, %v2649
    %v2651 = vrot.slane %v2643, %v2650
    %v2653 = vunpack.c.l.s4 1983009808
    %v2654 = vunpack.c.0.s8 %v2653
    %v2655 = vlaneseq
    %v2656 = vshrl.u32 %v2655, 7
    %v2657 = vsub.s32 %v2654, %v2656
    %v2658 = vrot.slane %v2644, %v2657
    %v2659 = vcombine.low %v2603, %v2619
    %v2660 = vcombine.high %v2603, %v2619
    %v2662 = vunpack.c.l.s4 1934713408
    %v2663 = vunpack.c.0.s8 %v2662
    %v2664 = vlaneseq
    %v2665 = vshrl.u32 %v2664, 7
    %v2666 = vsub.s32 %v2663, %v2665
    %v2667 = vrot.slane %v2659, %v2666
    %v2669 = vunpack.c.l.s4 1934713408
    %v2670 = vunpack.c.0.s8 %v2669
    %v2671 = vlaneseq
    %v2672 = vshrl.u32 %v2671, 7
    %v2673 = vsub.s32 %v2670, %v2672
    %v2674 = vrot.slane %v2660, %v2673
    %v2675 = vcombine.low %v2610, %v2626
    %v2676 = vcombine.high %v2610, %v2626
    %v2678 = vunpack.c.l.s4 1934713408
    %v2679 = vunpack.c.0.s8 %v2678
    %v2680 = vlaneseq
    %v2681 = vshrl.u32 %v2680, 7
    %v2682 = vsub.s32 %v2679, %v2681
    %v2683 = vrot.slane %v2675, %v2682
    %v2685 = vunpack.c.l.s4 1934713408
    %v2686 = vunpack.c.0.s8 %v2685
    %v2687 = vlaneseq
    %v2688 = vshrl.u32 %v2687, 7
    %v2689 = vsub.s32 %v2686, %v2688
    %v2690 = vrot.slane %v2676, %v2689
    %v2691 = vcombine.low %v2635, %v2651
    %v2692 = vcombine.high %v2635, %v2651
    %v2694 = vunpack.c.l.s4 1934713408
    %v2695 = vunpack.c.0.s8 %v2694
    %v2696 = vlaneseq
    %v2697 = vshrl.u32 %v2696, 7
    %v2698 = vsub.s32 %v2695, %v2697
    %v2699 = vrot.slane %v2691, %v2698
    %v2701 = vunpack.c.l.s4 1934713408
    %v2702 = vunpack.c.0.s8 %v2701
    %v2703 = vlaneseq
    %v2704 = vshrl.u32 %v2703, 7
    %v2705 = vsub.s32 %v2702, %v2704
    %v2706 = vrot.slane %v2692, %v2705
    %v2707 = vcombine.low %v2642, %v2658
    %v2708 = vcombine.high %v2642, %v2658
    %v2710 = vunpack.c.l.s4 1934713408
    %v2711 = vunpack.c.0.s8 %v2710
    %v2712 = vlaneseq
    %v2713 = vshrl.u32 %v2712, 7
    %v2714 = vsub.s32 %v2711, %v2713
    %v2715 = vrot.slane %v2707, %v2714
    %v2717 = vunpack.c.l.s4 1934713408
    %v2718 = vunpack.c.0.s8 %v2717
    %v2719 = vlaneseq
    %v2720 = vshrl.u32 %v2719, 7
    %v2721 = vsub.s32 %v2718, %v2720
    %v2722 = vrot.slane %v2708, %v2721
    %v2723 = vcombine.low %v2667, %v2699
    %v2724 = vcombine.high %v2667, %v2699
    %v2725 = vcombine.low %v2674, %v2706
    %v2726 = vcombine.high %v2674, %v2706
    %v2727 = vcombine.low %v2683, %v2715
    %v2728 = vcombine.high %v2683, %v2715
    %v2729 = vcombine.low %v2690, %v2722
    %v2730 = vcombine.high %v2690, %v2722
    %2732 = vrot.lane.b32.xlu0 %v2588, 16
    %v2733 = vpop.permute.xlu0 %2732
    %2736 = vrot.lane.b32.xlu0 %v2589, 32
    %v2737 = vpop.permute.xlu0 %2736
    %2740 = vrot.lane.b32.xlu0 %v2590, 48
    %v2741 = vpop.permute.xlu0 %2740
    %2744 = vrot.lane.b32.xlu0 %v2591, 64
    %v2745 = vpop.permute.xlu0 %2744
    %2748 = vrot.lane.b32.xlu0 %v2592, 80
    %v2749 = vpop.permute.xlu0 %2748
    %2752 = vrot.lane.b32.xlu0 %v2593, 96
    %v2753 = vpop.permute.xlu0 %2752
    %2756 = vrot.lane.b32.xlu0 %v2594, 112
    %v2757 = vpop.permute.xlu0 %2756
    %2760 = vrot.lane.b32.xlu0 %v2724, 16
    %v2761 = vpop.permute.xlu0 %2760
    %2764 = vrot.lane.b32.xlu0 %v2725, 32
    %v2765 = vpop.permute.xlu0 %2764
    %2768 = vrot.lane.b32.xlu0 %v2726, 48
    %v2769 = vpop.permute.xlu0 %2768
    %2772 = vrot.lane.b32.xlu0 %v2727, 64
    %v2773 = vpop.permute.xlu0 %2772
    %2776 = vrot.lane.b32.xlu0 %v2728, 80
    %v2777 = vpop.permute.xlu0 %2776
    %2780 = vrot.lane.b32.xlu0 %v2729, 96
    %v2781 = vpop.permute.xlu0 %2780
    %2784 = vrot.lane.b32.xlu0 %v2730, 112
    %v2785 = vpop.permute.xlu0 %2784
    %v2787 = vsel %vm52, %v2587, %v2733
    %v2788 = vsel %vm138, %v2787, %v2737
    %v2789 = vsel %vm721, %v2788, %v2741
    %v2790 = vsel %vm723, %v2789, %v2745
    %v2791 = vsel %vm725, %v2790, %v2749
    %v2792 = vsel %vm727, %v2791, %v2753
    %v2793 = vsel %vm729, %v2792, %v2757
    %v2794 = vsel %vm52, %v2723, %v2761
    %v2795 = vsel %vm138, %v2794, %v2765
    %v2796 = vsel %vm721, %v2795, %v2769
    %v2797 = vsel %vm723, %v2796, %v2773
    %v2798 = vsel %vm725, %v2797, %v2777
    %v2799 = vsel %vm727, %v2798, %v2781
    %v2800 = vsel %vm729, %v2799, %v2785
    %2802 = vrot.lane.b32.xlu0 %v2388, 16
    %v2803 = vpop.permute.xlu0 %2802
    %2805 = vrot.lane.b32.xlu0 %v2388, 32
    %v2806 = vpop.permute.xlu0 %2805
    %2808 = vrot.lane.b32.xlu0 %v2388, 48
    %v2809 = vpop.permute.xlu0 %2808
    %2811 = vrot.lane.b32.xlu0 %v2388, 64
    %v2812 = vpop.permute.xlu0 %2811
    %2814 = vrot.lane.b32.xlu0 %v2388, 80
    %v2815 = vpop.permute.xlu0 %2814
    %2817 = vrot.lane.b32.xlu0 %v2388, 96
    %v2818 = vpop.permute.xlu0 %2817
    %2820 = vrot.lane.b32.xlu0 %v2388, 112
    %v2821 = vpop.permute.xlu0 %2820
    %v2823 = vsel %vm52, %v2388, %v2803
    %v2824 = vsel %vm138, %v2823, %v2806
    %v2825 = vsel %vm721, %v2824, %v2809
    %v2826 = vsel %vm723, %v2825, %v2812
    %v2827 = vsel %vm725, %v2826, %v2815
    %v2828 = vsel %vm727, %v2827, %v2818
    %v2829 = vsel %vm729, %v2828, %v2821
    %v2830 = vmul.f32 %v2793, %v2829
    %v2831 = vmul.f32 %v2800, %v2829
    %2833 = vrot.lane.b32.xlu0 %v2394, 16
    %v2834 = vpop.permute.xlu0 %2833
    %2836 = vrot.lane.b32.xlu0 %v2394, 32
    %v2837 = vpop.permute.xlu0 %2836
    %2839 = vrot.lane.b32.xlu0 %v2394, 48
    %v2840 = vpop.permute.xlu0 %2839
    %2842 = vrot.lane.b32.xlu0 %v2394, 64
    %v2843 = vpop.permute.xlu0 %2842
    %2845 = vrot.lane.b32.xlu0 %v2394, 80
    %v2846 = vpop.permute.xlu0 %2845
    %2848 = vrot.lane.b32.xlu0 %v2394, 96
    %v2849 = vpop.permute.xlu0 %2848
    %2851 = vrot.lane.b32.xlu0 %v2394, 112
    %v2852 = vpop.permute.xlu0 %2851
    %v2854 = vsel %vm52, %v2394, %v2834
    %v2855 = vsel %vm138, %v2854, %v2837
    %v2856 = vsel %vm721, %v2855, %v2840
    %v2857 = vsel %vm723, %v2856, %v2843
    %v2858 = vsel %vm725, %v2857, %v2846
    %v2859 = vsel %vm727, %v2858, %v2849
    %v2860 = vsel %vm729, %v2859, %v2852
    %v2861 = vmul.f32 %v2793, %v2860
    %v2862 = vmul.f32 %v2800, %v2860
    %v2863 = vadd.f32 %v2337, %v2830
    %v2864 = vadd.f32 %v2338, %v2831
    %v2865 = vadd.f32 %v2339, %v2861
    %v2866 = vadd.f32 %v2340, %v2862
    %2867 = vset.pattern.permute.xlu0 12
    %2868 = vperm.xlu0 %2867, %v868
    %v2869 = vpop.permute.xlu0 %2868
    %v2871 = vmul.f32 %v2869, %v1058
    %v2872 = vmul.f32 %v1252, %v1058
    %2873 = vset.pattern.permute.xlu0 13
    %2874 = vperm.xlu0 %2873, %v868
    %v2875 = vpop.permute.xlu0 %2874
    %v2877 = vmul.f32 %v2875, %v1058
    %2879 = vrot.lane.b32.xlu0 %v2877, 112
    %v2880 = vpop.permute.xlu0 %2879
    %v2882 = vadd.f32 %v2871, %v2880
    %v2883 = vmul.f32 %v1257, %v1058
    %2885 = vrot.lane.b32.xlu0 %v2883, 112
    %v2886 = vpop.permute.xlu0 %2885
    %v2888 = vadd.f32 %v2872, %v2886
    %2889 = vset.pattern.permute.xlu0 14
    %2890 = vperm.xlu0 %2889, %v868
    %v2891 = vpop.permute.xlu0 %2890
    %v2893 = vmul.f32 %v2891, %v1058
    %2895 = vrot.lane.b32.xlu0 %v2893, 96
    %v2896 = vpop.permute.xlu0 %2895
    %v2898 = vadd.f32 %v2882, %v2896
    %v2899 = vmul.f32 %v1262, %v1058
    %2901 = vrot.lane.b32.xlu0 %v2899, 96
    %v2902 = vpop.permute.xlu0 %2901
    %v2904 = vadd.f32 %v2888, %v2902
    %2905 = vset.pattern.permute.xlu0 15
    %2906 = vperm.xlu0 %2905, %v868
    %v2907 = vpop.permute.xlu0 %2906
    %v2909 = vmul.f32 %v2907, %v1058
    %2911 = vrot.lane.b32.xlu0 %v2909, 80
    %v2912 = vpop.permute.xlu0 %2911
    %v2914 = vadd.f32 %v2898, %v2912
    %v2915 = vmul.f32 %v1268, %v1058
    %2917 = vrot.lane.b32.xlu0 %v2915, 80
    %v2918 = vpop.permute.xlu0 %2917
    %v2920 = vadd.f32 %v2904, %v2918
    %s2922 = sor.u32 256, 48
    %2923 = vbcast.lane.b32.xlu0 %v1326, %s2922
    %v2924 = vpop.permute.xlu0 %2923
    %s2926 = sor.u32 256, 56
    %2927 = vbcast.lane.b32.xlu0 %v1326, %s2926
    %v2928 = vpop.permute.xlu0 %2927
    %s2930 = sor.u32 256, 48
    %2931 = vbcast.lane.b32.xlu0 %v1337, %s2930
    %v2932 = vpop.permute.xlu0 %2931
    %s2934 = sor.u32 256, 56
    %2935 = vbcast.lane.b32.xlu0 %v1337, %s2934
    %v2936 = vpop.permute.xlu0 %2935
    %s2938 = sor.u32 256, 48
    %2939 = vbcast.lane.b32.xlu0 %v1348, %s2938
    %v2940 = vpop.permute.xlu0 %2939
    %s2942 = sor.u32 256, 56
    %2943 = vbcast.lane.b32.xlu0 %v1348, %s2942
    %v2944 = vpop.permute.xlu0 %2943
    %s2946 = sor.u32 256, 48
    %2947 = vbcast.lane.b32.xlu0 %v1359, %s2946
    %v2948 = vpop.permute.xlu0 %2947
    %s2950 = sor.u32 256, 56
    %2951 = vbcast.lane.b32.xlu0 %v1359, %s2950
    %v2952 = vpop.permute.xlu0 %2951
    %s2954 = sor.u32 256, 48
    %2955 = vbcast.lane.b32.xlu0 %v1370, %s2954
    %v2956 = vpop.permute.xlu0 %2955
    %s2958 = sor.u32 256, 56
    %2959 = vbcast.lane.b32.xlu0 %v1370, %s2958
    %v2960 = vpop.permute.xlu0 %2959
    %s2962 = sor.u32 256, 48
    %2963 = vbcast.lane.b32.xlu0 %v1381, %s2962
    %v2964 = vpop.permute.xlu0 %2963
    %s2966 = sor.u32 256, 56
    %2967 = vbcast.lane.b32.xlu0 %v1381, %s2966
    %v2968 = vpop.permute.xlu0 %2967
    %s2970 = sor.u32 256, 48
    %2971 = vbcast.lane.b32.xlu0 %v1392, %s2970
    %v2972 = vpop.permute.xlu0 %2971
    %s2974 = sor.u32 256, 56
    %2975 = vbcast.lane.b32.xlu0 %v1392, %s2974
    %v2976 = vpop.permute.xlu0 %2975
    %s2978 = sor.u32 256, 48
    %2979 = vbcast.lane.b32.xlu0 %v1403, %s2978
    %v2980 = vpop.permute.xlu0 %2979
    %s2982 = sor.u32 256, 56
    %2983 = vbcast.lane.b32.xlu0 %v1403, %s2982
    %v2984 = vpop.permute.xlu0 %2983
    %v2985 = vcombine.low %v2924, %v2940
    %v2986 = vcombine.high %v2924, %v2940
    %v2988 = vunpack.c.l.s4 1983009808
    %v2989 = vunpack.c.0.s8 %v2988
    %v2990 = vlaneseq
    %v2991 = vshrl.u32 %v2990, 7
    %v2992 = vsub.s32 %v2989, %v2991
    %v2993 = vrot.slane %v2985, %v2992
    %v2995 = vunpack.c.l.s4 1983009808
    %v2996 = vunpack.c.0.s8 %v2995
    %v2997 = vlaneseq
    %v2998 = vshrl.u32 %v2997, 7
    %v2999 = vsub.s32 %v2996, %v2998
    %v3000 = vrot.slane %v2986, %v2999
    %v3001 = vcombine.low %v2932, %v2948
    %v3002 = vcombine.high %v2932, %v2948
    %v3004 = vunpack.c.l.s4 1983009808
    %v3005 = vunpack.c.0.s8 %v3004
    %v3006 = vlaneseq
    %v3007 = vshrl.u32 %v3006, 7
    %v3008 = vsub.s32 %v3005, %v3007
    %v3009 = vrot.slane %v3001, %v3008
    %v3011 = vunpack.c.l.s4 1983009808
    %v3012 = vunpack.c.0.s8 %v3011
    %v3013 = vlaneseq
    %v3014 = vshrl.u32 %v3013, 7
    %v3015 = vsub.s32 %v3012, %v3014
    %v3016 = vrot.slane %v3002, %v3015
    %v3017 = vcombine.low %v2956, %v2972
    %v3018 = vcombine.high %v2956, %v2972
    %v3020 = vunpack.c.l.s4 1983009808
    %v3021 = vunpack.c.0.s8 %v3020
    %v3022 = vlaneseq
    %v3023 = vshrl.u32 %v3022, 7
    %v3024 = vsub.s32 %v3021, %v3023
    %v3025 = vrot.slane %v3017, %v3024
    %v3027 = vunpack.c.l.s4 1983009808
    %v3028 = vunpack.c.0.s8 %v3027
    %v3029 = vlaneseq
    %v3030 = vshrl.u32 %v3029, 7
    %v3031 = vsub.s32 %v3028, %v3030
    %v3032 = vrot.slane %v3018, %v3031
    %v3033 = vcombine.low %v2964, %v2980
    %v3034 = vcombine.high %v2964, %v2980
    %v3036 = vunpack.c.l.s4 1983009808
    %v3037 = vunpack.c.0.s8 %v3036
    %v3038 = vlaneseq
    %v3039 = vshrl.u32 %v3038, 7
    %v3040 = vsub.s32 %v3037, %v3039
    %v3041 = vrot.slane %v3033, %v3040
    %v3043 = vunpack.c.l.s4 1983009808
    %v3044 = vunpack.c.0.s8 %v3043
    %v3045 = vlaneseq
    %v3046 = vshrl.u32 %v3045, 7
    %v3047 = vsub.s32 %v3044, %v3046
    %v3048 = vrot.slane %v3034, %v3047
    %v3049 = vcombine.low %v2993, %v3009
    %v3050 = vcombine.high %v2993, %v3009
    %v3052 = vunpack.c.l.s4 1934713408
    %v3053 = vunpack.c.0.s8 %v3052
    %v3054 = vlaneseq
    %v3055 = vshrl.u32 %v3054, 7
    %v3056 = vsub.s32 %v3053, %v3055
    %v3057 = vrot.slane %v3049, %v3056
    %v3059 = vunpack.c.l.s4 1934713408
    %v3060 = vunpack.c.0.s8 %v3059
    %v3061 = vlaneseq
    %v3062 = vshrl.u32 %v3061, 7
    %v3063 = vsub.s32 %v3060, %v3062
    %v3064 = vrot.slane %v3050, %v3063
    %v3065 = vcombine.low %v3000, %v3016
    %v3066 = vcombine.high %v3000, %v3016
    %v3068 = vunpack.c.l.s4 1934713408
    %v3069 = vunpack.c.0.s8 %v3068
    %v3070 = vlaneseq
    %v3071 = vshrl.u32 %v3070, 7
    %v3072 = vsub.s32 %v3069, %v3071
    %v3073 = vrot.slane %v3065, %v3072
    %v3075 = vunpack.c.l.s4 1934713408
    %v3076 = vunpack.c.0.s8 %v3075
    %v3077 = vlaneseq
    %v3078 = vshrl.u32 %v3077, 7
    %v3079 = vsub.s32 %v3076, %v3078
    %v3080 = vrot.slane %v3066, %v3079
    %v3081 = vcombine.low %v3025, %v3041
    %v3082 = vcombine.high %v3025, %v3041
    %v3084 = vunpack.c.l.s4 1934713408
    %v3085 = vunpack.c.0.s8 %v3084
    %v3086 = vlaneseq
    %v3087 = vshrl.u32 %v3086, 7
    %v3088 = vsub.s32 %v3085, %v3087
    %v3089 = vrot.slane %v3081, %v3088
    %v3091 = vunpack.c.l.s4 1934713408
    %v3092 = vunpack.c.0.s8 %v3091
    %v3093 = vlaneseq
    %v3094 = vshrl.u32 %v3093, 7
    %v3095 = vsub.s32 %v3092, %v3094
    %v3096 = vrot.slane %v3082, %v3095
    %v3097 = vcombine.low %v3032, %v3048
    %v3098 = vcombine.high %v3032, %v3048
    %v3100 = vunpack.c.l.s4 1934713408
    %v3101 = vunpack.c.0.s8 %v3100
    %v3102 = vlaneseq
    %v3103 = vshrl.u32 %v3102, 7
    %v3104 = vsub.s32 %v3101, %v3103
    %v3105 = vrot.slane %v3097, %v3104
    %v3107 = vunpack.c.l.s4 1934713408
    %v3108 = vunpack.c.0.s8 %v3107
    %v3109 = vlaneseq
    %v3110 = vshrl.u32 %v3109, 7
    %v3111 = vsub.s32 %v3108, %v3110
    %v3112 = vrot.slane %v3098, %v3111
    %v3113 = vcombine.low %v3057, %v3089
    %v3114 = vcombine.high %v3057, %v3089
    %v3115 = vcombine.low %v3064, %v3096
    %v3116 = vcombine.high %v3064, %v3096
    %v3117 = vcombine.low %v3073, %v3105
    %v3118 = vcombine.high %v3073, %v3105
    %v3119 = vcombine.low %v3080, %v3112
    %v3120 = vcombine.high %v3080, %v3112
    %v3121 = vcombine.low %v2928, %v2944
    %v3122 = vcombine.high %v2928, %v2944
    %v3124 = vunpack.c.l.s4 1983009808
    %v3125 = vunpack.c.0.s8 %v3124
    %v3126 = vlaneseq
    %v3127 = vshrl.u32 %v3126, 7
    %v3128 = vsub.s32 %v3125, %v3127
    %v3129 = vrot.slane %v3121, %v3128
    %v3131 = vunpack.c.l.s4 1983009808
    %v3132 = vunpack.c.0.s8 %v3131
    %v3133 = vlaneseq
    %v3134 = vshrl.u32 %v3133, 7
    %v3135 = vsub.s32 %v3132, %v3134
    %v3136 = vrot.slane %v3122, %v3135
    %v3137 = vcombine.low %v2936, %v2952
    %v3138 = vcombine.high %v2936, %v2952
    %v3140 = vunpack.c.l.s4 1983009808
    %v3141 = vunpack.c.0.s8 %v3140
    %v3142 = vlaneseq
    %v3143 = vshrl.u32 %v3142, 7
    %v3144 = vsub.s32 %v3141, %v3143
    %v3145 = vrot.slane %v3137, %v3144
    %v3147 = vunpack.c.l.s4 1983009808
    %v3148 = vunpack.c.0.s8 %v3147
    %v3149 = vlaneseq
    %v3150 = vshrl.u32 %v3149, 7
    %v3151 = vsub.s32 %v3148, %v3150
    %v3152 = vrot.slane %v3138, %v3151
    %v3153 = vcombine.low %v2960, %v2976
    %v3154 = vcombine.high %v2960, %v2976
    %v3156 = vunpack.c.l.s4 1983009808
    %v3157 = vunpack.c.0.s8 %v3156
    %v3158 = vlaneseq
    %v3159 = vshrl.u32 %v3158, 7
    %v3160 = vsub.s32 %v3157, %v3159
    %v3161 = vrot.slane %v3153, %v3160
    %v3163 = vunpack.c.l.s4 1983009808
    %v3164 = vunpack.c.0.s8 %v3163
    %v3165 = vlaneseq
    %v3166 = vshrl.u32 %v3165, 7
    %v3167 = vsub.s32 %v3164, %v3166
    %v3168 = vrot.slane %v3154, %v3167
    %v3169 = vcombine.low %v2968, %v2984
    %v3170 = vcombine.high %v2968, %v2984
    %v3172 = vunpack.c.l.s4 1983009808
    %v3173 = vunpack.c.0.s8 %v3172
    %v3174 = vlaneseq
    %v3175 = vshrl.u32 %v3174, 7
    %v3176 = vsub.s32 %v3173, %v3175
    %v3177 = vrot.slane %v3169, %v3176
    %v3179 = vunpack.c.l.s4 1983009808
    %v3180 = vunpack.c.0.s8 %v3179
    %v3181 = vlaneseq
    %v3182 = vshrl.u32 %v3181, 7
    %v3183 = vsub.s32 %v3180, %v3182
    %v3184 = vrot.slane %v3170, %v3183
    %v3185 = vcombine.low %v3129, %v3145
    %v3186 = vcombine.high %v3129, %v3145
    %v3188 = vunpack.c.l.s4 1934713408
    %v3189 = vunpack.c.0.s8 %v3188
    %v3190 = vlaneseq
    %v3191 = vshrl.u32 %v3190, 7
    %v3192 = vsub.s32 %v3189, %v3191
    %v3193 = vrot.slane %v3185, %v3192
    %v3195 = vunpack.c.l.s4 1934713408
    %v3196 = vunpack.c.0.s8 %v3195
    %v3197 = vlaneseq
    %v3198 = vshrl.u32 %v3197, 7
    %v3199 = vsub.s32 %v3196, %v3198
    %v3200 = vrot.slane %v3186, %v3199
    %v3201 = vcombine.low %v3136, %v3152
    %v3202 = vcombine.high %v3136, %v3152
    %v3204 = vunpack.c.l.s4 1934713408
    %v3205 = vunpack.c.0.s8 %v3204
    %v3206 = vlaneseq
    %v3207 = vshrl.u32 %v3206, 7
    %v3208 = vsub.s32 %v3205, %v3207
    %v3209 = vrot.slane %v3201, %v3208
    %v3211 = vunpack.c.l.s4 1934713408
    %v3212 = vunpack.c.0.s8 %v3211
    %v3213 = vlaneseq
    %v3214 = vshrl.u32 %v3213, 7
    %v3215 = vsub.s32 %v3212, %v3214
    %v3216 = vrot.slane %v3202, %v3215
    %v3217 = vcombine.low %v3161, %v3177
    %v3218 = vcombine.high %v3161, %v3177
    %v3220 = vunpack.c.l.s4 1934713408
    %v3221 = vunpack.c.0.s8 %v3220
    %v3222 = vlaneseq
    %v3223 = vshrl.u32 %v3222, 7
    %v3224 = vsub.s32 %v3221, %v3223
    %v3225 = vrot.slane %v3217, %v3224
    %v3227 = vunpack.c.l.s4 1934713408
    %v3228 = vunpack.c.0.s8 %v3227
    %v3229 = vlaneseq
    %v3230 = vshrl.u32 %v3229, 7
    %v3231 = vsub.s32 %v3228, %v3230
    %v3232 = vrot.slane %v3218, %v3231
    %v3233 = vcombine.low %v3168, %v3184
    %v3234 = vcombine.high %v3168, %v3184
    %v3236 = vunpack.c.l.s4 1934713408
    %v3237 = vunpack.c.0.s8 %v3236
    %v3238 = vlaneseq
    %v3239 = vshrl.u32 %v3238, 7
    %v3240 = vsub.s32 %v3237, %v3239
    %v3241 = vrot.slane %v3233, %v3240
    %v3243 = vunpack.c.l.s4 1934713408
    %v3244 = vunpack.c.0.s8 %v3243
    %v3245 = vlaneseq
    %v3246 = vshrl.u32 %v3245, 7
    %v3247 = vsub.s32 %v3244, %v3246
    %v3248 = vrot.slane %v3234, %v3247
    %v3249 = vcombine.low %v3193, %v3225
    %v3250 = vcombine.high %v3193, %v3225
    %v3251 = vcombine.low %v3200, %v3232
    %v3252 = vcombine.high %v3200, %v3232
    %v3253 = vcombine.low %v3209, %v3241
    %v3254 = vcombine.high %v3209, %v3241
    %v3255 = vcombine.low %v3216, %v3248
    %v3256 = vcombine.high %v3216, %v3248
    %3258 = vrot.lane.b32.xlu0 %v3114, 16
    %v3259 = vpop.permute.xlu0 %3258
    %3262 = vrot.lane.b32.xlu0 %v3115, 32
    %v3263 = vpop.permute.xlu0 %3262
    %3266 = vrot.lane.b32.xlu0 %v3116, 48
    %v3267 = vpop.permute.xlu0 %3266
    %3270 = vrot.lane.b32.xlu0 %v3117, 64
    %v3271 = vpop.permute.xlu0 %3270
    %3274 = vrot.lane.b32.xlu0 %v3118, 80
    %v3275 = vpop.permute.xlu0 %3274
    %3278 = vrot.lane.b32.xlu0 %v3119, 96
    %v3279 = vpop.permute.xlu0 %3278
    %3282 = vrot.lane.b32.xlu0 %v3120, 112
    %v3283 = vpop.permute.xlu0 %3282
    %3286 = vrot.lane.b32.xlu0 %v3250, 16
    %v3287 = vpop.permute.xlu0 %3286
    %3290 = vrot.lane.b32.xlu0 %v3251, 32
    %v3291 = vpop.permute.xlu0 %3290
    %3294 = vrot.lane.b32.xlu0 %v3252, 48
    %v3295 = vpop.permute.xlu0 %3294
    %3298 = vrot.lane.b32.xlu0 %v3253, 64
    %v3299 = vpop.permute.xlu0 %3298
    %3302 = vrot.lane.b32.xlu0 %v3254, 80
    %v3303 = vpop.permute.xlu0 %3302
    %3306 = vrot.lane.b32.xlu0 %v3255, 96
    %v3307 = vpop.permute.xlu0 %3306
    %3310 = vrot.lane.b32.xlu0 %v3256, 112
    %v3311 = vpop.permute.xlu0 %3310
    %v3313 = vsel %vm52, %v3113, %v3259
    %v3314 = vsel %vm138, %v3313, %v3263
    %v3315 = vsel %vm721, %v3314, %v3267
    %v3316 = vsel %vm723, %v3315, %v3271
    %v3317 = vsel %vm725, %v3316, %v3275
    %v3318 = vsel %vm727, %v3317, %v3279
    %v3319 = vsel %vm729, %v3318, %v3283
    %v3320 = vsel %vm52, %v3249, %v3287
    %v3321 = vsel %vm138, %v3320, %v3291
    %v3322 = vsel %vm721, %v3321, %v3295
    %v3323 = vsel %vm723, %v3322, %v3299
    %v3324 = vsel %vm725, %v3323, %v3303
    %v3325 = vsel %vm727, %v3324, %v3307
    %v3326 = vsel %vm729, %v3325, %v3311
    %3328 = vrot.lane.b32.xlu0 %v2914, 16
    %v3329 = vpop.permute.xlu0 %3328
    %3331 = vrot.lane.b32.xlu0 %v2914, 32
    %v3332 = vpop.permute.xlu0 %3331
    %3334 = vrot.lane.b32.xlu0 %v2914, 48
    %v3335 = vpop.permute.xlu0 %3334
    %3337 = vrot.lane.b32.xlu0 %v2914, 64
    %v3338 = vpop.permute.xlu0 %3337
    %3340 = vrot.lane.b32.xlu0 %v2914, 80
    %v3341 = vpop.permute.xlu0 %3340
    %3343 = vrot.lane.b32.xlu0 %v2914, 96
    %v3344 = vpop.permute.xlu0 %3343
    %3346 = vrot.lane.b32.xlu0 %v2914, 112
    %v3347 = vpop.permute.xlu0 %3346
    %v3349 = vsel %vm52, %v2914, %v3329
    %v3350 = vsel %vm138, %v3349, %v3332
    %v3351 = vsel %vm721, %v3350, %v3335
    %v3352 = vsel %vm723, %v3351, %v3338
    %v3353 = vsel %vm725, %v3352, %v3341
    %v3354 = vsel %vm727, %v3353, %v3344
    %v3355 = vsel %vm729, %v3354, %v3347
    %v3356 = vmul.f32 %v3319, %v3355
    %v3357 = vmul.f32 %v3326, %v3355
    %3359 = vrot.lane.b32.xlu0 %v2920, 16
    %v3360 = vpop.permute.xlu0 %3359
    %3362 = vrot.lane.b32.xlu0 %v2920, 32
    %v3363 = vpop.permute.xlu0 %3362
    %3365 = vrot.lane.b32.xlu0 %v2920, 48
    %v3366 = vpop.permute.xlu0 %3365
    %3368 = vrot.lane.b32.xlu0 %v2920, 64
    %v3369 = vpop.permute.xlu0 %3368
    %3371 = vrot.lane.b32.xlu0 %v2920, 80
    %v3372 = vpop.permute.xlu0 %3371
    %3374 = vrot.lane.b32.xlu0 %v2920, 96
    %v3375 = vpop.permute.xlu0 %3374
    %3377 = vrot.lane.b32.xlu0 %v2920, 112
    %v3378 = vpop.permute.xlu0 %3377
    %v3380 = vsel %vm52, %v2920, %v3360
    %v3381 = vsel %vm138, %v3380, %v3363
    %v3382 = vsel %vm721, %v3381, %v3366
    %v3383 = vsel %vm723, %v3382, %v3369
    %v3384 = vsel %vm725, %v3383, %v3372
    %v3385 = vsel %vm727, %v3384, %v3375
    %v3386 = vsel %vm729, %v3385, %v3378
    %v3387 = vmul.f32 %v3319, %v3386
    %v3388 = vmul.f32 %v3326, %v3386
    %v3389 = vadd.f32 %v2863, %v3356
    %v3390 = vadd.f32 %v2864, %v3357
    %v3391 = vadd.f32 %v2865, %v3387
    %v3392 = vadd.f32 %v2866, %v3388
    %v3393 = vld [vmem:[%s11] sm:$0x3]
    %v3395 = vlaneseq
    %v3396 = vshrl.u32 %v3395, 7
    %v3397 = vsub.s32 0, %v3396
    %v3398 = vrot.slane %v3393, %v3397
    %v3399 = vlaneseq
    %v3400 = vshrl.u32 %v3399, 7
    %v3401 = vsub.s32 1, %v3400
    %v3402 = vrot.slane %v3393, %v3401
    %v3405 = vsub.f32 %v3398, %v3391
    %v3406 = vsub.f32 %v3402, %v3392
    %3407 = vst [vmem:[#allocation2] sm:$0xff] %v3389
    %3408 = vst [vmem:[#allocation2 + $0x8] sm:$0xff] %v3390
    %3409 = vst [vmem:[#allocation2 + $0x10] sm:$0xff] %v3405
    %3410 = vst [vmem:[#allocation2 + $0x18] sm:$0xff] %v3406
    %3411 = vrot.lane.b32.xlu0 %v1058, 64
    %v3412 = vpop.permute.xlu0 %3411
    %3414 = vst.msk [vmem:[#allocation2 + $0x20] sm:$0xff] %vm52, %v3412
    %3415 = vrot.lane.b32.xlu0 %v868, 16
    %v3416 = vpop.permute.xlu0 %3415
    %vm3418 = vcmask 261248
    %3419 = vst.msk [vmem:[#allocation2 + $0x20] sm:$0xff] %vm3418, %v3416
    // Predicated region
    $region50: #{tpu_custom_call.1} parent=1 // pred_check
      _
    $region51: #{tpu_custom_call.1} parent=1 // pred_check_branch
      %3421 = sbr.rel (0) target = $region53
    $region52: #{tpu_custom_call.1} parent=1 // pred_region
      %s3423 = ssub.s32 640, 640
      %3424 = vsyncadd [#allocation3], %s3423
      %s3426 = sshll.u32 [#allocation2], 4
      %s3427 = int_to_ptr.vmem [resolvable:$true] %s3426
      %3429 = dma.vmem_to_hbm [thread:$0]  %s3427, 640, %s12, [#allocation3]
    $region53: #{tpu_custom_call.1} parent=1 // pred_fallthru
      _
    // Predicated region
    $region54: #{tpu_custom_call.1} parent=1 // pred_check
      _
    $region55: #{tpu_custom_call.1} parent=1 // pred_check_branch
      %3431 = sbr.rel (0) target = $region57
    $region56: #{tpu_custom_call.1} parent=1 // pred_region
      %3432 = dma.done [#allocation3], 640
    $region57: #{tpu_custom_call.1} parent=1 // pred_fallthru
      _
    %3433 = vsyncpa [#allocation3], 1

</llo_original>
